<compile_context>
chip_gen: v6e
topology: v6e:2x2x1
jax: 0.10.0
libtpu: 0.0.40
codegen_flags: <defaults>
</compile_context>

<pallas_src>
import functools
import math

import jax
import jax.numpy as jnp
from jax.experimental import pallas as pl
from jax.experimental.pallas import tpu as pltpu


def _encoder_kernel(x_ref, mask_ref,
                    wqkv_ref, bqkv_ref, wo_ref, bo_ref,
                    ln1g_ref, ln1b_ref,
                    w1_ref, b1_ref, w2_ref, b2_ref,
                    ln2g_ref, ln2b_ref,
                    o_ref, *, n_heads, num_layers):
    """All `num_layers` transformer encoder layers for one batch element."""
    x = x_ref[0].astype(jnp.float32)          # (S, D)
    mask = mask_ref[0].astype(jnp.float32)    # (1, S) key mask: 1=keep, 0=pad
    S, D = x.shape
    H = n_heads
    dh = D // H
    scale = 1.0 / math.sqrt(dh)

    # Additive key mask, computed once and broadcast over (head, query) axes.
    neg = ((1.0 - mask) * (-1e9))[None]       # (1, 1, S)

    def layer_norm(z, g, b):
        mu = z.mean(axis=-1, keepdims=True)
        var = ((z - mu) ** 2).mean(axis=-1, keepdims=True)
        return (z - mu) * jax.lax.rsqrt(var + 1e-5) * g + b

    for l in range(num_layers):               # static unroll (num_layers == 4)
        xb = x.astype(jnp.bfloat16)

        # --- fused QKV projection: one (S, D) x (D, 3D) MXU pass ----------
        qkv = jnp.dot(xb, wqkv_ref[l],
                      preferred_element_type=jnp.float32) + bqkv_ref[l]
        q = (qkv[:, :D] * scale).astype(jnp.bfloat16)   # fold 1/sqrt(dh) into q
        k = qkv[:, D:2 * D].astype(jnp.bfloat16)
        v = qkv[:, 2 * D:].astype(jnp.bfloat16)

        # --- batched multi-head attention (heads as leading batch axis) ---
        qh = jnp.stack([q[:, h * dh:(h + 1) * dh] for h in range(H)], axis=0)
        kh = jnp.stack([k[:, h * dh:(h + 1) * dh] for h in range(H)], axis=0)
        vh = jnp.stack([v[:, h * dh:(h + 1) * dh] for h in range(H)], axis=0)

        s = jnp.einsum('hqd,hkd->hqk', qh, kh,
                       preferred_element_type=jnp.float32) + neg   # (H, S, S)
        s = s - s.max(axis=-1, keepdims=True)
        e = jnp.exp(s)
        denom = jnp.maximum(e.sum(axis=-1, keepdims=True), 1e-9)   # guard all-masked rows
        p = e * pl.reciprocal(denom, approx=True)

        ctxh = jnp.einsum('hqk,hkd->hqd', p.astype(jnp.bfloat16), vh,
                          preferred_element_type=jnp.float32)      # (H, S, dh)
        ctx = jnp.concatenate([ctxh[h] for h in range(H)], axis=-1)  # (S, D)

        attn = jnp.dot(ctx.astype(jnp.bfloat16), wo_ref[l],
                       preferred_element_type=jnp.float32) + bo_ref[l]

        a = layer_norm(x + attn, ln1g_ref[l], ln1b_ref[l])

        # --- feed forward (ReLU, d_ff = 4 * d_model) -----------------------
        hdn = jnp.maximum(
            jnp.dot(a.astype(jnp.bfloat16), w1_ref[l],
                    preferred_element_type=jnp.float32) + b1_ref[l], 0.0)
        f = jnp.dot(hdn.astype(jnp.bfloat16), w2_ref[l],
                    preferred_element_type=jnp.float32) + b2_ref[l]

        x = layer_norm(a + f, ln2g_ref[l], ln2b_ref[l])

    o_ref[0] = x.astype(o_ref.dtype)


def encoder_forward(x, params, x_mask=None, *, n_heads=4):
    """Equivalent of Encoder.forward(x, x_mask) — one fused pallas_call."""
    B, S, D = x.shape
    L = params["wqkv"].shape[0]
    F = params["w1"].shape[-1]

    if x_mask is None:
        mask3 = jnp.ones((B, 1, S), jnp.float32)
    else:
        mask3 = x_mask.reshape(B, 1, S).astype(jnp.float32)

    def full(shape):
        # whole (stacked) weight array resident in VMEM, same block every step
        return pl.BlockSpec(shape, lambda b: (0,) * len(shape))

    kernel = functools.partial(_encoder_kernel, n_heads=n_heads, num_layers=L)
    out = pl.pallas_call(
        kernel,
        out_shape=jax.ShapeDtypeStruct((B, S, D), x.dtype),
        grid=(B,),
        in_specs=[
            pl.BlockSpec((1, S, D), lambda b: (b, 0, 0)),   # activations
            pl.BlockSpec((1, 1, S), lambda b: (b, 0, 0)),   # key mask
            full((L, D, 3 * D)), full((L, 1, 3 * D)),       # Wqkv, bqkv
            full((L, D, D)), full((L, 1, D)),               # Wo, bo
            full((L, 1, D)), full((L, 1, D)),               # LN1 gamma/beta
            full((L, D, F)), full((L, 1, F)),               # W1, b1
            full((L, F, D)), full((L, 1, D)),               # W2, b2
            full((L, 1, D)), full((L, 1, D)),               # LN2 gamma/beta
        ],
        out_specs=pl.BlockSpec((1, S, D), lambda b: (b, 0, 0)),
        compiler_params=pltpu.CompilerParams(
            dimension_semantics=("parallel",)),              # v7x: 1 TC per batch elem
    )(x, mask3,
      params["wqkv"], params["bqkv"], params["wo"], params["bo"],
      params["ln1g"], params["ln1b"],
      params["w1"], params["b1"], params["w2"], params["b2"],
      params["ln2g"], params["ln2b"])

    if x_mask is not None:
        out = out * x_mask[:, :, None].astype(out.dtype)     # outputs_ * x_mask[:, :, None]
    return out


def _xavier_uniform(key, fan_in, fan_out, shape, gain=0.5):
    bound = gain * math.sqrt(6.0 / (fan_in + fan_out))
    return jax.random.uniform(key, shape, jnp.float32, -bound, bound)


def init_params(key, *, num_layers, d_model, d_ff):
    """Deterministic init matching weights_init: xavier_uniform(gain=0.5), zero
    bias, LayerNorm params at defaults.  Weights are stacked per layer and the
    Q/K/V projections are packed into one (D, 3D) matrix; matmul operands are
    stored in bf16 (f32 accumulation in-kernel), biases/LN params stay f32."""
    D, F, L = d_model, d_ff, num_layers
    keys = jax.random.split(key, L)
    wq, wk, wv, wo, w1, w2 = [], [], [], [], [], []
    for lk in keys:
        k = jax.random.split(lk, 6)
        wq.append(_xavier_uniform(k[0], D, D, (D, D)))
        wk.append(_xavier_uniform(k[1], D, D, (D, D)))
        wv.append(_xavier_uniform(k[2], D, D, (D, D)))
        wo.append(_xavier_uniform(k[3], D, D, (D, D)))
        w1.append(_xavier_uniform(k[4], D, F, (D, F)))
        w2.append(_xavier_uniform(k[5], F, D, (F, D)))
    wqkv = jnp.concatenate(
        [jnp.stack(wq), jnp.stack(wk), jnp.stack(wv)], axis=-1)  # (L, D, 3D)
    return dict(
        wqkv=wqkv.astype(jnp.bfloat16),
        bqkv=jnp.zeros((L, 1, 3 * D), jnp.float32),
        wo=jnp.stack(wo).astype(jnp.bfloat16),
        bo=jnp.zeros((L, 1, D), jnp.float32),
        ln1g=jnp.ones((L, 1, D), jnp.float32),
        ln1b=jnp.zeros((L, 1, D), jnp.float32),
        w1=jnp.stack(w1).astype(jnp.bfloat16),
        b1=jnp.zeros((L, 1, F), jnp.float32),
        w2=jnp.stack(w2).astype(jnp.bfloat16),
        b2=jnp.zeros((L, 1, D), jnp.float32),
        ln2g=jnp.ones((L, 1, D), jnp.float32),
        ln2b=jnp.zeros((L, 1, D), jnp.float32),
    )


if __name__ == "__main__":
    B, S, D = 2, 8, 32          # batch, seq, input_dim (d_model)
    NUM_LAYERS, N_HEADS, D_FF = 4, 4, 4 * D

    key = jax.random.PRNGKey(0)
    kx, kp = jax.random.split(key)
    x = jax.random.normal(kx, (B, S, D), jnp.float32)
    x_mask = jnp.ones((B, S), jnp.float32).at[1, 6:].set(0.0)   # pad last 2 tokens of item 1

    params = init_params(kp, num_layers=NUM_LAYERS, d_model=D, d_ff=D_FF)

    fwd = jax.jit(functools.partial(encoder_forward, n_heads=N_HEADS))
    out = fwd(x, params, x_mask)
    out = jax.block_until_ready(out)

    assert out.shape == (B, S, D)
    assert bool(jnp.all(jnp.isfinite(out)))
    # masked-out positions must be exactly zero (outputs_ * x_mask[:, :, None])
    assert bool(jnp.all(out[1, 6:, :] == 0.0))

    print("KERNEL_OK")
</pallas_src>

<mosaic_0001>
module attributes {stable_mosaic.version = 11 : i64} {
  func.func @_encoder_kernel(%arg0: i32, %arg1: memref<1x8x32xf32, #tpu.memory_space<vmem>>, %arg2: memref<1x1x8xf32, #tpu.memory_space<vmem>>, %arg3: memref<4x32x96xbf16, #tpu.memory_space<vmem>>, %arg4: memref<4x1x96xf32, #tpu.memory_space<vmem>>, %arg5: memref<4x32x32xbf16, #tpu.memory_space<vmem>>, %arg6: memref<4x1x32xf32, #tpu.memory_space<vmem>>, %arg7: memref<4x1x32xf32, #tpu.memory_space<vmem>>, %arg8: memref<4x1x32xf32, #tpu.memory_space<vmem>>, %arg9: memref<4x32x128xbf16, #tpu.memory_space<vmem>>, %arg10: memref<4x1x128xf32, #tpu.memory_space<vmem>>, %arg11: memref<4x128x32xbf16, #tpu.memory_space<vmem>>, %arg12: memref<4x1x32xf32, #tpu.memory_space<vmem>>, %arg13: memref<4x1x32xf32, #tpu.memory_space<vmem>>, %arg14: memref<4x1x32xf32, #tpu.memory_space<vmem>>, %arg15: memref<1x8x32xf32, #tpu.memory_space<vmem>>) attributes {dimension_semantics = [#tpu.dimension_semantics<parallel>], iteration_bounds = array<i64: 2>, scalar_prefetch = 0 : i64, scratch_operands = 0 : i64, tpu.core_type = #tpu.core_type<tc>, window_params = [{transform_indices = @transform_0, window_bounds = array<i64: 1, 8, 32>}, {transform_indices = @transform_1, window_bounds = array<i64: 1, 1, 8>}, {pipeline_mode = #tpu.pipeline_mode<synchronous>, transform_indices = @transform_2, window_bounds = array<i64: 4, 32, 96>}, {pipeline_mode = #tpu.pipeline_mode<synchronous>, transform_indices = @transform_3, window_bounds = array<i64: 4, 1, 96>}, {pipeline_mode = #tpu.pipeline_mode<synchronous>, transform_indices = @transform_4, window_bounds = array<i64: 4, 32, 32>}, {pipeline_mode = #tpu.pipeline_mode<synchronous>, transform_indices = @transform_5, window_bounds = array<i64: 4, 1, 32>}, {pipeline_mode = #tpu.pipeline_mode<synchronous>, transform_indices = @transform_6, window_bounds = array<i64: 4, 1, 32>}, {pipeline_mode = #tpu.pipeline_mode<synchronous>, transform_indices = @transform_7, window_bounds = array<i64: 4, 1, 32>}, {pipeline_mode = #tpu.pipeline_mode<synchronous>, transform_indices = @transform_8, window_bounds = array<i64: 4, 32, 128>}, {pipeline_mode = #tpu.pipeline_mode<synchronous>, transform_indices = @transform_9, window_bounds = array<i64: 4, 1, 128>}, {pipeline_mode = #tpu.pipeline_mode<synchronous>, transform_indices = @transform_10, window_bounds = array<i64: 4, 128, 32>}, {pipeline_mode = #tpu.pipeline_mode<synchronous>, transform_indices = @transform_11, window_bounds = array<i64: 4, 1, 32>}, {pipeline_mode = #tpu.pipeline_mode<synchronous>, transform_indices = @transform_12, window_bounds = array<i64: 4, 1, 32>}, {pipeline_mode = #tpu.pipeline_mode<synchronous>, transform_indices = @transform_13, window_bounds = array<i64: 4, 1, 32>}, {transform_indices = @transform_14, window_bounds = array<i64: 1, 8, 32>}]} {
    %c0 = arith.constant 0 : index
    %c0_0 = arith.constant 0 : index
    %c0_1 = arith.constant 0 : index
    %0 = vector.load %arg1[%c0, %c0_0, %c0_1] : memref<1x8x32xf32, #tpu.memory_space<vmem>>, vector<1x8x32xf32>
    %1 = vector.shape_cast %0 : vector<1x8x32xf32> to vector<8x32xf32>
    %c0_2 = arith.constant 0 : index
    %c0_3 = arith.constant 0 : index
    %c0_4 = arith.constant 0 : index
    %2 = vector.load %arg2[%c0_2, %c0_3, %c0_4] : memref<1x1x8xf32, #tpu.memory_space<vmem>>, vector<1x1x8xf32>
    %3 = vector.shape_cast %2 : vector<1x1x8xf32> to vector<1x8xf32>
    %cst = arith.constant 1.000000e+00 : f32
    %4 = vector.broadcast %cst : f32 to vector<1x8xf32>
    %5 = arith.subf %4, %3 : vector<1x8xf32>
    %cst_5 = arith.constant -1.000000e+09 : f32
    %6 = vector.broadcast %cst_5 : f32 to vector<1x8xf32>
    %7 = arith.mulf %5, %6 : vector<1x8xf32>
    %8 = vector.shape_cast %7 : vector<1x8xf32> to vector<1x1x8xf32>
    %9 = arith.truncf %1 : vector<8x32xf32> to vector<8x32xbf16>
    %c0_6 = arith.constant 0 : index
    %c0_7 = arith.constant 0 : index
    %c0_8 = arith.constant 0 : index
    %10 = vector.load %arg3[%c0_6, %c0_7, %c0_8] : memref<4x32x96xbf16, #tpu.memory_space<vmem>>, vector<1x32x96xbf16>
    %11 = vector.shape_cast %10 : vector<1x32x96xbf16> to vector<32x96xbf16>
    %cst_9 = arith.constant dense<0.000000e+00> : vector<8x96xf32>
    %12 = tpu.matmul %9, %11, %cst_9 {dimension_numbers = #tpu.dot_dimension_numbers<[1], [0], [0], [1], [0, 0, 1, 1], [], []>} : vector<8x32xbf16>, vector<32x96xbf16>, vector<8x96xf32> -> vector<8x96xf32>
    %c0_10 = arith.constant 0 : index
    %c0_11 = arith.constant 0 : index
    %c0_12 = arith.constant 0 : index
    %13 = vector.load %arg4[%c0_10, %c0_11, %c0_12] : memref<4x1x96xf32, #tpu.memory_space<vmem>>, vector<1x1x96xf32>
    %14 = vector.shape_cast %13 : vector<1x1x96xf32> to vector<1x96xf32>
    %15 = vector.broadcast %14 : vector<1x96xf32> to vector<8x96xf32>
    %16 = arith.addf %12, %15 : vector<8x96xf32>
    %17 = vector.extract_strided_slice %16 {offsets = [0, 0], sizes = [8, 32], strides = [1, 1]} : vector<8x96xf32> to vector<8x32xf32>
    %cst_13 = arith.constant 0.353553385 : f32
    %18 = vector.broadcast %cst_13 : f32 to vector<8x32xf32>
    %19 = arith.mulf %17, %18 : vector<8x32xf32>
    %20 = arith.truncf %19 : vector<8x32xf32> to vector<8x32xbf16>
    %21 = vector.extract_strided_slice %16 {offsets = [0, 32], sizes = [8, 32], strides = [1, 1]} : vector<8x96xf32> to vector<8x32xf32>
    %22 = arith.truncf %21 : vector<8x32xf32> to vector<8x32xbf16>
    %23 = vector.extract_strided_slice %16 {offsets = [0, 64], sizes = [8, 32], strides = [1, 1]} : vector<8x96xf32> to vector<8x32xf32>
    %24 = arith.truncf %23 : vector<8x32xf32> to vector<8x32xbf16>
    %25 = vector.extract_strided_slice %20 {offsets = [0, 0], sizes = [8, 8], strides = [1, 1]} : vector<8x32xbf16> to vector<8x8xbf16>
    %26 = vector.extract_strided_slice %20 {offsets = [0, 8], sizes = [8, 8], strides = [1, 1]} : vector<8x32xbf16> to vector<8x8xbf16>
    %27 = vector.extract_strided_slice %20 {offsets = [0, 16], sizes = [8, 8], strides = [1, 1]} : vector<8x32xbf16> to vector<8x8xbf16>
    %28 = vector.extract_strided_slice %20 {offsets = [0, 24], sizes = [8, 8], strides = [1, 1]} : vector<8x32xbf16> to vector<8x8xbf16>
    %29 = vector.shape_cast %25 : vector<8x8xbf16> to vector<1x8x8xbf16>
    %30 = vector.shape_cast %26 : vector<8x8xbf16> to vector<1x8x8xbf16>
    %31 = vector.shape_cast %27 : vector<8x8xbf16> to vector<1x8x8xbf16>
    %32 = vector.shape_cast %28 : vector<8x8xbf16> to vector<1x8x8xbf16>
    %33 = tpu.concatenate %29, %30, %31, %32 in 0 : vector<1x8x8xbf16>, vector<1x8x8xbf16>, vector<1x8x8xbf16>, vector<1x8x8xbf16> -> vector<4x8x8xbf16>
    %34 = vector.extract_strided_slice %22 {offsets = [0, 0], sizes = [8, 8], strides = [1, 1]} : vector<8x32xbf16> to vector<8x8xbf16>
    %35 = vector.extract_strided_slice %22 {offsets = [0, 8], sizes = [8, 8], strides = [1, 1]} : vector<8x32xbf16> to vector<8x8xbf16>
    %36 = vector.extract_strided_slice %22 {offsets = [0, 16], sizes = [8, 8], strides = [1, 1]} : vector<8x32xbf16> to vector<8x8xbf16>
    %37 = vector.extract_strided_slice %22 {offsets = [0, 24], sizes = [8, 8], strides = [1, 1]} : vector<8x32xbf16> to vector<8x8xbf16>
    %38 = vector.shape_cast %34 : vector<8x8xbf16> to vector<1x8x8xbf16>
    %39 = vector.shape_cast %35 : vector<8x8xbf16> to vector<1x8x8xbf16>
    %40 = vector.shape_cast %36 : vector<8x8xbf16> to vector<1x8x8xbf16>
    %41 = vector.shape_cast %37 : vector<8x8xbf16> to vector<1x8x8xbf16>
    %42 = tpu.concatenate %38, %39, %40, %41 in 0 : vector<1x8x8xbf16>, vector<1x8x8xbf16>, vector<1x8x8xbf16>, vector<1x8x8xbf16> -> vector<4x8x8xbf16>
    %43 = vector.extract_strided_slice %24 {offsets = [0, 0], sizes = [8, 8], strides = [1, 1]} : vector<8x32xbf16> to vector<8x8xbf16>
    %44 = vector.extract_strided_slice %24 {offsets = [0, 8], sizes = [8, 8], strides = [1, 1]} : vector<8x32xbf16> to vector<8x8xbf16>
    %45 = vector.extract_strided_slice %24 {offsets = [0, 16], sizes = [8, 8], strides = [1, 1]} : vector<8x32xbf16> to vector<8x8xbf16>
    %46 = vector.extract_strided_slice %24 {offsets = [0, 24], sizes = [8, 8], strides = [1, 1]} : vector<8x32xbf16> to vector<8x8xbf16>
    %47 = vector.shape_cast %43 : vector<8x8xbf16> to vector<1x8x8xbf16>
    %48 = vector.shape_cast %44 : vector<8x8xbf16> to vector<1x8x8xbf16>
    %49 = vector.shape_cast %45 : vector<8x8xbf16> to vector<1x8x8xbf16>
    %50 = vector.shape_cast %46 : vector<8x8xbf16> to vector<1x8x8xbf16>
    %51 = tpu.concatenate %47, %48, %49, %50 in 0 : vector<1x8x8xbf16>, vector<1x8x8xbf16>, vector<1x8x8xbf16>, vector<1x8x8xbf16> -> vector<4x8x8xbf16>
    "tpu.trace_start"() <{level = 10 : i32, message = "hqd,hkd->hqk"}> : () -> ()
    %cst_14 = arith.constant dense<0.000000e+00> : vector<4x8x8xf32>
    %52 = tpu.matmul %33, %42, %cst_14 {dimension_numbers = #tpu.dot_dimension_numbers<[2], [2], [1], [1], [0, 0, 0, 1, 1, 1], [0], [0]>} : vector<4x8x8xbf16>, vector<4x8x8xbf16>, vector<4x8x8xf32> -> vector<4x8x8xf32>
    "tpu.trace_stop"() : () -> ()
    %53 = vector.broadcast %8 : vector<1x1x8xf32> to vector<4x8x8xf32>
    %54 = arith.addf %52, %53 : vector<4x8x8xf32>
    %cst_15 = arith.constant dense<0xFF800000> : vector<4x8xf32>
    %55 = vector.multi_reduction <maximumf>, %54, %cst_15 [2] : vector<4x8x8xf32> to vector<4x8xf32>
    %56 = vector.shape_cast %55 : vector<4x8xf32> to vector<4x8x1xf32>
    %57 = vector.broadcast %56 : vector<4x8x1xf32> to vector<4x8x8xf32>
    %58 = arith.subf %54, %57 : vector<4x8x8xf32>
    %59 = math.exp %58 : vector<4x8x8xf32>
    %cst_16 = arith.constant dense<0.000000e+00> : vector<4x8xf32>
    %60 = vector.multi_reduction <add>, %59, %cst_16 [2] : vector<4x8x8xf32> to vector<4x8xf32>
    %61 = vector.shape_cast %60 : vector<4x8xf32> to vector<4x8x1xf32>
    %cst_17 = arith.constant 9.99999971E-10 : f32
    %62 = vector.broadcast %cst_17 : f32 to vector<4x8x1xf32>
    %63 = arith.maximumf %61, %62 : vector<4x8x1xf32>
    %64 = tpu.reciprocal %63 {approx = true} : vector<4x8x1xf32> -> vector<4x8x1xf32>
    %65 = vector.broadcast %64 : vector<4x8x1xf32> to vector<4x8x8xf32>
    %66 = arith.mulf %59, %65 : vector<4x8x8xf32>
    %67 = arith.truncf %66 : vector<4x8x8xf32> to vector<4x8x8xbf16>
    "tpu.trace_start"() <{level = 10 : i32, message = "hqk,hkd->hqd"}> : () -> ()
    %cst_18 = arith.constant dense<0.000000e+00> : vector<4x8x8xf32>
    %68 = tpu.matmul %67, %51, %cst_18 {dimension_numbers = #tpu.dot_dimension_numbers<[2], [1], [1], [2], [0, 0, 0, 1, 1, 2], [0], [0]>} : vector<4x8x8xbf16>, vector<4x8x8xbf16>, vector<4x8x8xf32> -> vector<4x8x8xf32>
    "tpu.trace_stop"() : () -> ()
    %69 = vector.extract_strided_slice %68 {offsets = [0, 0, 0], sizes = [1, 8, 8], strides = [1, 1, 1]} : vector<4x8x8xf32> to vector<1x8x8xf32>
    %70 = vector.shape_cast %69 : vector<1x8x8xf32> to vector<8x8xf32>
    %71 = vector.extract_strided_slice %68 {offsets = [1, 0, 0], sizes = [1, 8, 8], strides = [1, 1, 1]} : vector<4x8x8xf32> to vector<1x8x8xf32>
    %72 = vector.shape_cast %71 : vector<1x8x8xf32> to vector<8x8xf32>
    %73 = vector.extract_strided_slice %68 {offsets = [2, 0, 0], sizes = [1, 8, 8], strides = [1, 1, 1]} : vector<4x8x8xf32> to vector<1x8x8xf32>
    %74 = vector.shape_cast %73 : vector<1x8x8xf32> to vector<8x8xf32>
    %75 = vector.extract_strided_slice %68 {offsets = [3, 0, 0], sizes = [1, 8, 8], strides = [1, 1, 1]} : vector<4x8x8xf32> to vector<1x8x8xf32>
    %76 = vector.shape_cast %75 : vector<1x8x8xf32> to vector<8x8xf32>
    %77 = tpu.concatenate %70, %72, %74, %76 in 1 : vector<8x8xf32>, vector<8x8xf32>, vector<8x8xf32>, vector<8x8xf32> -> vector<8x32xf32>
    %78 = arith.truncf %77 : vector<8x32xf32> to vector<8x32xbf16>
    %c0_19 = arith.constant 0 : index
    %c0_20 = arith.constant 0 : index
    %c0_21 = arith.constant 0 : index
    %79 = vector.load %arg5[%c0_19, %c0_20, %c0_21] : memref<4x32x32xbf16, #tpu.memory_space<vmem>>, vector<1x32x32xbf16>
    %80 = vector.shape_cast %79 : vector<1x32x32xbf16> to vector<32x32xbf16>
    %cst_22 = arith.constant dense<0.000000e+00> : vector<8x32xf32>
    %81 = tpu.matmul %78, %80, %cst_22 {dimension_numbers = #tpu.dot_dimension_numbers<[1], [0], [0], [1], [0, 0, 1, 1], [], []>} : vector<8x32xbf16>, vector<32x32xbf16>, vector<8x32xf32> -> vector<8x32xf32>
    %c0_23 = arith.constant 0 : index
    %c0_24 = arith.constant 0 : index
    %c0_25 = arith.constant 0 : index
    %82 = vector.load %arg6[%c0_23, %c0_24, %c0_25] : memref<4x1x32xf32, #tpu.memory_space<vmem>>, vector<1x1x32xf32>
    %83 = vector.shape_cast %82 : vector<1x1x32xf32> to vector<1x32xf32>
    %84 = vector.broadcast %83 : vector<1x32xf32> to vector<8x32xf32>
    %85 = arith.addf %81, %84 : vector<8x32xf32>
    %86 = arith.addf %1, %85 : vector<8x32xf32>
    %c0_26 = arith.constant 0 : index
    %c0_27 = arith.constant 0 : index
    %c0_28 = arith.constant 0 : index
    %87 = vector.load %arg7[%c0_26, %c0_27, %c0_28] : memref<4x1x32xf32, #tpu.memory_space<vmem>>, vector<1x1x32xf32>
    %88 = vector.shape_cast %87 : vector<1x1x32xf32> to vector<1x32xf32>
    %c0_29 = arith.constant 0 : index
    %c0_30 = arith.constant 0 : index
    %c0_31 = arith.constant 0 : index
    %89 = vector.load %arg8[%c0_29, %c0_30, %c0_31] : memref<4x1x32xf32, #tpu.memory_space<vmem>>, vector<1x1x32xf32>
    %90 = vector.shape_cast %89 : vector<1x1x32xf32> to vector<1x32xf32>
    %cst_32 = arith.constant dense<0.000000e+00> : vector<8xf32>
    %91 = vector.multi_reduction <add>, %86, %cst_32 [1] : vector<8x32xf32> to vector<8xf32>
    %92 = vector.shape_cast %91 : vector<8xf32> to vector<8x1xf32>
    %cst_33 = arith.constant 3.200000e+01 : f32
    %93 = vector.broadcast %cst_33 : f32 to vector<8x1xf32>
    %94 = arith.divf %92, %93 : vector<8x1xf32>
    %95 = vector.broadcast %94 : vector<8x1xf32> to vector<8x32xf32>
    %96 = arith.subf %86, %95 : vector<8x32xf32>
    %97 = arith.mulf %96, %96 : vector<8x32xf32>
    %cst_34 = arith.constant dense<0.000000e+00> : vector<8xf32>
    %98 = vector.multi_reduction <add>, %97, %cst_34 [1] : vector<8x32xf32> to vector<8xf32>
    %99 = vector.shape_cast %98 : vector<8xf32> to vector<8x1xf32>
    %cst_35 = arith.constant 3.200000e+01 : f32
    %100 = vector.broadcast %cst_35 : f32 to vector<8x1xf32>
    %101 = arith.divf %99, %100 : vector<8x1xf32>
    %102 = vector.broadcast %94 : vector<8x1xf32> to vector<8x32xf32>
    %103 = arith.subf %86, %102 : vector<8x32xf32>
    %cst_36 = arith.constant 9.99999974E-6 : f32
    %104 = vector.broadcast %cst_36 : f32 to vector<8x1xf32>
    %105 = arith.addf %101, %104 : vector<8x1xf32>
    %106 = math.rsqrt %105 : vector<8x1xf32>
    %107 = vector.broadcast %106 : vector<8x1xf32> to vector<8x32xf32>
    %108 = arith.mulf %103, %107 : vector<8x32xf32>
    %109 = vector.broadcast %88 : vector<1x32xf32> to vector<8x32xf32>
    %110 = arith.mulf %108, %109 : vector<8x32xf32>
    %111 = vector.broadcast %90 : vector<1x32xf32> to vector<8x32xf32>
    %112 = arith.addf %110, %111 : vector<8x32xf32>
    %113 = arith.truncf %112 : vector<8x32xf32> to vector<8x32xbf16>
    %c0_37 = arith.constant 0 : index
    %c0_38 = arith.constant 0 : index
    %c0_39 = arith.constant 0 : index
    %114 = vector.load %arg9[%c0_37, %c0_38, %c0_39] : memref<4x32x128xbf16, #tpu.memory_space<vmem>>, vector<1x32x128xbf16>
    %115 = vector.shape_cast %114 : vector<1x32x128xbf16> to vector<32x128xbf16>
    %cst_40 = arith.constant dense<0.000000e+00> : vector<8x128xf32>
    %116 = tpu.matmul %113, %115, %cst_40 {dimension_numbers = #tpu.dot_dimension_numbers<[1], [0], [0], [1], [0, 0, 1, 1], [], []>} : vector<8x32xbf16>, vector<32x128xbf16>, vector<8x128xf32> -> vector<8x128xf32>
    %c0_41 = arith.constant 0 : index
    %c0_42 = arith.constant 0 : index
    %c0_43 = arith.constant 0 : index
    %117 = vector.load %arg10[%c0_41, %c0_42, %c0_43] : memref<4x1x128xf32, #tpu.memory_space<vmem>>, vector<1x1x128xf32>
    %118 = vector.shape_cast %117 : vector<1x1x128xf32> to vector<1x128xf32>
    %119 = vector.broadcast %118 : vector<1x128xf32> to vector<8x128xf32>
    %120 = arith.addf %116, %119 : vector<8x128xf32>
    %cst_44 = arith.constant 0.000000e+00 : f32
    %121 = vector.broadcast %cst_44 : f32 to vector<8x128xf32>
    %122 = arith.maximumf %120, %121 : vector<8x128xf32>
    %123 = arith.truncf %122 : vector<8x128xf32> to vector<8x128xbf16>
    %c0_45 = arith.constant 0 : index
    %c0_46 = arith.constant 0 : index
    %c0_47 = arith.constant 0 : index
    %124 = vector.load %arg11[%c0_45, %c0_46, %c0_47] : memref<4x128x32xbf16, #tpu.memory_space<vmem>>, vector<1x128x32xbf16>
    %125 = vector.shape_cast %124 : vector<1x128x32xbf16> to vector<128x32xbf16>
    %cst_48 = arith.constant dense<0.000000e+00> : vector<8x32xf32>
    %126 = tpu.matmul %123, %125, %cst_48 {dimension_numbers = #tpu.dot_dimension_numbers<[1], [0], [0], [1], [0, 0, 1, 1], [], []>} : vector<8x128xbf16>, vector<128x32xbf16>, vector<8x32xf32> -> vector<8x32xf32>
    %c0_49 = arith.constant 0 : index
    %c0_50 = arith.constant 0 : index
    %c0_51 = arith.constant 0 : index
    %127 = vector.load %arg12[%c0_49, %c0_50, %c0_51] : memref<4x1x32xf32, #tpu.memory_space<vmem>>, vector<1x1x32xf32>
    %128 = vector.shape_cast %127 : vector<1x1x32xf32> to vector<1x32xf32>
    %129 = vector.broadcast %128 : vector<1x32xf32> to vector<8x32xf32>
    %130 = arith.addf %126, %129 : vector<8x32xf32>
    %131 = arith.addf %112, %130 : vector<8x32xf32>
    %c0_52 = arith.constant 0 : index
    %c0_53 = arith.constant 0 : index
    %c0_54 = arith.constant 0 : index
    %132 = vector.load %arg13[%c0_52, %c0_53, %c0_54] : memref<4x1x32xf32, #tpu.memory_space<vmem>>, vector<1x1x32xf32>
    %133 = vector.shape_cast %132 : vector<1x1x32xf32> to vector<1x32xf32>
    %c0_55 = arith.constant 0 : index
    %c0_56 = arith.constant 0 : index
    %c0_57 = arith.constant 0 : index
    %134 = vector.load %arg14[%c0_55, %c0_56, %c0_57] : memref<4x1x32xf32, #tpu.memory_space<vmem>>, vector<1x1x32xf32>
    %135 = vector.shape_cast %134 : vector<1x1x32xf32> to vector<1x32xf32>
    %cst_58 = arith.constant dense<0.000000e+00> : vector<8xf32>
    %136 = vector.multi_reduction <add>, %131, %cst_58 [1] : vector<8x32xf32> to vector<8xf32>
    %137 = vector.shape_cast %136 : vector<8xf32> to vector<8x1xf32>
    %cst_59 = arith.constant 3.200000e+01 : f32
    %138 = vector.broadcast %cst_59 : f32 to vector<8x1xf32>
    %139 = arith.divf %137, %138 : vector<8x1xf32>
    %140 = vector.broadcast %139 : vector<8x1xf32> to vector<8x32xf32>
    %141 = arith.subf %131, %140 : vector<8x32xf32>
    %142 = arith.mulf %141, %141 : vector<8x32xf32>
    %cst_60 = arith.constant dense<0.000000e+00> : vector<8xf32>
    %143 = vector.multi_reduction <add>, %142, %cst_60 [1] : vector<8x32xf32> to vector<8xf32>
    %144 = vector.shape_cast %143 : vector<8xf32> to vector<8x1xf32>
    %cst_61 = arith.constant 3.200000e+01 : f32
    %145 = vector.broadcast %cst_61 : f32 to vector<8x1xf32>
    %146 = arith.divf %144, %145 : vector<8x1xf32>
    %147 = vector.broadcast %139 : vector<8x1xf32> to vector<8x32xf32>
    %148 = arith.subf %131, %147 : vector<8x32xf32>
    %cst_62 = arith.constant 9.99999974E-6 : f32
    %149 = vector.broadcast %cst_62 : f32 to vector<8x1xf32>
    %150 = arith.addf %146, %149 : vector<8x1xf32>
    %151 = math.rsqrt %150 : vector<8x1xf32>
    %152 = vector.broadcast %151 : vector<8x1xf32> to vector<8x32xf32>
    %153 = arith.mulf %148, %152 : vector<8x32xf32>
    %154 = vector.broadcast %133 : vector<1x32xf32> to vector<8x32xf32>
    %155 = arith.mulf %153, %154 : vector<8x32xf32>
    %156 = vector.broadcast %135 : vector<1x32xf32> to vector<8x32xf32>
    %157 = arith.addf %155, %156 : vector<8x32xf32>
    %158 = arith.truncf %157 : vector<8x32xf32> to vector<8x32xbf16>
    %c1 = arith.constant 1 : index
    %c0_63 = arith.constant 0 : index
    %c0_64 = arith.constant 0 : index
    %159 = vector.load %arg3[%c1, %c0_63, %c0_64] : memref<4x32x96xbf16, #tpu.memory_space<vmem>>, vector<1x32x96xbf16>
    %160 = vector.shape_cast %159 : vector<1x32x96xbf16> to vector<32x96xbf16>
    %cst_65 = arith.constant dense<0.000000e+00> : vector<8x96xf32>
    %161 = tpu.matmul %158, %160, %cst_65 {dimension_numbers = #tpu.dot_dimension_numbers<[1], [0], [0], [1], [0, 0, 1, 1], [], []>} : vector<8x32xbf16>, vector<32x96xbf16>, vector<8x96xf32> -> vector<8x96xf32>
    %c1_66 = arith.constant 1 : index
    %c0_67 = arith.constant 0 : index
    %c0_68 = arith.constant 0 : index
    %162 = vector.load %arg4[%c1_66, %c0_67, %c0_68] : memref<4x1x96xf32, #tpu.memory_space<vmem>>, vector<1x1x96xf32>
    %163 = vector.shape_cast %162 : vector<1x1x96xf32> to vector<1x96xf32>
    %164 = vector.broadcast %163 : vector<1x96xf32> to vector<8x96xf32>
    %165 = arith.addf %161, %164 : vector<8x96xf32>
    %166 = vector.extract_strided_slice %165 {offsets = [0, 0], sizes = [8, 32], strides = [1, 1]} : vector<8x96xf32> to vector<8x32xf32>
    %cst_69 = arith.constant 0.353553385 : f32
    %167 = vector.broadcast %cst_69 : f32 to vector<8x32xf32>
    %168 = arith.mulf %166, %167 : vector<8x32xf32>
    %169 = arith.truncf %168 : vector<8x32xf32> to vector<8x32xbf16>
    %170 = vector.extract_strided_slice %165 {offsets = [0, 32], sizes = [8, 32], strides = [1, 1]} : vector<8x96xf32> to vector<8x32xf32>
    %171 = arith.truncf %170 : vector<8x32xf32> to vector<8x32xbf16>
    %172 = vector.extract_strided_slice %165 {offsets = [0, 64], sizes = [8, 32], strides = [1, 1]} : vector<8x96xf32> to vector<8x32xf32>
    %173 = arith.truncf %172 : vector<8x32xf32> to vector<8x32xbf16>
    %174 = vector.extract_strided_slice %169 {offsets = [0, 0], sizes = [8, 8], strides = [1, 1]} : vector<8x32xbf16> to vector<8x8xbf16>
    %175 = vector.extract_strided_slice %169 {offsets = [0, 8], sizes = [8, 8], strides = [1, 1]} : vector<8x32xbf16> to vector<8x8xbf16>
    %176 = vector.extract_strided_slice %169 {offsets = [0, 16], sizes = [8, 8], strides = [1, 1]} : vector<8x32xbf16> to vector<8x8xbf16>
    %177 = vector.extract_strided_slice %169 {offsets = [0, 24], sizes = [8, 8], strides = [1, 1]} : vector<8x32xbf16> to vector<8x8xbf16>
    %178 = vector.shape_cast %174 : vector<8x8xbf16> to vector<1x8x8xbf16>
    %179 = vector.shape_cast %175 : vector<8x8xbf16> to vector<1x8x8xbf16>
    %180 = vector.shape_cast %176 : vector<8x8xbf16> to vector<1x8x8xbf16>
    %181 = vector.shape_cast %177 : vector<8x8xbf16> to vector<1x8x8xbf16>
    %182 = tpu.concatenate %178, %179, %180, %181 in 0 : vector<1x8x8xbf16>, vector<1x8x8xbf16>, vector<1x8x8xbf16>, vector<1x8x8xbf16> -> vector<4x8x8xbf16>
    %183 = vector.extract_strided_slice %171 {offsets = [0, 0], sizes = [8, 8], strides = [1, 1]} : vector<8x32xbf16> to vector<8x8xbf16>
    %184 = vector.extract_strided_slice %171 {offsets = [0, 8], sizes = [8, 8], strides = [1, 1]} : vector<8x32xbf16> to vector<8x8xbf16>
    %185 = vector.extract_strided_slice %171 {offsets = [0, 16], sizes = [8, 8], strides = [1, 1]} : vector<8x32xbf16> to vector<8x8xbf16>
    %186 = vector.extract_strided_slice %171 {offsets = [0, 24], sizes = [8, 8], strides = [1, 1]} : vector<8x32xbf16> to vector<8x8xbf16>
    %187 = vector.shape_cast %183 : vector<8x8xbf16> to vector<1x8x8xbf16>
    %188 = vector.shape_cast %184 : vector<8x8xbf16> to vector<1x8x8xbf16>
    %189 = vector.shape_cast %185 : vector<8x8xbf16> to vector<1x8x8xbf16>
    %190 = vector.shape_cast %186 : vector<8x8xbf16> to vector<1x8x8xbf16>
    %191 = tpu.concatenate %187, %188, %189, %190 in 0 : vector<1x8x8xbf16>, vector<1x8x8xbf16>, vector<1x8x8xbf16>, vector<1x8x8xbf16> -> vector<4x8x8xbf16>
    %192 = vector.extract_strided_slice %173 {offsets = [0, 0], sizes = [8, 8], strides = [1, 1]} : vector<8x32xbf16> to vector<8x8xbf16>
    %193 = vector.extract_strided_slice %173 {offsets = [0, 8], sizes = [8, 8], strides = [1, 1]} : vector<8x32xbf16> to vector<8x8xbf16>
    %194 = vector.extract_strided_slice %173 {offsets = [0, 16], sizes = [8, 8], strides = [1, 1]} : vector<8x32xbf16> to vector<8x8xbf16>
    %195 = vector.extract_strided_slice %173 {offsets = [0, 24], sizes = [8, 8], strides = [1, 1]} : vector<8x32xbf16> to vector<8x8xbf16>
    %196 = vector.shape_cast %192 : vector<8x8xbf16> to vector<1x8x8xbf16>
    %197 = vector.shape_cast %193 : vector<8x8xbf16> to vector<1x8x8xbf16>
    %198 = vector.shape_cast %194 : vector<8x8xbf16> to vector<1x8x8xbf16>
    %199 = vector.shape_cast %195 : vector<8x8xbf16> to vector<1x8x8xbf16>
    %200 = tpu.concatenate %196, %197, %198, %199 in 0 : vector<1x8x8xbf16>, vector<1x8x8xbf16>, vector<1x8x8xbf16>, vector<1x8x8xbf16> -> vector<4x8x8xbf16>
    "tpu.trace_start"() <{level = 10 : i32, message = "hqd,hkd->hqk"}> : () -> ()
    %cst_70 = arith.constant dense<0.000000e+00> : vector<4x8x8xf32>
    %201 = tpu.matmul %182, %191, %cst_70 {dimension_numbers = #tpu.dot_dimension_numbers<[2], [2], [1], [1], [0, 0, 0, 1, 1, 1], [0], [0]>} : vector<4x8x8xbf16>, vector<4x8x8xbf16>, vector<4x8x8xf32> -> vector<4x8x8xf32>
    "tpu.trace_stop"() : () -> ()
    %202 = vector.broadcast %8 : vector<1x1x8xf32> to vector<4x8x8xf32>
    %203 = arith.addf %201, %202 : vector<4x8x8xf32>
    %cst_71 = arith.constant dense<0xFF800000> : vector<4x8xf32>
    %204 = vector.multi_reduction <maximumf>, %203, %cst_71 [2] : vector<4x8x8xf32> to vector<4x8xf32>
    %205 = vector.shape_cast %204 : vector<4x8xf32> to vector<4x8x1xf32>
    %206 = vector.broadcast %205 : vector<4x8x1xf32> to vector<4x8x8xf32>
    %207 = arith.subf %203, %206 : vector<4x8x8xf32>
    %208 = math.exp %207 : vector<4x8x8xf32>
    %cst_72 = arith.constant dense<0.000000e+00> : vector<4x8xf32>
    %209 = vector.multi_reduction <add>, %208, %cst_72 [2] : vector<4x8x8xf32> to vector<4x8xf32>
    %210 = vector.shape_cast %209 : vector<4x8xf32> to vector<4x8x1xf32>
    %cst_73 = arith.constant 9.99999971E-10 : f32
    %211 = vector.broadcast %cst_73 : f32 to vector<4x8x1xf32>
    %212 = arith.maximumf %210, %211 : vector<4x8x1xf32>
    %213 = tpu.reciprocal %212 {approx = true} : vector<4x8x1xf32> -> vector<4x8x1xf32>
    %214 = vector.broadcast %213 : vector<4x8x1xf32> to vector<4x8x8xf32>
    %215 = arith.mulf %208, %214 : vector<4x8x8xf32>
    %216 = arith.truncf %215 : vector<4x8x8xf32> to vector<4x8x8xbf16>
    "tpu.trace_start"() <{level = 10 : i32, message = "hqk,hkd->hqd"}> : () -> ()
    %cst_74 = arith.constant dense<0.000000e+00> : vector<4x8x8xf32>
    %217 = tpu.matmul %216, %200, %cst_74 {dimension_numbers = #tpu.dot_dimension_numbers<[2], [1], [1], [2], [0, 0, 0, 1, 1, 2], [0], [0]>} : vector<4x8x8xbf16>, vector<4x8x8xbf16>, vector<4x8x8xf32> -> vector<4x8x8xf32>
    "tpu.trace_stop"() : () -> ()
    %218 = vector.extract_strided_slice %217 {offsets = [0, 0, 0], sizes = [1, 8, 8], strides = [1, 1, 1]} : vector<4x8x8xf32> to vector<1x8x8xf32>
    %219 = vector.shape_cast %218 : vector<1x8x8xf32> to vector<8x8xf32>
    %220 = vector.extract_strided_slice %217 {offsets = [1, 0, 0], sizes = [1, 8, 8], strides = [1, 1, 1]} : vector<4x8x8xf32> to vector<1x8x8xf32>
    %221 = vector.shape_cast %220 : vector<1x8x8xf32> to vector<8x8xf32>
    %222 = vector.extract_strided_slice %217 {offsets = [2, 0, 0], sizes = [1, 8, 8], strides = [1, 1, 1]} : vector<4x8x8xf32> to vector<1x8x8xf32>
    %223 = vector.shape_cast %222 : vector<1x8x8xf32> to vector<8x8xf32>
    %224 = vector.extract_strided_slice %217 {offsets = [3, 0, 0], sizes = [1, 8, 8], strides = [1, 1, 1]} : vector<4x8x8xf32> to vector<1x8x8xf32>
    %225 = vector.shape_cast %224 : vector<1x8x8xf32> to vector<8x8xf32>
    %226 = tpu.concatenate %219, %221, %223, %225 in 1 : vector<8x8xf32>, vector<8x8xf32>, vector<8x8xf32>, vector<8x8xf32> -> vector<8x32xf32>
    %227 = arith.truncf %226 : vector<8x32xf32> to vector<8x32xbf16>
    %c1_75 = arith.constant 1 : index
    %c0_76 = arith.constant 0 : index
    %c0_77 = arith.constant 0 : index
    %228 = vector.load %arg5[%c1_75, %c0_76, %c0_77] : memref<4x32x32xbf16, #tpu.memory_space<vmem>>, vector<1x32x32xbf16>
    %229 = vector.shape_cast %228 : vector<1x32x32xbf16> to vector<32x32xbf16>
    %cst_78 = arith.constant dense<0.000000e+00> : vector<8x32xf32>
    %230 = tpu.matmul %227, %229, %cst_78 {dimension_numbers = #tpu.dot_dimension_numbers<[1], [0], [0], [1], [0, 0, 1, 1], [], []>} : vector<8x32xbf16>, vector<32x32xbf16>, vector<8x32xf32> -> vector<8x32xf32>
    %c1_79 = arith.constant 1 : index
    %c0_80 = arith.constant 0 : index
    %c0_81 = arith.constant 0 : index
    %231 = vector.load %arg6[%c1_79, %c0_80, %c0_81] : memref<4x1x32xf32, #tpu.memory_space<vmem>>, vector<1x1x32xf32>
    %232 = vector.shape_cast %231 : vector<1x1x32xf32> to vector<1x32xf32>
    %233 = vector.broadcast %232 : vector<1x32xf32> to vector<8x32xf32>
    %234 = arith.addf %230, %233 : vector<8x32xf32>
    %235 = arith.addf %157, %234 : vector<8x32xf32>
    %c1_82 = arith.constant 1 : index
    %c0_83 = arith.constant 0 : index
    %c0_84 = arith.constant 0 : index
    %236 = vector.load %arg7[%c1_82, %c0_83, %c0_84] : memref<4x1x32xf32, #tpu.memory_space<vmem>>, vector<1x1x32xf32>
    %237 = vector.shape_cast %236 : vector<1x1x32xf32> to vector<1x32xf32>
    %c1_85 = arith.constant 1 : index
    %c0_86 = arith.constant 0 : index
    %c0_87 = arith.constant 0 : index
    %238 = vector.load %arg8[%c1_85, %c0_86, %c0_87] : memref<4x1x32xf32, #tpu.memory_space<vmem>>, vector<1x1x32xf32>
    %239 = vector.shape_cast %238 : vector<1x1x32xf32> to vector<1x32xf32>
    %cst_88 = arith.constant dense<0.000000e+00> : vector<8xf32>
    %240 = vector.multi_reduction <add>, %235, %cst_88 [1] : vector<8x32xf32> to vector<8xf32>
    %241 = vector.shape_cast %240 : vector<8xf32> to vector<8x1xf32>
    %cst_89 = arith.constant 3.200000e+01 : f32
    %242 = vector.broadcast %cst_89 : f32 to vector<8x1xf32>
    %243 = arith.divf %241, %242 : vector<8x1xf32>
    %244 = vector.broadcast %243 : vector<8x1xf32> to vector<8x32xf32>
    %245 = arith.subf %235, %244 : vector<8x32xf32>
    %246 = arith.mulf %245, %245 : vector<8x32xf32>
    %cst_90 = arith.constant dense<0.000000e+00> : vector<8xf32>
    %247 = vector.multi_reduction <add>, %246, %cst_90 [1] : vector<8x32xf32> to vector<8xf32>
    %248 = vector.shape_cast %247 : vector<8xf32> to vector<8x1xf32>
    %cst_91 = arith.constant 3.200000e+01 : f32
    %249 = vector.broadcast %cst_91 : f32 to vector<8x1xf32>
    %250 = arith.divf %248, %249 : vector<8x1xf32>
    %251 = vector.broadcast %243 : vector<8x1xf32> to vector<8x32xf32>
    %252 = arith.subf %235, %251 : vector<8x32xf32>
    %cst_92 = arith.constant 9.99999974E-6 : f32
    %253 = vector.broadcast %cst_92 : f32 to vector<8x1xf32>
    %254 = arith.addf %250, %253 : vector<8x1xf32>
    %255 = math.rsqrt %254 : vector<8x1xf32>
    %256 = vector.broadcast %255 : vector<8x1xf32> to vector<8x32xf32>
    %257 = arith.mulf %252, %256 : vector<8x32xf32>
    %258 = vector.broadcast %237 : vector<1x32xf32> to vector<8x32xf32>
    %259 = arith.mulf %257, %258 : vector<8x32xf32>
    %260 = vector.broadcast %239 : vector<1x32xf32> to vector<8x32xf32>
    %261 = arith.addf %259, %260 : vector<8x32xf32>
    %262 = arith.truncf %261 : vector<8x32xf32> to vector<8x32xbf16>
    %c1_93 = arith.constant 1 : index
    %c0_94 = arith.constant 0 : index
    %c0_95 = arith.constant 0 : index
    %263 = vector.load %arg9[%c1_93, %c0_94, %c0_95] : memref<4x32x128xbf16, #tpu.memory_space<vmem>>, vector<1x32x128xbf16>
    %264 = vector.shape_cast %263 : vector<1x32x128xbf16> to vector<32x128xbf16>
    %cst_96 = arith.constant dense<0.000000e+00> : vector<8x128xf32>
    %265 = tpu.matmul %262, %264, %cst_96 {dimension_numbers = #tpu.dot_dimension_numbers<[1], [0], [0], [1], [0, 0, 1, 1], [], []>} : vector<8x32xbf16>, vector<32x128xbf16>, vector<8x128xf32> -> vector<8x128xf32>
    %c1_97 = arith.constant 1 : index
    %c0_98 = arith.constant 0 : index
    %c0_99 = arith.constant 0 : index
    %266 = vector.load %arg10[%c1_97, %c0_98, %c0_99] : memref<4x1x128xf32, #tpu.memory_space<vmem>>, vector<1x1x128xf32>
    %267 = vector.shape_cast %266 : vector<1x1x128xf32> to vector<1x128xf32>
    %268 = vector.broadcast %267 : vector<1x128xf32> to vector<8x128xf32>
    %269 = arith.addf %265, %268 : vector<8x128xf32>
    %cst_100 = arith.constant 0.000000e+00 : f32
    %270 = vector.broadcast %cst_100 : f32 to vector<8x128xf32>
    %271 = arith.maximumf %269, %270 : vector<8x128xf32>
    %272 = arith.truncf %271 : vector<8x128xf32> to vector<8x128xbf16>
    %c1_101 = arith.constant 1 : index
    %c0_102 = arith.constant 0 : index
    %c0_103 = arith.constant 0 : index
    %273 = vector.load %arg11[%c1_101, %c0_102, %c0_103] : memref<4x128x32xbf16, #tpu.memory_space<vmem>>, vector<1x128x32xbf16>
    %274 = vector.shape_cast %273 : vector<1x128x32xbf16> to vector<128x32xbf16>
    %cst_104 = arith.constant dense<0.000000e+00> : vector<8x32xf32>
    %275 = tpu.matmul %272, %274, %cst_104 {dimension_numbers = #tpu.dot_dimension_numbers<[1], [0], [0], [1], [0, 0, 1, 1], [], []>} : vector<8x128xbf16>, vector<128x32xbf16>, vector<8x32xf32> -> vector<8x32xf32>
    %c1_105 = arith.constant 1 : index
    %c0_106 = arith.constant 0 : index
    %c0_107 = arith.constant 0 : index
    %276 = vector.load %arg12[%c1_105, %c0_106, %c0_107] : memref<4x1x32xf32, #tpu.memory_space<vmem>>, vector<1x1x32xf32>
    %277 = vector.shape_cast %276 : vector<1x1x32xf32> to vector<1x32xf32>
    %278 = vector.broadcast %277 : vector<1x32xf32> to vector<8x32xf32>
    %279 = arith.addf %275, %278 : vector<8x32xf32>
    %280 = arith.addf %261, %279 : vector<8x32xf32>
    %c1_108 = arith.constant 1 : index
    %c0_109 = arith.constant 0 : index
    %c0_110 = arith.constant 0 : index
    %281 = vector.load %arg13[%c1_108, %c0_109, %c0_110] : memref<4x1x32xf32, #tpu.memory_space<vmem>>, vector<1x1x32xf32>
    %282 = vector.shape_cast %281 : vector<1x1x32xf32> to vector<1x32xf32>
    %c1_111 = arith.constant 1 : index
    %c0_112 = arith.constant 0 : index
    %c0_113 = arith.constant 0 : index
    %283 = vector.load %arg14[%c1_111, %c0_112, %c0_113] : memref<4x1x32xf32, #tpu.memory_space<vmem>>, vector<1x1x32xf32>
    %284 = vector.shape_cast %283 : vector<1x1x32xf32> to vector<1x32xf32>
    %cst_114 = arith.constant dense<0.000000e+00> : vector<8xf32>
    %285 = vector.multi_reduction <add>, %280, %cst_114 [1] : vector<8x32xf32> to vector<8xf32>
    %286 = vector.shape_cast %285 : vector<8xf32> to vector<8x1xf32>
    %cst_115 = arith.constant 3.200000e+01 : f32
    %287 = vector.broadcast %cst_115 : f32 to vector<8x1xf32>
    %288 = arith.divf %286, %287 : vector<8x1xf32>
    %289 = vector.broadcast %288 : vector<8x1xf32> to vector<8x32xf32>
    %290 = arith.subf %280, %289 : vector<8x32xf32>
    %291 = arith.mulf %290, %290 : vector<8x32xf32>
    %cst_116 = arith.constant dense<0.000000e+00> : vector<8xf32>
    %292 = vector.multi_reduction <add>, %291, %cst_116 [1] : vector<8x32xf32> to vector<8xf32>
    %293 = vector.shape_cast %292 : vector<8xf32> to vector<8x1xf32>
    %cst_117 = arith.constant 3.200000e+01 : f32
    %294 = vector.broadcast %cst_117 : f32 to vector<8x1xf32>
    %295 = arith.divf %293, %294 : vector<8x1xf32>
    %296 = vector.broadcast %288 : vector<8x1xf32> to vector<8x32xf32>
    %297 = arith.subf %280, %296 : vector<8x32xf32>
    %cst_118 = arith.constant 9.99999974E-6 : f32
    %298 = vector.broadcast %cst_118 : f32 to vector<8x1xf32>
    %299 = arith.addf %295, %298 : vector<8x1xf32>
    %300 = math.rsqrt %299 : vector<8x1xf32>
    %301 = vector.broadcast %300 : vector<8x1xf32> to vector<8x32xf32>
    %302 = arith.mulf %297, %301 : vector<8x32xf32>
    %303 = vector.broadcast %282 : vector<1x32xf32> to vector<8x32xf32>
    %304 = arith.mulf %302, %303 : vector<8x32xf32>
    %305 = vector.broadcast %284 : vector<1x32xf32> to vector<8x32xf32>
    %306 = arith.addf %304, %305 : vector<8x32xf32>
    %307 = arith.truncf %306 : vector<8x32xf32> to vector<8x32xbf16>
    %c2 = arith.constant 2 : index
    %c0_119 = arith.constant 0 : index
    %c0_120 = arith.constant 0 : index
    %308 = vector.load %arg3[%c2, %c0_119, %c0_120] : memref<4x32x96xbf16, #tpu.memory_space<vmem>>, vector<1x32x96xbf16>
    %309 = vector.shape_cast %308 : vector<1x32x96xbf16> to vector<32x96xbf16>
    %cst_121 = arith.constant dense<0.000000e+00> : vector<8x96xf32>
    %310 = tpu.matmul %307, %309, %cst_121 {dimension_numbers = #tpu.dot_dimension_numbers<[1], [0], [0], [1], [0, 0, 1, 1], [], []>} : vector<8x32xbf16>, vector<32x96xbf16>, vector<8x96xf32> -> vector<8x96xf32>
    %c2_122 = arith.constant 2 : index
    %c0_123 = arith.constant 0 : index
    %c0_124 = arith.constant 0 : index
    %311 = vector.load %arg4[%c2_122, %c0_123, %c0_124] : memref<4x1x96xf32, #tpu.memory_space<vmem>>, vector<1x1x96xf32>
    %312 = vector.shape_cast %311 : vector<1x1x96xf32> to vector<1x96xf32>
    %313 = vector.broadcast %312 : vector<1x96xf32> to vector<8x96xf32>
    %314 = arith.addf %310, %313 : vector<8x96xf32>
    %315 = vector.extract_strided_slice %314 {offsets = [0, 0], sizes = [8, 32], strides = [1, 1]} : vector<8x96xf32> to vector<8x32xf32>
    %cst_125 = arith.constant 0.353553385 : f32
    %316 = vector.broadcast %cst_125 : f32 to vector<8x32xf32>
    %317 = arith.mulf %315, %316 : vector<8x32xf32>
    %318 = arith.truncf %317 : vector<8x32xf32> to vector<8x32xbf16>
    %319 = vector.extract_strided_slice %314 {offsets = [0, 32], sizes = [8, 32], strides = [1, 1]} : vector<8x96xf32> to vector<8x32xf32>
    %320 = arith.truncf %319 : vector<8x32xf32> to vector<8x32xbf16>
    %321 = vector.extract_strided_slice %314 {offsets = [0, 64], sizes = [8, 32], strides = [1, 1]} : vector<8x96xf32> to vector<8x32xf32>
    %322 = arith.truncf %321 : vector<8x32xf32> to vector<8x32xbf16>
    %323 = vector.extract_strided_slice %318 {offsets = [0, 0], sizes = [8, 8], strides = [1, 1]} : vector<8x32xbf16> to vector<8x8xbf16>
    %324 = vector.extract_strided_slice %318 {offsets = [0, 8], sizes = [8, 8], strides = [1, 1]} : vector<8x32xbf16> to vector<8x8xbf16>
    %325 = vector.extract_strided_slice %318 {offsets = [0, 16], sizes = [8, 8], strides = [1, 1]} : vector<8x32xbf16> to vector<8x8xbf16>
    %326 = vector.extract_strided_slice %318 {offsets = [0, 24], sizes = [8, 8], strides = [1, 1]} : vector<8x32xbf16> to vector<8x8xbf16>
    %327 = vector.shape_cast %323 : vector<8x8xbf16> to vector<1x8x8xbf16>
    %328 = vector.shape_cast %324 : vector<8x8xbf16> to vector<1x8x8xbf16>
    %329 = vector.shape_cast %325 : vector<8x8xbf16> to vector<1x8x8xbf16>
    %330 = vector.shape_cast %326 : vector<8x8xbf16> to vector<1x8x8xbf16>
    %331 = tpu.concatenate %327, %328, %329, %330 in 0 : vector<1x8x8xbf16>, vector<1x8x8xbf16>, vector<1x8x8xbf16>, vector<1x8x8xbf16> -> vector<4x8x8xbf16>
    %332 = vector.extract_strided_slice %320 {offsets = [0, 0], sizes = [8, 8], strides = [1, 1]} : vector<8x32xbf16> to vector<8x8xbf16>
    %333 = vector.extract_strided_slice %320 {offsets = [0, 8], sizes = [8, 8], strides = [1, 1]} : vector<8x32xbf16> to vector<8x8xbf16>
    %334 = vector.extract_strided_slice %320 {offsets = [0, 16], sizes = [8, 8], strides = [1, 1]} : vector<8x32xbf16> to vector<8x8xbf16>
    %335 = vector.extract_strided_slice %320 {offsets = [0, 24], sizes = [8, 8], strides = [1, 1]} : vector<8x32xbf16> to vector<8x8xbf16>
    %336 = vector.shape_cast %332 : vector<8x8xbf16> to vector<1x8x8xbf16>
    %337 = vector.shape_cast %333 : vector<8x8xbf16> to vector<1x8x8xbf16>
    %338 = vector.shape_cast %334 : vector<8x8xbf16> to vector<1x8x8xbf16>
    %339 = vector.shape_cast %335 : vector<8x8xbf16> to vector<1x8x8xbf16>
    %340 = tpu.concatenate %336, %337, %338, %339 in 0 : vector<1x8x8xbf16>, vector<1x8x8xbf16>, vector<1x8x8xbf16>, vector<1x8x8xbf16> -> vector<4x8x8xbf16>
    %341 = vector.extract_strided_slice %322 {offsets = [0, 0], sizes = [8, 8], strides = [1, 1]} : vector<8x32xbf16> to vector<8x8xbf16>
    %342 = vector.extract_strided_slice %322 {offsets = [0, 8], sizes = [8, 8], strides = [1, 1]} : vector<8x32xbf16> to vector<8x8xbf16>
    %343 = vector.extract_strided_slice %322 {offsets = [0, 16], sizes = [8, 8], strides = [1, 1]} : vector<8x32xbf16> to vector<8x8xbf16>
    %344 = vector.extract_strided_slice %322 {offsets = [0, 24], sizes = [8, 8], strides = [1, 1]} : vector<8x32xbf16> to vector<8x8xbf16>
    %345 = vector.shape_cast %341 : vector<8x8xbf16> to vector<1x8x8xbf16>
    %346 = vector.shape_cast %342 : vector<8x8xbf16> to vector<1x8x8xbf16>
    %347 = vector.shape_cast %343 : vector<8x8xbf16> to vector<1x8x8xbf16>
    %348 = vector.shape_cast %344 : vector<8x8xbf16> to vector<1x8x8xbf16>
    %349 = tpu.concatenate %345, %346, %347, %348 in 0 : vector<1x8x8xbf16>, vector<1x8x8xbf16>, vector<1x8x8xbf16>, vector<1x8x8xbf16> -> vector<4x8x8xbf16>
    "tpu.trace_start"() <{level = 10 : i32, message = "hqd,hkd->hqk"}> : () -> ()
    %cst_126 = arith.constant dense<0.000000e+00> : vector<4x8x8xf32>
    %350 = tpu.matmul %331, %340, %cst_126 {dimension_numbers = #tpu.dot_dimension_numbers<[2], [2], [1], [1], [0, 0, 0, 1, 1, 1], [0], [0]>} : vector<4x8x8xbf16>, vector<4x8x8xbf16>, vector<4x8x8xf32> -> vector<4x8x8xf32>
    "tpu.trace_stop"() : () -> ()
    %351 = vector.broadcast %8 : vector<1x1x8xf32> to vector<4x8x8xf32>
    %352 = arith.addf %350, %351 : vector<4x8x8xf32>
    %cst_127 = arith.constant dense<0xFF800000> : vector<4x8xf32>
    %353 = vector.multi_reduction <maximumf>, %352, %cst_127 [2] : vector<4x8x8xf32> to vector<4x8xf32>
    %354 = vector.shape_cast %353 : vector<4x8xf32> to vector<4x8x1xf32>
    %355 = vector.broadcast %354 : vector<4x8x1xf32> to vector<4x8x8xf32>
    %356 = arith.subf %352, %355 : vector<4x8x8xf32>
    %357 = math.exp %356 : vector<4x8x8xf32>
    %cst_128 = arith.constant dense<0.000000e+00> : vector<4x8xf32>
    %358 = vector.multi_reduction <add>, %357, %cst_128 [2] : vector<4x8x8xf32> to vector<4x8xf32>
    %359 = vector.shape_cast %358 : vector<4x8xf32> to vector<4x8x1xf32>
    %cst_129 = arith.constant 9.99999971E-10 : f32
    %360 = vector.broadcast %cst_129 : f32 to vector<4x8x1xf32>
    %361 = arith.maximumf %359, %360 : vector<4x8x1xf32>
    %362 = tpu.reciprocal %361 {approx = true} : vector<4x8x1xf32> -> vector<4x8x1xf32>
    %363 = vector.broadcast %362 : vector<4x8x1xf32> to vector<4x8x8xf32>
    %364 = arith.mulf %357, %363 : vector<4x8x8xf32>
    %365 = arith.truncf %364 : vector<4x8x8xf32> to vector<4x8x8xbf16>
    "tpu.trace_start"() <{level = 10 : i32, message = "hqk,hkd->hqd"}> : () -> ()
    %cst_130 = arith.constant dense<0.000000e+00> : vector<4x8x8xf32>
    %366 = tpu.matmul %365, %349, %cst_130 {dimension_numbers = #tpu.dot_dimension_numbers<[2], [1], [1], [2], [0, 0, 0, 1, 1, 2], [0], [0]>} : vector<4x8x8xbf16>, vector<4x8x8xbf16>, vector<4x8x8xf32> -> vector<4x8x8xf32>
    "tpu.trace_stop"() : () -> ()
    %367 = vector.extract_strided_slice %366 {offsets = [0, 0, 0], sizes = [1, 8, 8], strides = [1, 1, 1]} : vector<4x8x8xf32> to vector<1x8x8xf32>
    %368 = vector.shape_cast %367 : vector<1x8x8xf32> to vector<8x8xf32>
    %369 = vector.extract_strided_slice %366 {offsets = [1, 0, 0], sizes = [1, 8, 8], strides = [1, 1, 1]} : vector<4x8x8xf32> to vector<1x8x8xf32>
    %370 = vector.shape_cast %369 : vector<1x8x8xf32> to vector<8x8xf32>
    %371 = vector.extract_strided_slice %366 {offsets = [2, 0, 0], sizes = [1, 8, 8], strides = [1, 1, 1]} : vector<4x8x8xf32> to vector<1x8x8xf32>
    %372 = vector.shape_cast %371 : vector<1x8x8xf32> to vector<8x8xf32>
    %373 = vector.extract_strided_slice %366 {offsets = [3, 0, 0], sizes = [1, 8, 8], strides = [1, 1, 1]} : vector<4x8x8xf32> to vector<1x8x8xf32>
    %374 = vector.shape_cast %373 : vector<1x8x8xf32> to vector<8x8xf32>
    %375 = tpu.concatenate %368, %370, %372, %374 in 1 : vector<8x8xf32>, vector<8x8xf32>, vector<8x8xf32>, vector<8x8xf32> -> vector<8x32xf32>
    %376 = arith.truncf %375 : vector<8x32xf32> to vector<8x32xbf16>
    %c2_131 = arith.constant 2 : index
    %c0_132 = arith.constant 0 : index
    %c0_133 = arith.constant 0 : index
    %377 = vector.load %arg5[%c2_131, %c0_132, %c0_133] : memref<4x32x32xbf16, #tpu.memory_space<vmem>>, vector<1x32x32xbf16>
    %378 = vector.shape_cast %377 : vector<1x32x32xbf16> to vector<32x32xbf16>
    %cst_134 = arith.constant dense<0.000000e+00> : vector<8x32xf32>
    %379 = tpu.matmul %376, %378, %cst_134 {dimension_numbers = #tpu.dot_dimension_numbers<[1], [0], [0], [1], [0, 0, 1, 1], [], []>} : vector<8x32xbf16>, vector<32x32xbf16>, vector<8x32xf32> -> vector<8x32xf32>
    %c2_135 = arith.constant 2 : index
    %c0_136 = arith.constant 0 : index
    %c0_137 = arith.constant 0 : index
    %380 = vector.load %arg6[%c2_135, %c0_136, %c0_137] : memref<4x1x32xf32, #tpu.memory_space<vmem>>, vector<1x1x32xf32>
    %381 = vector.shape_cast %380 : vector<1x1x32xf32> to vector<1x32xf32>
    %382 = vector.broadcast %381 : vector<1x32xf32> to vector<8x32xf32>
    %383 = arith.addf %379, %382 : vector<8x32xf32>
    %384 = arith.addf %306, %383 : vector<8x32xf32>
    %c2_138 = arith.constant 2 : index
    %c0_139 = arith.constant 0 : index
    %c0_140 = arith.constant 0 : index
    %385 = vector.load %arg7[%c2_138, %c0_139, %c0_140] : memref<4x1x32xf32, #tpu.memory_space<vmem>>, vector<1x1x32xf32>
    %386 = vector.shape_cast %385 : vector<1x1x32xf32> to vector<1x32xf32>
    %c2_141 = arith.constant 2 : index
    %c0_142 = arith.constant 0 : index
    %c0_143 = arith.constant 0 : index
    %387 = vector.load %arg8[%c2_141, %c0_142, %c0_143] : memref<4x1x32xf32, #tpu.memory_space<vmem>>, vector<1x1x32xf32>
    %388 = vector.shape_cast %387 : vector<1x1x32xf32> to vector<1x32xf32>
    %cst_144 = arith.constant dense<0.000000e+00> : vector<8xf32>
    %389 = vector.multi_reduction <add>, %384, %cst_144 [1] : vector<8x32xf32> to vector<8xf32>
    %390 = vector.shape_cast %389 : vector<8xf32> to vector<8x1xf32>
    %cst_145 = arith.constant 3.200000e+01 : f32
    %391 = vector.broadcast %cst_145 : f32 to vector<8x1xf32>
    %392 = arith.divf %390, %391 : vector<8x1xf32>
    %393 = vector.broadcast %392 : vector<8x1xf32> to vector<8x32xf32>
    %394 = arith.subf %384, %393 : vector<8x32xf32>
    %395 = arith.mulf %394, %394 : vector<8x32xf32>
    %cst_146 = arith.constant dense<0.000000e+00> : vector<8xf32>
    %396 = vector.multi_reduction <add>, %395, %cst_146 [1] : vector<8x32xf32> to vector<8xf32>
    %397 = vector.shape_cast %396 : vector<8xf32> to vector<8x1xf32>
    %cst_147 = arith.constant 3.200000e+01 : f32
    %398 = vector.broadcast %cst_147 : f32 to vector<8x1xf32>
    %399 = arith.divf %397, %398 : vector<8x1xf32>
    %400 = vector.broadcast %392 : vector<8x1xf32> to vector<8x32xf32>
    %401 = arith.subf %384, %400 : vector<8x32xf32>
    %cst_148 = arith.constant 9.99999974E-6 : f32
    %402 = vector.broadcast %cst_148 : f32 to vector<8x1xf32>
    %403 = arith.addf %399, %402 : vector<8x1xf32>
    %404 = math.rsqrt %403 : vector<8x1xf32>
    %405 = vector.broadcast %404 : vector<8x1xf32> to vector<8x32xf32>
    %406 = arith.mulf %401, %405 : vector<8x32xf32>
    %407 = vector.broadcast %386 : vector<1x32xf32> to vector<8x32xf32>
    %408 = arith.mulf %406, %407 : vector<8x32xf32>
    %409 = vector.broadcast %388 : vector<1x32xf32> to vector<8x32xf32>
    %410 = arith.addf %408, %409 : vector<8x32xf32>
    %411 = arith.truncf %410 : vector<8x32xf32> to vector<8x32xbf16>
    %c2_149 = arith.constant 2 : index
    %c0_150 = arith.constant 0 : index
    %c0_151 = arith.constant 0 : index
    %412 = vector.load %arg9[%c2_149, %c0_150, %c0_151] : memref<4x32x128xbf16, #tpu.memory_space<vmem>>, vector<1x32x128xbf16>
    %413 = vector.shape_cast %412 : vector<1x32x128xbf16> to vector<32x128xbf16>
    %cst_152 = arith.constant dense<0.000000e+00> : vector<8x128xf32>
    %414 = tpu.matmul %411, %413, %cst_152 {dimension_numbers = #tpu.dot_dimension_numbers<[1], [0], [0], [1], [0, 0, 1, 1], [], []>} : vector<8x32xbf16>, vector<32x128xbf16>, vector<8x128xf32> -> vector<8x128xf32>
    %c2_153 = arith.constant 2 : index
    %c0_154 = arith.constant 0 : index
    %c0_155 = arith.constant 0 : index
    %415 = vector.load %arg10[%c2_153, %c0_154, %c0_155] : memref<4x1x128xf32, #tpu.memory_space<vmem>>, vector<1x1x128xf32>
    %416 = vector.shape_cast %415 : vector<1x1x128xf32> to vector<1x128xf32>
    %417 = vector.broadcast %416 : vector<1x128xf32> to vector<8x128xf32>
    %418 = arith.addf %414, %417 : vector<8x128xf32>
    %cst_156 = arith.constant 0.000000e+00 : f32
    %419 = vector.broadcast %cst_156 : f32 to vector<8x128xf32>
    %420 = arith.maximumf %418, %419 : vector<8x128xf32>
    %421 = arith.truncf %420 : vector<8x128xf32> to vector<8x128xbf16>
    %c2_157 = arith.constant 2 : index
    %c0_158 = arith.constant 0 : index
    %c0_159 = arith.constant 0 : index
    %422 = vector.load %arg11[%c2_157, %c0_158, %c0_159] : memref<4x128x32xbf16, #tpu.memory_space<vmem>>, vector<1x128x32xbf16>
    %423 = vector.shape_cast %422 : vector<1x128x32xbf16> to vector<128x32xbf16>
    %cst_160 = arith.constant dense<0.000000e+00> : vector<8x32xf32>
    %424 = tpu.matmul %421, %423, %cst_160 {dimension_numbers = #tpu.dot_dimension_numbers<[1], [0], [0], [1], [0, 0, 1, 1], [], []>} : vector<8x128xbf16>, vector<128x32xbf16>, vector<8x32xf32> -> vector<8x32xf32>
    %c2_161 = arith.constant 2 : index
    %c0_162 = arith.constant 0 : index
    %c0_163 = arith.constant 0 : index
    %425 = vector.load %arg12[%c2_161, %c0_162, %c0_163] : memref<4x1x32xf32, #tpu.memory_space<vmem>>, vector<1x1x32xf32>
    %426 = vector.shape_cast %425 : vector<1x1x32xf32> to vector<1x32xf32>
    %427 = vector.broadcast %426 : vector<1x32xf32> to vector<8x32xf32>
    %428 = arith.addf %424, %427 : vector<8x32xf32>
    %429 = arith.addf %410, %428 : vector<8x32xf32>
    %c2_164 = arith.constant 2 : index
    %c0_165 = arith.constant 0 : index
    %c0_166 = arith.constant 0 : index
    %430 = vector.load %arg13[%c2_164, %c0_165, %c0_166] : memref<4x1x32xf32, #tpu.memory_space<vmem>>, vector<1x1x32xf32>
    %431 = vector.shape_cast %430 : vector<1x1x32xf32> to vector<1x32xf32>
    %c2_167 = arith.constant 2 : index
    %c0_168 = arith.constant 0 : index
    %c0_169 = arith.constant 0 : index
    %432 = vector.load %arg14[%c2_167, %c0_168, %c0_169] : memref<4x1x32xf32, #tpu.memory_space<vmem>>, vector<1x1x32xf32>
    %433 = vector.shape_cast %432 : vector<1x1x32xf32> to vector<1x32xf32>
    %cst_170 = arith.constant dense<0.000000e+00> : vector<8xf32>
    %434 = vector.multi_reduction <add>, %429, %cst_170 [1] : vector<8x32xf32> to vector<8xf32>
    %435 = vector.shape_cast %434 : vector<8xf32> to vector<8x1xf32>
    %cst_171 = arith.constant 3.200000e+01 : f32
    %436 = vector.broadcast %cst_171 : f32 to vector<8x1xf32>
    %437 = arith.divf %435, %436 : vector<8x1xf32>
    %438 = vector.broadcast %437 : vector<8x1xf32> to vector<8x32xf32>
    %439 = arith.subf %429, %438 : vector<8x32xf32>
    %440 = arith.mulf %439, %439 : vector<8x32xf32>
    %cst_172 = arith.constant dense<0.000000e+00> : vector<8xf32>
    %441 = vector.multi_reduction <add>, %440, %cst_172 [1] : vector<8x32xf32> to vector<8xf32>
    %442 = vector.shape_cast %441 : vector<8xf32> to vector<8x1xf32>
    %cst_173 = arith.constant 3.200000e+01 : f32
    %443 = vector.broadcast %cst_173 : f32 to vector<8x1xf32>
    %444 = arith.divf %442, %443 : vector<8x1xf32>
    %445 = vector.broadcast %437 : vector<8x1xf32> to vector<8x32xf32>
    %446 = arith.subf %429, %445 : vector<8x32xf32>
    %cst_174 = arith.constant 9.99999974E-6 : f32
    %447 = vector.broadcast %cst_174 : f32 to vector<8x1xf32>
    %448 = arith.addf %444, %447 : vector<8x1xf32>
    %449 = math.rsqrt %448 : vector<8x1xf32>
    %450 = vector.broadcast %449 : vector<8x1xf32> to vector<8x32xf32>
    %451 = arith.mulf %446, %450 : vector<8x32xf32>
    %452 = vector.broadcast %431 : vector<1x32xf32> to vector<8x32xf32>
    %453 = arith.mulf %451, %452 : vector<8x32xf32>
    %454 = vector.broadcast %433 : vector<1x32xf32> to vector<8x32xf32>
    %455 = arith.addf %453, %454 : vector<8x32xf32>
    %456 = arith.truncf %455 : vector<8x32xf32> to vector<8x32xbf16>
    %c3 = arith.constant 3 : index
    %c0_175 = arith.constant 0 : index
    %c0_176 = arith.constant 0 : index
    %457 = vector.load %arg3[%c3, %c0_175, %c0_176] : memref<4x32x96xbf16, #tpu.memory_space<vmem>>, vector<1x32x96xbf16>
    %458 = vector.shape_cast %457 : vector<1x32x96xbf16> to vector<32x96xbf16>
    %cst_177 = arith.constant dense<0.000000e+00> : vector<8x96xf32>
    %459 = tpu.matmul %456, %458, %cst_177 {dimension_numbers = #tpu.dot_dimension_numbers<[1], [0], [0], [1], [0, 0, 1, 1], [], []>} : vector<8x32xbf16>, vector<32x96xbf16>, vector<8x96xf32> -> vector<8x96xf32>
    %c3_178 = arith.constant 3 : index
    %c0_179 = arith.constant 0 : index
    %c0_180 = arith.constant 0 : index
    %460 = vector.load %arg4[%c3_178, %c0_179, %c0_180] : memref<4x1x96xf32, #tpu.memory_space<vmem>>, vector<1x1x96xf32>
    %461 = vector.shape_cast %460 : vector<1x1x96xf32> to vector<1x96xf32>
    %462 = vector.broadcast %461 : vector<1x96xf32> to vector<8x96xf32>
    %463 = arith.addf %459, %462 : vector<8x96xf32>
    %464 = vector.extract_strided_slice %463 {offsets = [0, 0], sizes = [8, 32], strides = [1, 1]} : vector<8x96xf32> to vector<8x32xf32>
    %cst_181 = arith.constant 0.353553385 : f32
    %465 = vector.broadcast %cst_181 : f32 to vector<8x32xf32>
    %466 = arith.mulf %464, %465 : vector<8x32xf32>
    %467 = arith.truncf %466 : vector<8x32xf32> to vector<8x32xbf16>
    %468 = vector.extract_strided_slice %463 {offsets = [0, 32], sizes = [8, 32], strides = [1, 1]} : vector<8x96xf32> to vector<8x32xf32>
    %469 = arith.truncf %468 : vector<8x32xf32> to vector<8x32xbf16>
    %470 = vector.extract_strided_slice %463 {offsets = [0, 64], sizes = [8, 32], strides = [1, 1]} : vector<8x96xf32> to vector<8x32xf32>
    %471 = arith.truncf %470 : vector<8x32xf32> to vector<8x32xbf16>
    %472 = vector.extract_strided_slice %467 {offsets = [0, 0], sizes = [8, 8], strides = [1, 1]} : vector<8x32xbf16> to vector<8x8xbf16>
    %473 = vector.extract_strided_slice %467 {offsets = [0, 8], sizes = [8, 8], strides = [1, 1]} : vector<8x32xbf16> to vector<8x8xbf16>
    %474 = vector.extract_strided_slice %467 {offsets = [0, 16], sizes = [8, 8], strides = [1, 1]} : vector<8x32xbf16> to vector<8x8xbf16>
    %475 = vector.extract_strided_slice %467 {offsets = [0, 24], sizes = [8, 8], strides = [1, 1]} : vector<8x32xbf16> to vector<8x8xbf16>
    %476 = vector.shape_cast %472 : vector<8x8xbf16> to vector<1x8x8xbf16>
    %477 = vector.shape_cast %473 : vector<8x8xbf16> to vector<1x8x8xbf16>
    %478 = vector.shape_cast %474 : vector<8x8xbf16> to vector<1x8x8xbf16>
    %479 = vector.shape_cast %475 : vector<8x8xbf16> to vector<1x8x8xbf16>
    %480 = tpu.concatenate %476, %477, %478, %479 in 0 : vector<1x8x8xbf16>, vector<1x8x8xbf16>, vector<1x8x8xbf16>, vector<1x8x8xbf16> -> vector<4x8x8xbf16>
    %481 = vector.extract_strided_slice %469 {offsets = [0, 0], sizes = [8, 8], strides = [1, 1]} : vector<8x32xbf16> to vector<8x8xbf16>
    %482 = vector.extract_strided_slice %469 {offsets = [0, 8], sizes = [8, 8], strides = [1, 1]} : vector<8x32xbf16> to vector<8x8xbf16>
    %483 = vector.extract_strided_slice %469 {offsets = [0, 16], sizes = [8, 8], strides = [1, 1]} : vector<8x32xbf16> to vector<8x8xbf16>
    %484 = vector.extract_strided_slice %469 {offsets = [0, 24], sizes = [8, 8], strides = [1, 1]} : vector<8x32xbf16> to vector<8x8xbf16>
    %485 = vector.shape_cast %481 : vector<8x8xbf16> to vector<1x8x8xbf16>
    %486 = vector.shape_cast %482 : vector<8x8xbf16> to vector<1x8x8xbf16>
    %487 = vector.shape_cast %483 : vector<8x8xbf16> to vector<1x8x8xbf16>
    %488 = vector.shape_cast %484 : vector<8x8xbf16> to vector<1x8x8xbf16>
    %489 = tpu.concatenate %485, %486, %487, %488 in 0 : vector<1x8x8xbf16>, vector<1x8x8xbf16>, vector<1x8x8xbf16>, vector<1x8x8xbf16> -> vector<4x8x8xbf16>
    %490 = vector.extract_strided_slice %471 {offsets = [0, 0], sizes = [8, 8], strides = [1, 1]} : vector<8x32xbf16> to vector<8x8xbf16>
    %491 = vector.extract_strided_slice %471 {offsets = [0, 8], sizes = [8, 8], strides = [1, 1]} : vector<8x32xbf16> to vector<8x8xbf16>
    %492 = vector.extract_strided_slice %471 {offsets = [0, 16], sizes = [8, 8], strides = [1, 1]} : vector<8x32xbf16> to vector<8x8xbf16>
    %493 = vector.extract_strided_slice %471 {offsets = [0, 24], sizes = [8, 8], strides = [1, 1]} : vector<8x32xbf16> to vector<8x8xbf16>
    %494 = vector.shape_cast %490 : vector<8x8xbf16> to vector<1x8x8xbf16>
    %495 = vector.shape_cast %491 : vector<8x8xbf16> to vector<1x8x8xbf16>
    %496 = vector.shape_cast %492 : vector<8x8xbf16> to vector<1x8x8xbf16>
    %497 = vector.shape_cast %493 : vector<8x8xbf16> to vector<1x8x8xbf16>
    %498 = tpu.concatenate %494, %495, %496, %497 in 0 : vector<1x8x8xbf16>, vector<1x8x8xbf16>, vector<1x8x8xbf16>, vector<1x8x8xbf16> -> vector<4x8x8xbf16>
    "tpu.trace_start"() <{level = 10 : i32, message = "hqd,hkd->hqk"}> : () -> ()
    %cst_182 = arith.constant dense<0.000000e+00> : vector<4x8x8xf32>
    %499 = tpu.matmul %480, %489, %cst_182 {dimension_numbers = #tpu.dot_dimension_numbers<[2], [2], [1], [1], [0, 0, 0, 1, 1, 1], [0], [0]>} : vector<4x8x8xbf16>, vector<4x8x8xbf16>, vector<4x8x8xf32> -> vector<4x8x8xf32>
    "tpu.trace_stop"() : () -> ()
    %500 = vector.broadcast %8 : vector<1x1x8xf32> to vector<4x8x8xf32>
    %501 = arith.addf %499, %500 : vector<4x8x8xf32>
    %cst_183 = arith.constant dense<0xFF800000> : vector<4x8xf32>
    %502 = vector.multi_reduction <maximumf>, %501, %cst_183 [2] : vector<4x8x8xf32> to vector<4x8xf32>
    %503 = vector.shape_cast %502 : vector<4x8xf32> to vector<4x8x1xf32>
    %504 = vector.broadcast %503 : vector<4x8x1xf32> to vector<4x8x8xf32>
    %505 = arith.subf %501, %504 : vector<4x8x8xf32>
    %506 = math.exp %505 : vector<4x8x8xf32>
    %cst_184 = arith.constant dense<0.000000e+00> : vector<4x8xf32>
    %507 = vector.multi_reduction <add>, %506, %cst_184 [2] : vector<4x8x8xf32> to vector<4x8xf32>
    %508 = vector.shape_cast %507 : vector<4x8xf32> to vector<4x8x1xf32>
    %cst_185 = arith.constant 9.99999971E-10 : f32
    %509 = vector.broadcast %cst_185 : f32 to vector<4x8x1xf32>
    %510 = arith.maximumf %508, %509 : vector<4x8x1xf32>
    %511 = tpu.reciprocal %510 {approx = true} : vector<4x8x1xf32> -> vector<4x8x1xf32>
    %512 = vector.broadcast %511 : vector<4x8x1xf32> to vector<4x8x8xf32>
    %513 = arith.mulf %506, %512 : vector<4x8x8xf32>
    %514 = arith.truncf %513 : vector<4x8x8xf32> to vector<4x8x8xbf16>
    "tpu.trace_start"() <{level = 10 : i32, message = "hqk,hkd->hqd"}> : () -> ()
    %cst_186 = arith.constant dense<0.000000e+00> : vector<4x8x8xf32>
    %515 = tpu.matmul %514, %498, %cst_186 {dimension_numbers = #tpu.dot_dimension_numbers<[2], [1], [1], [2], [0, 0, 0, 1, 1, 2], [0], [0]>} : vector<4x8x8xbf16>, vector<4x8x8xbf16>, vector<4x8x8xf32> -> vector<4x8x8xf32>
    "tpu.trace_stop"() : () -> ()
    %516 = vector.extract_strided_slice %515 {offsets = [0, 0, 0], sizes = [1, 8, 8], strides = [1, 1, 1]} : vector<4x8x8xf32> to vector<1x8x8xf32>
    %517 = vector.shape_cast %516 : vector<1x8x8xf32> to vector<8x8xf32>
    %518 = vector.extract_strided_slice %515 {offsets = [1, 0, 0], sizes = [1, 8, 8], strides = [1, 1, 1]} : vector<4x8x8xf32> to vector<1x8x8xf32>
    %519 = vector.shape_cast %518 : vector<1x8x8xf32> to vector<8x8xf32>
    %520 = vector.extract_strided_slice %515 {offsets = [2, 0, 0], sizes = [1, 8, 8], strides = [1, 1, 1]} : vector<4x8x8xf32> to vector<1x8x8xf32>
    %521 = vector.shape_cast %520 : vector<1x8x8xf32> to vector<8x8xf32>
    %522 = vector.extract_strided_slice %515 {offsets = [3, 0, 0], sizes = [1, 8, 8], strides = [1, 1, 1]} : vector<4x8x8xf32> to vector<1x8x8xf32>
    %523 = vector.shape_cast %522 : vector<1x8x8xf32> to vector<8x8xf32>
    %524 = tpu.concatenate %517, %519, %521, %523 in 1 : vector<8x8xf32>, vector<8x8xf32>, vector<8x8xf32>, vector<8x8xf32> -> vector<8x32xf32>
    %525 = arith.truncf %524 : vector<8x32xf32> to vector<8x32xbf16>
    %c3_187 = arith.constant 3 : index
    %c0_188 = arith.constant 0 : index
    %c0_189 = arith.constant 0 : index
    %526 = vector.load %arg5[%c3_187, %c0_188, %c0_189] : memref<4x32x32xbf16, #tpu.memory_space<vmem>>, vector<1x32x32xbf16>
    %527 = vector.shape_cast %526 : vector<1x32x32xbf16> to vector<32x32xbf16>
    %cst_190 = arith.constant dense<0.000000e+00> : vector<8x32xf32>
    %528 = tpu.matmul %525, %527, %cst_190 {dimension_numbers = #tpu.dot_dimension_numbers<[1], [0], [0], [1], [0, 0, 1, 1], [], []>} : vector<8x32xbf16>, vector<32x32xbf16>, vector<8x32xf32> -> vector<8x32xf32>
    %c3_191 = arith.constant 3 : index
    %c0_192 = arith.constant 0 : index
    %c0_193 = arith.constant 0 : index
    %529 = vector.load %arg6[%c3_191, %c0_192, %c0_193] : memref<4x1x32xf32, #tpu.memory_space<vmem>>, vector<1x1x32xf32>
    %530 = vector.shape_cast %529 : vector<1x1x32xf32> to vector<1x32xf32>
    %531 = vector.broadcast %530 : vector<1x32xf32> to vector<8x32xf32>
    %532 = arith.addf %528, %531 : vector<8x32xf32>
    %533 = arith.addf %455, %532 : vector<8x32xf32>
    %c3_194 = arith.constant 3 : index
    %c0_195 = arith.constant 0 : index
    %c0_196 = arith.constant 0 : index
    %534 = vector.load %arg7[%c3_194, %c0_195, %c0_196] : memref<4x1x32xf32, #tpu.memory_space<vmem>>, vector<1x1x32xf32>
    %535 = vector.shape_cast %534 : vector<1x1x32xf32> to vector<1x32xf32>
    %c3_197 = arith.constant 3 : index
    %c0_198 = arith.constant 0 : index
    %c0_199 = arith.constant 0 : index
    %536 = vector.load %arg8[%c3_197, %c0_198, %c0_199] : memref<4x1x32xf32, #tpu.memory_space<vmem>>, vector<1x1x32xf32>
    %537 = vector.shape_cast %536 : vector<1x1x32xf32> to vector<1x32xf32>
    %cst_200 = arith.constant dense<0.000000e+00> : vector<8xf32>
    %538 = vector.multi_reduction <add>, %533, %cst_200 [1] : vector<8x32xf32> to vector<8xf32>
    %539 = vector.shape_cast %538 : vector<8xf32> to vector<8x1xf32>
    %cst_201 = arith.constant 3.200000e+01 : f32
    %540 = vector.broadcast %cst_201 : f32 to vector<8x1xf32>
    %541 = arith.divf %539, %540 : vector<8x1xf32>
    %542 = vector.broadcast %541 : vector<8x1xf32> to vector<8x32xf32>
    %543 = arith.subf %533, %542 : vector<8x32xf32>
    %544 = arith.mulf %543, %543 : vector<8x32xf32>
    %cst_202 = arith.constant dense<0.000000e+00> : vector<8xf32>
    %545 = vector.multi_reduction <add>, %544, %cst_202 [1] : vector<8x32xf32> to vector<8xf32>
    %546 = vector.shape_cast %545 : vector<8xf32> to vector<8x1xf32>
    %cst_203 = arith.constant 3.200000e+01 : f32
    %547 = vector.broadcast %cst_203 : f32 to vector<8x1xf32>
    %548 = arith.divf %546, %547 : vector<8x1xf32>
    %549 = vector.broadcast %541 : vector<8x1xf32> to vector<8x32xf32>
    %550 = arith.subf %533, %549 : vector<8x32xf32>
    %cst_204 = arith.constant 9.99999974E-6 : f32
    %551 = vector.broadcast %cst_204 : f32 to vector<8x1xf32>
    %552 = arith.addf %548, %551 : vector<8x1xf32>
    %553 = math.rsqrt %552 : vector<8x1xf32>
    %554 = vector.broadcast %553 : vector<8x1xf32> to vector<8x32xf32>
    %555 = arith.mulf %550, %554 : vector<8x32xf32>
    %556 = vector.broadcast %535 : vector<1x32xf32> to vector<8x32xf32>
    %557 = arith.mulf %555, %556 : vector<8x32xf32>
    %558 = vector.broadcast %537 : vector<1x32xf32> to vector<8x32xf32>
    %559 = arith.addf %557, %558 : vector<8x32xf32>
    %560 = arith.truncf %559 : vector<8x32xf32> to vector<8x32xbf16>
    %c3_205 = arith.constant 3 : index
    %c0_206 = arith.constant 0 : index
    %c0_207 = arith.constant 0 : index
    %561 = vector.load %arg9[%c3_205, %c0_206, %c0_207] : memref<4x32x128xbf16, #tpu.memory_space<vmem>>, vector<1x32x128xbf16>
    %562 = vector.shape_cast %561 : vector<1x32x128xbf16> to vector<32x128xbf16>
    %cst_208 = arith.constant dense<0.000000e+00> : vector<8x128xf32>
    %563 = tpu.matmul %560, %562, %cst_208 {dimension_numbers = #tpu.dot_dimension_numbers<[1], [0], [0], [1], [0, 0, 1, 1], [], []>} : vector<8x32xbf16>, vector<32x128xbf16>, vector<8x128xf32> -> vector<8x128xf32>
    %c3_209 = arith.constant 3 : index
    %c0_210 = arith.constant 0 : index
    %c0_211 = arith.constant 0 : index
    %564 = vector.load %arg10[%c3_209, %c0_210, %c0_211] : memref<4x1x128xf32, #tpu.memory_space<vmem>>, vector<1x1x128xf32>
    %565 = vector.shape_cast %564 : vector<1x1x128xf32> to vector<1x128xf32>
    %566 = vector.broadcast %565 : vector<1x128xf32> to vector<8x128xf32>
    %567 = arith.addf %563, %566 : vector<8x128xf32>
    %cst_212 = arith.constant 0.000000e+00 : f32
    %568 = vector.broadcast %cst_212 : f32 to vector<8x128xf32>
    %569 = arith.maximumf %567, %568 : vector<8x128xf32>
    %570 = arith.truncf %569 : vector<8x128xf32> to vector<8x128xbf16>
    %c3_213 = arith.constant 3 : index
    %c0_214 = arith.constant 0 : index
    %c0_215 = arith.constant 0 : index
    %571 = vector.load %arg11[%c3_213, %c0_214, %c0_215] : memref<4x128x32xbf16, #tpu.memory_space<vmem>>, vector<1x128x32xbf16>
    %572 = vector.shape_cast %571 : vector<1x128x32xbf16> to vector<128x32xbf16>
    %cst_216 = arith.constant dense<0.000000e+00> : vector<8x32xf32>
    %573 = tpu.matmul %570, %572, %cst_216 {dimension_numbers = #tpu.dot_dimension_numbers<[1], [0], [0], [1], [0, 0, 1, 1], [], []>} : vector<8x128xbf16>, vector<128x32xbf16>, vector<8x32xf32> -> vector<8x32xf32>
    %c3_217 = arith.constant 3 : index
    %c0_218 = arith.constant 0 : index
    %c0_219 = arith.constant 0 : index
    %574 = vector.load %arg12[%c3_217, %c0_218, %c0_219] : memref<4x1x32xf32, #tpu.memory_space<vmem>>, vector<1x1x32xf32>
    %575 = vector.shape_cast %574 : vector<1x1x32xf32> to vector<1x32xf32>
    %576 = vector.broadcast %575 : vector<1x32xf32> to vector<8x32xf32>
    %577 = arith.addf %573, %576 : vector<8x32xf32>
    %578 = arith.addf %559, %577 : vector<8x32xf32>
    %c3_220 = arith.constant 3 : index
    %c0_221 = arith.constant 0 : index
    %c0_222 = arith.constant 0 : index
    %579 = vector.load %arg13[%c3_220, %c0_221, %c0_222] : memref<4x1x32xf32, #tpu.memory_space<vmem>>, vector<1x1x32xf32>
    %580 = vector.shape_cast %579 : vector<1x1x32xf32> to vector<1x32xf32>
    %c3_223 = arith.constant 3 : index
    %c0_224 = arith.constant 0 : index
    %c0_225 = arith.constant 0 : index
    %581 = vector.load %arg14[%c3_223, %c0_224, %c0_225] : memref<4x1x32xf32, #tpu.memory_space<vmem>>, vector<1x1x32xf32>
    %582 = vector.shape_cast %581 : vector<1x1x32xf32> to vector<1x32xf32>
    %cst_226 = arith.constant dense<0.000000e+00> : vector<8xf32>
    %583 = vector.multi_reduction <add>, %578, %cst_226 [1] : vector<8x32xf32> to vector<8xf32>
    %584 = vector.shape_cast %583 : vector<8xf32> to vector<8x1xf32>
    %cst_227 = arith.constant 3.200000e+01 : f32
    %585 = vector.broadcast %cst_227 : f32 to vector<8x1xf32>
    %586 = arith.divf %584, %585 : vector<8x1xf32>
    %587 = vector.broadcast %586 : vector<8x1xf32> to vector<8x32xf32>
    %588 = arith.subf %578, %587 : vector<8x32xf32>
    %589 = arith.mulf %588, %588 : vector<8x32xf32>
    %cst_228 = arith.constant dense<0.000000e+00> : vector<8xf32>
    %590 = vector.multi_reduction <add>, %589, %cst_228 [1] : vector<8x32xf32> to vector<8xf32>
    %591 = vector.shape_cast %590 : vector<8xf32> to vector<8x1xf32>
    %cst_229 = arith.constant 3.200000e+01 : f32
    %592 = vector.broadcast %cst_229 : f32 to vector<8x1xf32>
    %593 = arith.divf %591, %592 : vector<8x1xf32>
    %594 = vector.broadcast %586 : vector<8x1xf32> to vector<8x32xf32>
    %595 = arith.subf %578, %594 : vector<8x32xf32>
    %cst_230 = arith.constant 9.99999974E-6 : f32
    %596 = vector.broadcast %cst_230 : f32 to vector<8x1xf32>
    %597 = arith.addf %593, %596 : vector<8x1xf32>
    %598 = math.rsqrt %597 : vector<8x1xf32>
    %599 = vector.broadcast %598 : vector<8x1xf32> to vector<8x32xf32>
    %600 = arith.mulf %595, %599 : vector<8x32xf32>
    %601 = vector.broadcast %580 : vector<1x32xf32> to vector<8x32xf32>
    %602 = arith.mulf %600, %601 : vector<8x32xf32>
    %603 = vector.broadcast %582 : vector<1x32xf32> to vector<8x32xf32>
    %604 = arith.addf %602, %603 : vector<8x32xf32>
    %c0_231 = arith.constant 0 : index
    %c0_232 = arith.constant 0 : index
    %c0_233 = arith.constant 0 : index
    %605 = vector.load %arg15[%c0_231, %c0_232, %c0_233] : memref<1x8x32xf32, #tpu.memory_space<vmem>>, vector<1x8x32xf32>
    %606 = vector.shape_cast %605 : vector<1x8x32xf32> to vector<8x32xf32>
    %607 = vector.shape_cast %604 : vector<8x32xf32> to vector<1x8x32xf32>
    tpu.vector_store %arg15[%c0_231, %c0_232, %c0_233], %607 {strides = array<i32>} : memref<1x8x32xf32, #tpu.memory_space<vmem>>, vector<1x8x32xf32>,
    return
  }
  func.func @transform_0(%arg0: i32) -> (i32, i32, i32) {
    %c0_i32 = arith.constant 0 : i32
    %c0_i32_0 = arith.constant 0 : i32
    %c0_i32_1 = arith.constant 0 : i32
    return %arg0, %c0_i32, %c0_i32_0 : i32, i32, i32
  }
  func.func @transform_1(%arg0: i32) -> (i32, i32, i32) {
    %c0_i32 = arith.constant 0 : i32
    %c0_i32_0 = arith.constant 0 : i32
    %c0_i32_1 = arith.constant 0 : i32
    return %arg0, %c0_i32, %c0_i32_0 : i32, i32, i32
  }
  func.func @transform_2(%arg0: i32) -> (i32, i32, i32) {
    %c0_i32 = arith.constant 0 : i32
    %c0_i32_0 = arith.constant 0 : i32
    %c0_i32_1 = arith.constant 0 : i32
    %c0_i32_2 = arith.constant 0 : i32
    return %c0_i32, %c0_i32_0, %c0_i32_1 : i32, i32, i32
  }
  func.func @transform_3(%arg0: i32) -> (i32, i32, i32) {
    %c0_i32 = arith.constant 0 : i32
    %c0_i32_0 = arith.constant 0 : i32
    %c0_i32_1 = arith.constant 0 : i32
    %c0_i32_2 = arith.constant 0 : i32
    return %c0_i32, %c0_i32_0, %c0_i32_1 : i32, i32, i32
  }
  func.func @transform_4(%arg0: i32) -> (i32, i32, i32) {
    %c0_i32 = arith.constant 0 : i32
    %c0_i32_0 = arith.constant 0 : i32
    %c0_i32_1 = arith.constant 0 : i32
    %c0_i32_2 = arith.constant 0 : i32
    return %c0_i32, %c0_i32_0, %c0_i32_1 : i32, i32, i32
  }
  func.func @transform_5(%arg0: i32) -> (i32, i32, i32) {
    %c0_i32 = arith.constant 0 : i32
    %c0_i32_0 = arith.constant 0 : i32
    %c0_i32_1 = arith.constant 0 : i32
    %c0_i32_2 = arith.constant 0 : i32
    return %c0_i32, %c0_i32_0, %c0_i32_1 : i32, i32, i32
  }
  func.func @transform_6(%arg0: i32) -> (i32, i32, i32) {
    %c0_i32 = arith.constant 0 : i32
    %c0_i32_0 = arith.constant 0 : i32
    %c0_i32_1 = arith.constant 0 : i32
    %c0_i32_2 = arith.constant 0 : i32
    return %c0_i32, %c0_i32_0, %c0_i32_1 : i32, i32, i32
  }
  func.func @transform_7(%arg0: i32) -> (i32, i32, i32) {
    %c0_i32 = arith.constant 0 : i32
    %c0_i32_0 = arith.constant 0 : i32
    %c0_i32_1 = arith.constant 0 : i32
    %c0_i32_2 = arith.constant 0 : i32
    return %c0_i32, %c0_i32_0, %c0_i32_1 : i32, i32, i32
  }
  func.func @transform_8(%arg0: i32) -> (i32, i32, i32) {
    %c0_i32 = arith.constant 0 : i32
    %c0_i32_0 = arith.constant 0 : i32
    %c0_i32_1 = arith.constant 0 : i32
    %c0_i32_2 = arith.constant 0 : i32
    return %c0_i32, %c0_i32_0, %c0_i32_1 : i32, i32, i32
  }
  func.func @transform_9(%arg0: i32) -> (i32, i32, i32) {
    %c0_i32 = arith.constant 0 : i32
    %c0_i32_0 = arith.constant 0 : i32
    %c0_i32_1 = arith.constant 0 : i32
    %c0_i32_2 = arith.constant 0 : i32
    return %c0_i32, %c0_i32_0, %c0_i32_1 : i32, i32, i32
  }
  func.func @transform_10(%arg0: i32) -> (i32, i32, i32) {
    %c0_i32 = arith.constant 0 : i32
    %c0_i32_0 = arith.constant 0 : i32
    %c0_i32_1 = arith.constant 0 : i32
    %c0_i32_2 = arith.constant 0 : i32
    return %c0_i32, %c0_i32_0, %c0_i32_1 : i32, i32, i32
  }
  func.func @transform_11(%arg0: i32) -> (i32, i32, i32) {
    %c0_i32 = arith.constant 0 : i32
    %c0_i32_0 = arith.constant 0 : i32
    %c0_i32_1 = arith.constant 0 : i32
    %c0_i32_2 = arith.constant 0 : i32
    return %c0_i32, %c0_i32_0, %c0_i32_1 : i32, i32, i32
  }
  func.func @transform_12(%arg0: i32) -> (i32, i32, i32) {
    %c0_i32 = arith.constant 0 : i32
    %c0_i32_0 = arith.constant 0 : i32
    %c0_i32_1 = arith.constant 0 : i32
    %c0_i32_2 = arith.constant 0 : i32
    return %c0_i32, %c0_i32_0, %c0_i32_1 : i32, i32, i32
  }
  func.func @transform_13(%arg0: i32) -> (i32, i32, i32) {
    %c0_i32 = arith.constant 0 : i32
    %c0_i32_0 = arith.constant 0 : i32
    %c0_i32_1 = arith.constant 0 : i32
    %c0_i32_2 = arith.constant 0 : i32
    return %c0_i32, %c0_i32_0, %c0_i32_1 : i32, i32, i32
  }
  func.func @transform_14(%arg0: i32) -> (i32, i32, i32) {
    %c0_i32 = arith.constant 0 : i32
    %c0_i32_0 = arith.constant 0 : i32
    %c0_i32_1 = arith.constant 0 : i32
    return %arg0, %c0_i32, %c0_i32_0 : i32, i32, i32
  }
}

</mosaic_0001>

<llo_original>
// kernel: encoder_forward.1
$region0: #{encoder_forward.1}
  #allocation0 [shape = 'u32[]', space=smem, size = 0x4, offset = 0x4, fixed_abs, tag = 'smem constant byte address 0x4 - core index']
  #allocation1 [shape = 'u32[144,128]{1,0:T(1,128)}', space=vmem, size = 0x12000, scoped, tag = 'internal scratch']
  %s0 = inlined_call_operand.vmem [shape: f32[2,8,32], index: 0, kind: input, shape index: {}]
  %s1 = inlined_call_operand.vmem [shape: f32[2,1,8], index: 1, kind: input, shape index: {}]
  %s2 = inlined_call_operand.vmem [shape: bf16[4,32,96], index: 2, kind: input, shape index: {}]
  %s3 = inlined_call_operand.vmem [shape: f32[4,1,96], index: 3, kind: input, shape index: {}]
  %s4 = inlined_call_operand.vmem [shape: bf16[4,32,32], index: 4, kind: input, shape index: {}]
  %s5 = inlined_call_operand.vmem [shape: f32[4,1,32], index: 5, kind: input, shape index: {}]
  %s6 = inlined_call_operand.vmem [shape: f32[4,1,32], index: 6, kind: input, shape index: {}]
  %s7 = inlined_call_operand.vmem [shape: f32[4,1,32], index: 7, kind: input, shape index: {}]
  %s8 = inlined_call_operand.vmem [shape: bf16[4,32,128], index: 8, kind: input, shape index: {}]
  %s9 = inlined_call_operand.vmem [shape: f32[4,1,128], index: 9, kind: input, shape index: {}]
  %s10 = inlined_call_operand.vmem [shape: bf16[4,128,32], index: 10, kind: input, shape index: {}]
  %s11 = inlined_call_operand.vmem [shape: f32[4,1,32], index: 11, kind: input, shape index: {}]
  %s12 = inlined_call_operand.vmem [shape: f32[4,1,32], index: 12, kind: input, shape index: {}]
  %s13 = inlined_call_operand.vmem [shape: f32[4,1,32], index: 13, kind: input, shape index: {}]
  %s14 = inlined_call_operand.vmem [shape: f32[2,8,32], index: 14, kind: output, shape index: {}]
  %s15 = sld [smem:[#allocation0]]
  $region89: #{encoder_forward.1} parent=0
    _
  %s17 = ssub.s32 1, %s15
  %s18 = scalar_select 0, %s17, %s15
  loop: start=0, step=1, limit=4
  $region2: #{encoder_forward.1} parent=0 // loop_pre_header
    _
  $region3: #{encoder_forward.1} parent=0 // loop_header
    %s20 = sphi 0, %s24
    %p21 = scmp.ge.s32.totalorder %s20, 4
    %s30 = sphi 0, %s32
    %s33 = sphi 0, %s30
    %s34 = sphi 0, %s33
    %s50 = sphi 0, %s34
    %s56 = sphi 0, %s58
    %s59 = sphi 0, %s56
    %s60 = sphi 0, %s59
    %s76 = sphi 0, %s60
    %s80 = sphi 0, %s80
    %s82 = sphi 0, %s80
    %s83 = sphi 0, %s82
    %s97 = sphi 0, %s83
    %s101 = sphi 0, %s101
    %s103 = sphi 0, %s101
    %s104 = sphi 0, %s103
    %s118 = sphi 0, %s104
    %s122 = sphi 0, %s122
    %s124 = sphi 0, %s122
    %s125 = sphi 0, %s124
    %s139 = sphi 0, %s125
    %s143 = sphi 0, %s143
    %s145 = sphi 0, %s143
    %s146 = sphi 0, %s145
    %s160 = sphi 0, %s146
    %s164 = sphi 0, %s164
    %s166 = sphi 0, %s164
    %s167 = sphi 0, %s166
    %s181 = sphi 0, %s167
    %s185 = sphi 0, %s185
    %s187 = sphi 0, %s185
    %s188 = sphi 0, %s187
    %s202 = sphi 0, %s188
    %s206 = sphi 0, %s206
    %s208 = sphi 0, %s206
    %s209 = sphi 0, %s208
    %s223 = sphi 0, %s209
    %s227 = sphi 0, %s227
    %s229 = sphi 0, %s227
    %s230 = sphi 0, %s229
    %s244 = sphi 0, %s230
    %s248 = sphi 0, %s248
    %s250 = sphi 0, %s248
    %s251 = sphi 0, %s250
    %s265 = sphi 0, %s251
    %s269 = sphi 0, %s269
    %s271 = sphi 0, %s269
    %s272 = sphi 0, %s271
    %s286 = sphi 0, %s272
    %s290 = sphi 0, %s290
    %s292 = sphi 0, %s290
    %s293 = sphi 0, %s292
    %s307 = sphi 0, %s293
    %s311 = sphi 0, %s311
    %s313 = sphi 0, %s311
    %s314 = sphi 0, %s313
    %s328 = sphi 0, %s314
    %s334 = sphi 0, %s336
    %s337 = sphi 0, %s334
    %s338 = sphi 0, %s337
    %s354 = sphi 0, %s338
  $region4: #{encoder_forward.1} parent=0 // loop_header_branch
    %23 = sbr.rel (%p21) target = $region8
  $region5: #{encoder_forward.1} parent=0 // loop_body
    %s25 = ssub.s32 %s20, 1
    %s26 = ssub.s32 %s20, 2
    %s27 = sadd.s32 %s20, 1
    %s28 = ssub.s32 %s20, %s27
    %p29 = scmp.eq.s32.totalorder %s28, 0
    %s31 = sadd.s32 %s30, 1
    %s32 = scalar_select %p29, %s30, %s31
    %p35 = pneg %p29
    %p36 = scmp.eq.s32.totalorder %s20, 1
    %p37 = por %p35, %p36
    %p38 = scmp.ne.s32.totalorder %s30, %s33
    %p39 = scmp.eq.s32.totalorder %s20, 0
    %p40 = por %p38, %p39
    %p41 = scmp.ne.s32.totalorder %s30, %s33
    %p42 = scmp.eq.s32.totalorder %s25, 1
    %p43 = por %p41, %p42
    %p44 = scmp.ne.s32.totalorder %s33, %s34
    %p45 = scmp.eq.s32.totalorder %s25, 0
    %p46 = por %p44, %p45
    %p47 = scmp.ne.s32.totalorder %s33, %s34
    %p48 = scmp.eq.s32.totalorder %s26, 1
    %p49 = por %p47, %p48
    %p51 = scmp.ne.s32.totalorder %s34, %s50
    %p52 = scmp.eq.s32.totalorder %s26, 0
    %p53 = por %p51, %p52
    %s54 = ssub.s32 %s20, %s27
    %p55 = scmp.eq.s32.totalorder %s54, 0
    %s57 = sadd.s32 %s56, 1
    %s58 = scalar_select %p55, %s56, %s57
    %p61 = pneg %p55
    %p62 = scmp.eq.s32.totalorder %s20, 1
    %p63 = por %p61, %p62
    %p64 = scmp.ne.s32.totalorder %s56, %s59
    %p65 = scmp.eq.s32.totalorder %s20, 0
    %p66 = por %p64, %p65
    %p67 = scmp.ne.s32.totalorder %s56, %s59
    %p68 = scmp.eq.s32.totalorder %s25, 1
    %p69 = por %p67, %p68
    %p70 = scmp.ne.s32.totalorder %s59, %s60
    %p71 = scmp.eq.s32.totalorder %s25, 0
    %p72 = por %p70, %p71
    %p73 = scmp.ne.s32.totalorder %s59, %s60
    %p74 = scmp.eq.s32.totalorder %s26, 1
    %p75 = por %p73, %p74
    %p77 = scmp.ne.s32.totalorder %s60, %s76
    %p78 = scmp.eq.s32.totalorder %s26, 0
    %p79 = por %p77, %p78
    %s81 = sadd.s32 %s80, 1
    %p84 = scmp.eq.s32.totalorder %s20, 1
    %p85 = scmp.ne.s32.totalorder %s80, %s82
    %p86 = scmp.eq.s32.totalorder %s20, 0
    %p87 = por %p85, %p86
    %p88 = scmp.ne.s32.totalorder %s80, %s82
    %p89 = scmp.eq.s32.totalorder %s25, 1
    %p90 = por %p88, %p89
    %p91 = scmp.ne.s32.totalorder %s82, %s83
    %p92 = scmp.eq.s32.totalorder %s25, 0
    %p93 = por %p91, %p92
    %p94 = scmp.ne.s32.totalorder %s82, %s83
    %p95 = scmp.eq.s32.totalorder %s26, 1
    %p96 = por %p94, %p95
    %p98 = scmp.ne.s32.totalorder %s83, %s97
    %p99 = scmp.eq.s32.totalorder %s26, 0
    %p100 = por %p98, %p99
    %s102 = sadd.s32 %s101, 1
    %p105 = scmp.eq.s32.totalorder %s20, 1
    %p106 = scmp.ne.s32.totalorder %s101, %s103
    %p107 = scmp.eq.s32.totalorder %s20, 0
    %p108 = por %p106, %p107
    %p109 = scmp.ne.s32.totalorder %s101, %s103
    %p110 = scmp.eq.s32.totalorder %s25, 1
    %p111 = por %p109, %p110
    %p112 = scmp.ne.s32.totalorder %s103, %s104
    %p113 = scmp.eq.s32.totalorder %s25, 0
    %p114 = por %p112, %p113
    %p115 = scmp.ne.s32.totalorder %s103, %s104
    %p116 = scmp.eq.s32.totalorder %s26, 1
    %p117 = por %p115, %p116
    %p119 = scmp.ne.s32.totalorder %s104, %s118
    %p120 = scmp.eq.s32.totalorder %s26, 0
    %p121 = por %p119, %p120
    %s123 = sadd.s32 %s122, 1
    %p126 = scmp.eq.s32.totalorder %s20, 1
    %p127 = scmp.ne.s32.totalorder %s122, %s124
    %p128 = scmp.eq.s32.totalorder %s20, 0
    %p129 = por %p127, %p128
    %p130 = scmp.ne.s32.totalorder %s122, %s124
    %p131 = scmp.eq.s32.totalorder %s25, 1
    %p132 = por %p130, %p131
    %p133 = scmp.ne.s32.totalorder %s124, %s125
    %p134 = scmp.eq.s32.totalorder %s25, 0
    %p135 = por %p133, %p134
    %p136 = scmp.ne.s32.totalorder %s124, %s125
    %p137 = scmp.eq.s32.totalorder %s26, 1
    %p138 = por %p136, %p137
    %p140 = scmp.ne.s32.totalorder %s125, %s139
    %p141 = scmp.eq.s32.totalorder %s26, 0
    %p142 = por %p140, %p141
    %s144 = sadd.s32 %s143, 1
    %p147 = scmp.eq.s32.totalorder %s20, 1
    %p148 = scmp.ne.s32.totalorder %s143, %s145
    %p149 = scmp.eq.s32.totalorder %s20, 0
    %p150 = por %p148, %p149
    %p151 = scmp.ne.s32.totalorder %s143, %s145
    %p152 = scmp.eq.s32.totalorder %s25, 1
    %p153 = por %p151, %p152
    %p154 = scmp.ne.s32.totalorder %s145, %s146
    %p155 = scmp.eq.s32.totalorder %s25, 0
    %p156 = por %p154, %p155
    %p157 = scmp.ne.s32.totalorder %s145, %s146
    %p158 = scmp.eq.s32.totalorder %s26, 1
    %p159 = por %p157, %p158
    %p161 = scmp.ne.s32.totalorder %s146, %s160
    %p162 = scmp.eq.s32.totalorder %s26, 0
    %p163 = por %p161, %p162
    %s165 = sadd.s32 %s164, 1
    %p168 = scmp.eq.s32.totalorder %s20, 1
    %p169 = scmp.ne.s32.totalorder %s164, %s166
    %p170 = scmp.eq.s32.totalorder %s20, 0
    %p171 = por %p169, %p170
    %p172 = scmp.ne.s32.totalorder %s164, %s166
    %p173 = scmp.eq.s32.totalorder %s25, 1
    %p174 = por %p172, %p173
    %p175 = scmp.ne.s32.totalorder %s166, %s167
    %p176 = scmp.eq.s32.totalorder %s25, 0
    %p177 = por %p175, %p176
    %p178 = scmp.ne.s32.totalorder %s166, %s167
    %p179 = scmp.eq.s32.totalorder %s26, 1
    %p180 = por %p178, %p179
    %p182 = scmp.ne.s32.totalorder %s167, %s181
    %p183 = scmp.eq.s32.totalorder %s26, 0
    %p184 = por %p182, %p183
    %s186 = sadd.s32 %s185, 1
    %p189 = scmp.eq.s32.totalorder %s20, 1
    %p190 = scmp.ne.s32.totalorder %s185, %s187
    %p191 = scmp.eq.s32.totalorder %s20, 0
    %p192 = por %p190, %p191
    %p193 = scmp.ne.s32.totalorder %s185, %s187
    %p194 = scmp.eq.s32.totalorder %s25, 1
    %p195 = por %p193, %p194
    %p196 = scmp.ne.s32.totalorder %s187, %s188
    %p197 = scmp.eq.s32.totalorder %s25, 0
    %p198 = por %p196, %p197
    %p199 = scmp.ne.s32.totalorder %s187, %s188
    %p200 = scmp.eq.s32.totalorder %s26, 1
    %p201 = por %p199, %p200
    %p203 = scmp.ne.s32.totalorder %s188, %s202
    %p204 = scmp.eq.s32.totalorder %s26, 0
    %p205 = por %p203, %p204
    %s207 = sadd.s32 %s206, 1
    %p210 = scmp.eq.s32.totalorder %s20, 1
    %p211 = scmp.ne.s32.totalorder %s206, %s208
    %p212 = scmp.eq.s32.totalorder %s20, 0
    %p213 = por %p211, %p212
    %p214 = scmp.ne.s32.totalorder %s206, %s208
    %p215 = scmp.eq.s32.totalorder %s25, 1
    %p216 = por %p214, %p215
    %p217 = scmp.ne.s32.totalorder %s208, %s209
    %p218 = scmp.eq.s32.totalorder %s25, 0
    %p219 = por %p217, %p218
    %p220 = scmp.ne.s32.totalorder %s208, %s209
    %p221 = scmp.eq.s32.totalorder %s26, 1
    %p222 = por %p220, %p221
    %p224 = scmp.ne.s32.totalorder %s209, %s223
    %p225 = scmp.eq.s32.totalorder %s26, 0
    %p226 = por %p224, %p225
    %s228 = sadd.s32 %s227, 1
    %p231 = scmp.eq.s32.totalorder %s20, 1
    %p232 = scmp.ne.s32.totalorder %s227, %s229
    %p233 = scmp.eq.s32.totalorder %s20, 0
    %p234 = por %p232, %p233
    %p235 = scmp.ne.s32.totalorder %s227, %s229
    %p236 = scmp.eq.s32.totalorder %s25, 1
    %p237 = por %p235, %p236
    %p238 = scmp.ne.s32.totalorder %s229, %s230
    %p239 = scmp.eq.s32.totalorder %s25, 0
    %p240 = por %p238, %p239
    %p241 = scmp.ne.s32.totalorder %s229, %s230
    %p242 = scmp.eq.s32.totalorder %s26, 1
    %p243 = por %p241, %p242
    %p245 = scmp.ne.s32.totalorder %s230, %s244
    %p246 = scmp.eq.s32.totalorder %s26, 0
    %p247 = por %p245, %p246
    %s249 = sadd.s32 %s248, 1
    %p252 = scmp.eq.s32.totalorder %s20, 1
    %p253 = scmp.ne.s32.totalorder %s248, %s250
    %p254 = scmp.eq.s32.totalorder %s20, 0
    %p255 = por %p253, %p254
    %p256 = scmp.ne.s32.totalorder %s248, %s250
    %p257 = scmp.eq.s32.totalorder %s25, 1
    %p258 = por %p256, %p257
    %p259 = scmp.ne.s32.totalorder %s250, %s251
    %p260 = scmp.eq.s32.totalorder %s25, 0
    %p261 = por %p259, %p260
    %p262 = scmp.ne.s32.totalorder %s250, %s251
    %p263 = scmp.eq.s32.totalorder %s26, 1
    %p264 = por %p262, %p263
    %p266 = scmp.ne.s32.totalorder %s251, %s265
    %p267 = scmp.eq.s32.totalorder %s26, 0
    %p268 = por %p266, %p267
    %s270 = sadd.s32 %s269, 1
    %p273 = scmp.eq.s32.totalorder %s20, 1
    %p274 = scmp.ne.s32.totalorder %s269, %s271
    %p275 = scmp.eq.s32.totalorder %s20, 0
    %p276 = por %p274, %p275
    %p277 = scmp.ne.s32.totalorder %s269, %s271
    %p278 = scmp.eq.s32.totalorder %s25, 1
    %p279 = por %p277, %p278
    %p280 = scmp.ne.s32.totalorder %s271, %s272
    %p281 = scmp.eq.s32.totalorder %s25, 0
    %p282 = por %p280, %p281
    %p283 = scmp.ne.s32.totalorder %s271, %s272
    %p284 = scmp.eq.s32.totalorder %s26, 1
    %p285 = por %p283, %p284
    %p287 = scmp.ne.s32.totalorder %s272, %s286
    %p288 = scmp.eq.s32.totalorder %s26, 0
    %p289 = por %p287, %p288
    %s291 = sadd.s32 %s290, 1
    %p294 = scmp.eq.s32.totalorder %s20, 1
    %p295 = scmp.ne.s32.totalorder %s290, %s292
    %p296 = scmp.eq.s32.totalorder %s20, 0
    %p297 = por %p295, %p296
    %p298 = scmp.ne.s32.totalorder %s290, %s292
    %p299 = scmp.eq.s32.totalorder %s25, 1
    %p300 = por %p298, %p299
    %p301 = scmp.ne.s32.totalorder %s292, %s293
    %p302 = scmp.eq.s32.totalorder %s25, 0
    %p303 = por %p301, %p302
    %p304 = scmp.ne.s32.totalorder %s292, %s293
    %p305 = scmp.eq.s32.totalorder %s26, 1
    %p306 = por %p304, %p305
    %p308 = scmp.ne.s32.totalorder %s293, %s307
    %p309 = scmp.eq.s32.totalorder %s26, 0
    %p310 = por %p308, %p309
    %s312 = sadd.s32 %s311, 1
    %p315 = scmp.eq.s32.totalorder %s20, 1
    %p316 = scmp.ne.s32.totalorder %s311, %s313
    %p317 = scmp.eq.s32.totalorder %s20, 0
    %p318 = por %p316, %p317
    %p319 = scmp.ne.s32.totalorder %s311, %s313
    %p320 = scmp.eq.s32.totalorder %s25, 1
    %p321 = por %p319, %p320
    %p322 = scmp.ne.s32.totalorder %s313, %s314
    %p323 = scmp.eq.s32.totalorder %s25, 0
    %p324 = por %p322, %p323
    %p325 = scmp.ne.s32.totalorder %s313, %s314
    %p326 = scmp.eq.s32.totalorder %s26, 1
    %p327 = por %p325, %p326
    %p329 = scmp.ne.s32.totalorder %s314, %s328
    %p330 = scmp.eq.s32.totalorder %s26, 0
    %p331 = por %p329, %p330
    %s332 = ssub.s32 %s20, %s27
    %p333 = scmp.eq.s32.totalorder %s332, 0
    %s335 = sadd.s32 %s334, 1
    %s336 = scalar_select %p333, %s334, %s335
    %p339 = pneg %p333
    %p340 = scmp.eq.s32.totalorder %s20, 1
    %p341 = por %p339, %p340
    %p342 = scmp.ne.s32.totalorder %s334, %s337
    %p343 = scmp.eq.s32.totalorder %s20, 0
    %p344 = por %p342, %p343
    %p345 = scmp.ne.s32.totalorder %s334, %s337
    %p346 = scmp.eq.s32.totalorder %s25, 1
    %p347 = por %p345, %p346
    %p348 = scmp.ne.s32.totalorder %s337, %s338
    %p349 = scmp.eq.s32.totalorder %s25, 0
    %p350 = por %p348, %p349
    %p351 = scmp.ne.s32.totalorder %s337, %s338
    %p352 = scmp.eq.s32.totalorder %s26, 1
    %p353 = por %p351, %p352
    %p355 = scmp.ne.s32.totalorder %s338, %s354
    %p356 = scmp.eq.s32.totalorder %s26, 0
    %p357 = por %p355, %p356
    %p358 = scmp.le.s32.totalorder 1, %s20
    %p359 = scmp.lt.s32.totalorder %s20, 3
    %p360 = pnand %p358, %p359
    %p361 = pneg %p360
    // Predicated region
    $region9: #{encoder_forward.1} parent=5 // pred_check
      _
    $region10: #{encoder_forward.1} parent=5 // pred_check_branch
      %363 = sbr.rel (%p360) target = $region12
    $region11: #{encoder_forward.1} parent=5 // pred_region
      %s364 = ssub.s32 %s20, 1
      // Predicated region
      $region13: #{encoder_forward.1} parent=11 // pred_check
        %p365 = pneg %p93
      $region14: #{encoder_forward.1} parent=11 // pred_check_branch
        %367 = sbr.rel (%p365) target = $region16
      $region15: #{encoder_forward.1} parent=11 // pred_region
        _
      $region16: #{encoder_forward.1} parent=11 // pred_fallthru
        _
      // Predicated region
      $region17: #{encoder_forward.1} parent=11 // pred_check
        %p368 = pneg %p114
      $region18: #{encoder_forward.1} parent=11 // pred_check_branch
        %370 = sbr.rel (%p368) target = $region20
      $region19: #{encoder_forward.1} parent=11 // pred_region
        _
      $region20: #{encoder_forward.1} parent=11 // pred_fallthru
        _
      // Predicated region
      $region21: #{encoder_forward.1} parent=11 // pred_check
        %p371 = pneg %p135
      $region22: #{encoder_forward.1} parent=11 // pred_check_branch
        %373 = sbr.rel (%p371) target = $region24
      $region23: #{encoder_forward.1} parent=11 // pred_region
        _
      $region24: #{encoder_forward.1} parent=11 // pred_fallthru
        _
      // Predicated region
      $region25: #{encoder_forward.1} parent=11 // pred_check
        %p374 = pneg %p156
      $region26: #{encoder_forward.1} parent=11 // pred_check_branch
        %376 = sbr.rel (%p374) target = $region28
      $region27: #{encoder_forward.1} parent=11 // pred_region
        _
      $region28: #{encoder_forward.1} parent=11 // pred_fallthru
        _
      // Predicated region
      $region29: #{encoder_forward.1} parent=11 // pred_check
        %p377 = pneg %p177
      $region30: #{encoder_forward.1} parent=11 // pred_check_branch
        %379 = sbr.rel (%p377) target = $region32
      $region31: #{encoder_forward.1} parent=11 // pred_region
        _
      $region32: #{encoder_forward.1} parent=11 // pred_fallthru
        _
      // Predicated region
      $region33: #{encoder_forward.1} parent=11 // pred_check
        %p380 = pneg %p198
      $region34: #{encoder_forward.1} parent=11 // pred_check_branch
        %382 = sbr.rel (%p380) target = $region36
      $region35: #{encoder_forward.1} parent=11 // pred_region
        _
      $region36: #{encoder_forward.1} parent=11 // pred_fallthru
        _
      // Predicated region
      $region37: #{encoder_forward.1} parent=11 // pred_check
        %p383 = pneg %p219
      $region38: #{encoder_forward.1} parent=11 // pred_check_branch
        %385 = sbr.rel (%p383) target = $region40
      $region39: #{encoder_forward.1} parent=11 // pred_region
        _
      $region40: #{encoder_forward.1} parent=11 // pred_fallthru
        _
      // Predicated region
      $region41: #{encoder_forward.1} parent=11 // pred_check
        %p386 = pneg %p240
      $region42: #{encoder_forward.1} parent=11 // pred_check_branch
        %388 = sbr.rel (%p386) target = $region44
      $region43: #{encoder_forward.1} parent=11 // pred_region
        _
      $region44: #{encoder_forward.1} parent=11 // pred_fallthru
        _
      // Predicated region
      $region45: #{encoder_forward.1} parent=11 // pred_check
        %p389 = pneg %p261
      $region46: #{encoder_forward.1} parent=11 // pred_check_branch
        %391 = sbr.rel (%p389) target = $region48
      $region47: #{encoder_forward.1} parent=11 // pred_region
        _
      $region48: #{encoder_forward.1} parent=11 // pred_fallthru
        _
      // Predicated region
      $region49: #{encoder_forward.1} parent=11 // pred_check
        %p392 = pneg %p282
      $region50: #{encoder_forward.1} parent=11 // pred_check_branch
        %394 = sbr.rel (%p392) target = $region52
      $region51: #{encoder_forward.1} parent=11 // pred_region
        _
      $region52: #{encoder_forward.1} parent=11 // pred_fallthru
        _
      // Predicated region
      $region53: #{encoder_forward.1} parent=11 // pred_check
        %p395 = pneg %p303
      $region54: #{encoder_forward.1} parent=11 // pred_check_branch
        %397 = sbr.rel (%p395) target = $region56
      $region55: #{encoder_forward.1} parent=11 // pred_region
        _
      $region56: #{encoder_forward.1} parent=11 // pred_fallthru
        _
      // Predicated region
      $region57: #{encoder_forward.1} parent=11 // pred_check
        %p398 = pneg %p324
      $region58: #{encoder_forward.1} parent=11 // pred_check_branch
        %400 = sbr.rel (%p398) target = $region60
      $region59: #{encoder_forward.1} parent=11 // pred_region
        _
      $region60: #{encoder_forward.1} parent=11 // pred_fallthru
        _
    $region12: #{encoder_forward.1} parent=5 // pred_fallthru
      _
    %p401 = scmp.lt.s32.totalorder %s20, 2
    // Predicated region
    $region61: #{encoder_forward.1} parent=5 // pred_check
      %p402 = pneg %p401
    $region62: #{encoder_forward.1} parent=5 // pred_check_branch
      %404 = sbr.rel (%p402) target = $region64
    $region63: #{encoder_forward.1} parent=5 // pred_region
      // Predicated region
      $region65: #{encoder_forward.1} parent=63 // pred_check
        %p405 = pneg %p40
      $region66: #{encoder_forward.1} parent=63 // pred_check_branch
        %407 = sbr.rel (%p405) target = $region68
      $region67: #{encoder_forward.1} parent=63 // pred_region
        %p408 = scmp.lt.s32.totalorder %s20, 1
        %s409 = scalar_select %p408, %s20, 1
        %s410 = smul.addr %s409, 8
        %s411 = scalar_lea.vmem %s0, %s410
      $region68: #{encoder_forward.1} parent=63 // pred_fallthru
        _
      // Predicated region
      $region69: #{encoder_forward.1} parent=63 // pred_check
        %p412 = pneg %p66
      $region70: #{encoder_forward.1} parent=63 // pred_check_branch
        %414 = sbr.rel (%p412) target = $region72
      $region71: #{encoder_forward.1} parent=63 // pred_region
        %p415 = scmp.lt.s32.totalorder %s20, 1
        %s416 = scalar_select %p415, %s20, 1
        %s417 = scalar_lea.vmem %s1, %s416
      $region72: #{encoder_forward.1} parent=63 // pred_fallthru
        _
    $region64: #{encoder_forward.1} parent=5 // pred_fallthru
      _
    %p418 = scmp.le.s32.totalorder 1, %s20
    %p419 = scmp.lt.s32.totalorder %s20, 3
    %p420 = pnand %p418, %p419
    %p421 = pneg %p420
    // Predicated region
    $region73: #{encoder_forward.1} parent=5 // pred_check
      _
    $region74: #{encoder_forward.1} parent=5 // pred_check_branch
      %423 = sbr.rel (%p420) target = $region76
    $region75: #{encoder_forward.1} parent=5 // pred_region
      %s424 = ssub.s32 %s20, 1
      %p425 = scmp.lt.s32.totalorder %s25, 1
      %s426 = scalar_select %p425, %s25, 1
      %s427 = smul.addr %s426, 8
      %s428 = scalar_lea.vmem %s0, %s427
      %p429 = pneg %p46
      %p430 = pneg %p43
      %p431 = scmp.lt.s32.totalorder %s25, 1
      %s432 = scalar_select %p431, %s25, 1
      %s433 = scalar_lea.vmem %s1, %s432
      %p434 = pneg %p72
      %p435 = pneg %p69
      %p436 = pneg %p93
      %p437 = pneg %p90
      %p438 = pneg %p114
      %p439 = pneg %p111
      %p440 = pneg %p135
      %p441 = pneg %p132
      %p442 = pneg %p156
      %p443 = pneg %p153
      %p444 = pneg %p177
      %p445 = pneg %p174
      %p446 = pneg %p198
      %p447 = pneg %p195
      %p448 = pneg %p219
      %p449 = pneg %p216
      %p450 = pneg %p240
      %p451 = pneg %p237
      %p452 = pneg %p261
      %p453 = pneg %p258
      %p454 = pneg %p282
      %p455 = pneg %p279
      %p456 = pneg %p303
      %p457 = pneg %p300
      %p458 = pneg %p324
      %p459 = pneg %p321
      %p460 = pneg %p350
      %p461 = pneg %p347
      %p462 = scmp.lt.s32.totalorder %s25, 1
      %s463 = scalar_select %p462, %s25, 1
      %s464 = smul.addr %s463, 8
      %s465 = scalar_lea.vmem %s14, %s464
      %p466 = scmp.lt.s32.totalorder %s25, 1
      %s467 = scalar_select %p466, %s25, 1
      %s468 = smul.addr %s467, 8
      %s469 = scalar_lea.vmem %s0, %s468
      %p470 = scmp.lt.s32.totalorder %s25, 1
      %s471 = scalar_select %p470, %s25, 1
      %s472 = scalar_lea.vmem %s1, %s471
      %p473 = scmp.lt.s32.totalorder %s25, 1
      %s474 = scalar_select %p473, %s25, 1
      %s475 = smul.addr %s474, 8
      %s476 = scalar_lea.vmem %s14, %s475
      %v478 = vld [vmem:[%s469] sm:$0xff]
      %v479 = vld [vmem:[%s472] sm:$0x1]
      %v480 = vsub.f32 1.0, %v479
      %v481 = vmul.f32 %v480, -1e+09
      %v482 = vpack.c.bf16 %v478, %v478
      %v483 = vld [vmem:[%s2] sm:$0xf]
      %v484 = vld [vmem:[%s2 + $0x4] sm:$0xf]
      %v485 = vld [vmem:[%s2 + $0x8] sm:$0xf]
      %v486 = vld [vmem:[%s2 + $0xc] sm:$0xf]
      %v487 = vld [vmem:[%s3] sm:$0x1]
      %v489 = vlaneseq
      %v490 = vshrl.u32 %v489, 7
      %v491 = vsub.s32 0, %v490
      %v492 = vrot.slane %v487, %v491
      %v498 = vunpack.c.l.b16 %v483
      %v499 = vunpack.c.l.b16 %v484
      %v500 = vunpack.c.l.b16 %v485
      %v501 = vunpack.c.l.b16 %v486
      %v502 = vpack.c.b16 %v499, %v498
      %v503 = vpack.c.b16 %v501, %v500
      %vm506 = vcmask 261120
      %v508 = vsel %vm506, %v482, 0
      %510 = vmatprep.subr.bf16.mxu0 0
      %511 = vmatpush1.bf16.msra.mxu0 0
      %512 = vmatprep.subr.bf16.mxu0 0
      %513 = vmatpush1.bf16.msra.mxu0 0
      %514 = vmatprep.subr.bf16.mxu0 0
      %515 = vmatpush1.bf16.msra.mxu0 0
      %516 = vmatprep.subr.bf16.mxu0 0
      %517 = vmatpush1.bf16.msra.mxu0 0
      %518 = vmatprep.subr.bf16.mxu0 0
      %519 = vmatpush1.bf16.msra.mxu0 0
      %520 = vmatprep.subr.bf16.mxu0 0
      %521 = vmatpush1.bf16.msra.mxu0 0
      %522 = vmatprep.subr.bf16.mxu0 0
      %523 = vmatpush1.bf16.msra.mxu0 %v503
      %524 = vmatprep.subr.bf16.mxu0 0
      %525 = vmatpush1.bf16.msra.mxu0 %v502
      %526 = vmatprep.subr.bf16.mxu0 0
      %527 = vmatpush2.bf16.msra.mxu0 0
      %528 = vmatprep.subr.bf16.mxu0 0
      %529 = vmatpush2.bf16.msra.mxu0 0
      %530 = vmatprep.subr.bf16.mxu0 0
      %531 = vmatpush2.bf16.msra.mxu0 0
      %532 = vmatprep.subr.bf16.mxu0 0
      %533 = vmatpush2.bf16.msra.mxu0 0
      %534 = vmatprep.subr.bf16.mxu0 0
      %535 = vmatpush2.bf16.msra.mxu0 0
      %536 = vmatprep.subr.bf16.mxu0 0
      %537 = vmatpush2.bf16.msra.mxu0 0
      %538 = vmatprep.subr.bf16.mxu0 0
      %539 = vmatpush2.bf16.msra.mxu0 0
      %540 = vmatprep.subr.bf16.mxu0 0
      %541 = vmatpush2.bf16.msra.mxu0 0
      %542 = vmatprep.mubr.bf16.mxu0 0
      %543 = vmatmul.mubr.bf16.gmra.mxu0 %v508
      %v544 = vpop.f32.mrf.mxu0
      %v545 = vadd.f32 %v492, %v544
      %v546 = vpop.f32.mrf.mxu0
      %v547 = vpop.f32.mrf.mxu0
      %v548 = vpop.f32.mrf.mxu0
      %549 = vdwg.mxu0
      %v550 = vmul.f32 %v545, 0.35355338
      %v551 = vpack.c.bf16 %v550, %v550
      %v552 = vpack.c.bf16 %v545, %v545
      %554 = vrot.lane.b32.xlu0 %v551, 120
      %v555 = vpop.permute.xlu0 %554
      %556 = vrot.lane.b32.xlu0 %v551, 112
      %v557 = vpop.permute.xlu0 %556
      %558 = vrot.lane.b32.xlu0 %v551, 104
      %v559 = vpop.permute.xlu0 %558
      %561 = vrot.lane.b32.xlu0 %v552, 120
      %v562 = vpop.permute.xlu0 %561
      %563 = vrot.lane.b32.xlu0 %v552, 112
      %v564 = vpop.permute.xlu0 %563
      %565 = vrot.lane.b32.xlu0 %v552, 104
      %v566 = vpop.permute.xlu0 %565
      %v568 = vlaneseq
      %v569 = vshrl.u32 %v568, 7
      %v570 = vsub.s32 0, %v569
      %v571 = vrot.slane %v481, %v570
      %573 = vrot.lane.b32.xlu0 %v552, 96
      %v574 = vpop.permute.xlu0 %573
      %vm575 = vcmask 64512
      %v577 = vsel %vm575, %v551, 0
      %v580 = vsel %vm575, %v574, 0
      %582 = vmatprep.subr.bf16.mxu0 0
      %583 = vmatpush1.bf16.xpose.msra.mxu0 0
      %584 = vmatprep.subr.bf16.mxu0 0
      %585 = vmatpush1.bf16.xpose.msra.mxu0 0
      %586 = vmatprep.subr.bf16.mxu0 0
      %587 = vmatpush1.bf16.xpose.msra.mxu0 0
      %588 = vmatprep.subr.bf16.mxu0 0
      %589 = vmatpush1.bf16.xpose.msra.mxu0 0
      %590 = vmatprep.subr.bf16.mxu0 0
      %591 = vmatpush1.bf16.xpose.msra.mxu0 0
      %592 = vmatprep.subr.bf16.mxu0 0
      %593 = vmatpush1.bf16.xpose.msra.mxu0 0
      %594 = vmatprep.subr.bf16.mxu0 0
      %595 = vmatpush1.bf16.xpose.msra.mxu0 0
      %596 = vmatprep.subr.bf16.mxu0 0
      %597 = vmatpush1.bf16.xpose.msra.mxu0 %v580
      %598 = vmatprep.subr.bf16.mxu0 0
      %599 = vmatpush2.bf16.xpose.msra.mxu0 0
      %600 = vmatprep.subr.bf16.mxu0 0
      %601 = vmatpush2.bf16.xpose.msra.mxu0 0
      %602 = vmatprep.subr.bf16.mxu0 0
      %603 = vmatpush2.bf16.xpose.msra.mxu0 0
      %604 = vmatprep.subr.bf16.mxu0 0
      %605 = vmatpush2.bf16.xpose.msra.mxu0 0
      %606 = vmatprep.subr.bf16.mxu0 0
      %607 = vmatpush2.bf16.xpose.msra.mxu0 0
      %608 = vmatprep.subr.bf16.mxu0 0
      %609 = vmatpush2.bf16.xpose.msra.mxu0 0
      %610 = vmatprep.subr.bf16.mxu0 0
      %611 = vmatpush2.bf16.xpose.msra.mxu0 0
      %612 = vmatprep.subr.bf16.mxu0 0
      %613 = vmatpush2.bf16.xpose.msra.mxu0 0
      %614 = vmatprep.mubr.bf16.mxu0 0
      %615 = vmatmul.mubr.bf16.gmra.mxu0 %v577
      %v616 = vpop.f32.mrf.mxu0
      %v617 = vadd.f32 %v571, %v616
      %v618 = vpop.f32.mrf.mxu0
      %v619 = vpop.f32.mrf.mxu0
      %v620 = vpop.f32.mrf.mxu0
      %621 = vdwg.mxu0
      %622 = vrot.lane.b32.xlu0 %v562, 96
      %v623 = vpop.permute.xlu0 %622
      %v625 = vsel %vm575, %v555, 0
      %v628 = vsel %vm575, %v623, 0
      %630 = vmatprep.subr.bf16.mxu0 0
      %631 = vmatpush1.bf16.xpose.msra.mxu0 0
      %632 = vmatprep.subr.bf16.mxu0 0
      %633 = vmatpush1.bf16.xpose.msra.mxu0 0
      %634 = vmatprep.subr.bf16.mxu0 0
      %635 = vmatpush1.bf16.xpose.msra.mxu0 0
      %636 = vmatprep.subr.bf16.mxu0 0
      %637 = vmatpush1.bf16.xpose.msra.mxu0 0
      %638 = vmatprep.subr.bf16.mxu0 0
      %639 = vmatpush1.bf16.xpose.msra.mxu0 0
      %640 = vmatprep.subr.bf16.mxu0 0
      %641 = vmatpush1.bf16.xpose.msra.mxu0 0
      %642 = vmatprep.subr.bf16.mxu0 0
      %643 = vmatpush1.bf16.xpose.msra.mxu0 0
      %644 = vmatprep.subr.bf16.mxu0 0
      %645 = vmatpush1.bf16.xpose.msra.mxu0 %v628
      %646 = vmatprep.subr.bf16.mxu0 0
      %647 = vmatpush2.bf16.xpose.msra.mxu0 0
      %648 = vmatprep.subr.bf16.mxu0 0
      %649 = vmatpush2.bf16.xpose.msra.mxu0 0
      %650 = vmatprep.subr.bf16.mxu0 0
      %651 = vmatpush2.bf16.xpose.msra.mxu0 0
      %652 = vmatprep.subr.bf16.mxu0 0
      %653 = vmatpush2.bf16.xpose.msra.mxu0 0
      %654 = vmatprep.subr.bf16.mxu0 0
      %655 = vmatpush2.bf16.xpose.msra.mxu0 0
      %656 = vmatprep.subr.bf16.mxu0 0
      %657 = vmatpush2.bf16.xpose.msra.mxu0 0
      %658 = vmatprep.subr.bf16.mxu0 0
      %659 = vmatpush2.bf16.xpose.msra.mxu0 0
      %660 = vmatprep.subr.bf16.mxu0 0
      %661 = vmatpush2.bf16.xpose.msra.mxu0 0
      %662 = vmatprep.mubr.bf16.mxu0 0
      %663 = vmatmul.mubr.bf16.gmra.mxu0 %v625
      %v664 = vpop.f32.mrf.mxu0
      %v665 = vadd.f32 %v571, %v664
      %v666 = vpop.f32.mrf.mxu0
      %v667 = vpop.f32.mrf.mxu0
      %v668 = vpop.f32.mrf.mxu0
      %669 = vdwg.mxu0
      %670 = vrot.lane.b32.xlu0 %v564, 96
      %v671 = vpop.permute.xlu0 %670
      %v673 = vsel %vm575, %v557, 0
      %v676 = vsel %vm575, %v671, 0
      %678 = vmatprep.subr.bf16.mxu0 0
      %679 = vmatpush1.bf16.xpose.msra.mxu0 0
      %680 = vmatprep.subr.bf16.mxu0 0
      %681 = vmatpush1.bf16.xpose.msra.mxu0 0
      %682 = vmatprep.subr.bf16.mxu0 0
      %683 = vmatpush1.bf16.xpose.msra.mxu0 0
      %684 = vmatprep.subr.bf16.mxu0 0
      %685 = vmatpush1.bf16.xpose.msra.mxu0 0
      %686 = vmatprep.subr.bf16.mxu0 0
      %687 = vmatpush1.bf16.xpose.msra.mxu0 0
      %688 = vmatprep.subr.bf16.mxu0 0
      %689 = vmatpush1.bf16.xpose.msra.mxu0 0
      %690 = vmatprep.subr.bf16.mxu0 0
      %691 = vmatpush1.bf16.xpose.msra.mxu0 0
      %692 = vmatprep.subr.bf16.mxu0 0
      %693 = vmatpush1.bf16.xpose.msra.mxu0 %v676
      %694 = vmatprep.subr.bf16.mxu0 0
      %695 = vmatpush2.bf16.xpose.msra.mxu0 0
      %696 = vmatprep.subr.bf16.mxu0 0
      %697 = vmatpush2.bf16.xpose.msra.mxu0 0
      %698 = vmatprep.subr.bf16.mxu0 0
      %699 = vmatpush2.bf16.xpose.msra.mxu0 0
      %700 = vmatprep.subr.bf16.mxu0 0
      %701 = vmatpush2.bf16.xpose.msra.mxu0 0
      %702 = vmatprep.subr.bf16.mxu0 0
      %703 = vmatpush2.bf16.xpose.msra.mxu0 0
      %704 = vmatprep.subr.bf16.mxu0 0
      %705 = vmatpush2.bf16.xpose.msra.mxu0 0
      %706 = vmatprep.subr.bf16.mxu0 0
      %707 = vmatpush2.bf16.xpose.msra.mxu0 0
      %708 = vmatprep.subr.bf16.mxu0 0
      %709 = vmatpush2.bf16.xpose.msra.mxu0 0
      %710 = vmatprep.mubr.bf16.mxu0 0
      %711 = vmatmul.mubr.bf16.gmra.mxu0 %v673
      %v712 = vpop.f32.mrf.mxu0
      %v713 = vadd.f32 %v571, %v712
      %v714 = vpop.f32.mrf.mxu0
      %v715 = vpop.f32.mrf.mxu0
      %v716 = vpop.f32.mrf.mxu0
      %717 = vdwg.mxu0
      %718 = vrot.lane.b32.xlu0 %v566, 96
      %v719 = vpop.permute.xlu0 %718
      %v721 = vsel %vm575, %v559, 0
      %v724 = vsel %vm575, %v719, 0
      %726 = vmatprep.subr.bf16.mxu0 0
      %727 = vmatpush1.bf16.xpose.msra.mxu0 0
      %728 = vmatprep.subr.bf16.mxu0 0
      %729 = vmatpush1.bf16.xpose.msra.mxu0 0
      %730 = vmatprep.subr.bf16.mxu0 0
      %731 = vmatpush1.bf16.xpose.msra.mxu0 0
      %732 = vmatprep.subr.bf16.mxu0 0
      %733 = vmatpush1.bf16.xpose.msra.mxu0 0
      %734 = vmatprep.subr.bf16.mxu0 0
      %735 = vmatpush1.bf16.xpose.msra.mxu0 0
      %736 = vmatprep.subr.bf16.mxu0 0
      %737 = vmatpush1.bf16.xpose.msra.mxu0 0
      %738 = vmatprep.subr.bf16.mxu0 0
      %739 = vmatpush1.bf16.xpose.msra.mxu0 0
      %740 = vmatprep.subr.bf16.mxu0 0
      %741 = vmatpush1.bf16.xpose.msra.mxu0 %v724
      %742 = vmatprep.subr.bf16.mxu0 0
      %743 = vmatpush2.bf16.xpose.msra.mxu0 0
      %744 = vmatprep.subr.bf16.mxu0 0
      %745 = vmatpush2.bf16.xpose.msra.mxu0 0
      %746 = vmatprep.subr.bf16.mxu0 0
      %747 = vmatpush2.bf16.xpose.msra.mxu0 0
      %748 = vmatprep.subr.bf16.mxu0 0
      %749 = vmatpush2.bf16.xpose.msra.mxu0 0
      %750 = vmatprep.subr.bf16.mxu0 0
      %751 = vmatpush2.bf16.xpose.msra.mxu0 0
      %752 = vmatprep.subr.bf16.mxu0 0
      %753 = vmatpush2.bf16.xpose.msra.mxu0 0
      %754 = vmatprep.subr.bf16.mxu0 0
      %755 = vmatpush2.bf16.xpose.msra.mxu0 0
      %756 = vmatprep.subr.bf16.mxu0 0
      %757 = vmatpush2.bf16.xpose.msra.mxu0 0
      %758 = vmatprep.mubr.bf16.mxu0 0
      %759 = vmatmul.mubr.bf16.gmra.mxu0 %v721
      %v760 = vpop.f32.mrf.mxu0
      %v761 = vadd.f32 %v571, %v760
      %v762 = vpop.f32.mrf.mxu0
      %v763 = vpop.f32.mrf.mxu0
      %v764 = vpop.f32.mrf.mxu0
      %765 = vdwg.mxu0
      %v766 = vsel %vm575, %v617, -inf
      %767 = vmax.xlane.f32.xlu0 %v766
      %v768 = vpop.xlane.xlu0 %767
      %v769 = vsel %vm575, %v665, -inf
      %770 = vmax.xlane.f32.xlu0 %v769
      %v771 = vpop.xlane.xlu0 %770
      %v772 = vsel %vm575, %v713, -inf
      %773 = vmax.xlane.f32.xlu0 %v772
      %v774 = vpop.xlane.xlu0 %773
      %v775 = vsel %vm575, %v761, -inf
      %776 = vmax.xlane.f32.xlu0 %v775
      %v777 = vpop.xlane.xlu0 %776
      %v778 = vsub.f32 %v617, %v768
      %v779 = vsub.f32 %v665, %v771
      %v780 = vsub.f32 %v713, %v774
      %v781 = vsub.f32 %v761, %v777
      %v782 = vmul.f32 %v778, 1.442695
      %v783 = vpow.pop %v782
      %v784 = vmul.f32 %v779, 1.442695
      %v785 = vpow.pop %v784
      %v786 = vmul.f32 %v780, 1.442695
      %v787 = vpow.pop %v786
      %v788 = vmul.f32 %v781, 1.442695
      %v789 = vpow.pop %v788
      %v790 = vsel %vm575, %v783, 0.0
      %791 = vadd.xlane.f32.xlu0 %v790
      %v792 = vpop.xlane.xlu0 %791
      %v793 = vsel %vm575, %v785, 0.0
      %794 = vadd.xlane.f32.xlu0 %v793
      %v795 = vpop.xlane.xlu0 %794
      %v796 = vsel %vm575, %v787, 0.0
      %797 = vadd.xlane.f32.xlu0 %v796
      %v798 = vpop.xlane.xlu0 %797
      %v799 = vsel %vm575, %v789, 0.0
      %800 = vadd.xlane.f32.xlu0 %v799
      %v801 = vpop.xlane.xlu0 %800
      %v802 = vmax.f32 %v792, 1e-09
      %v803 = vmax.f32 %v795, 1e-09
      %v804 = vmax.f32 %v798, 1e-09
      %v805 = vmax.f32 %v801, 1e-09
      %v806 = vrcp.pop %v802
      %v807 = vrcp.pop %v803
      %v808 = vrcp.pop %v804
      %v809 = vrcp.pop %v805
      %v810 = vmul.f32 %v783, %v806
      %v811 = vmul.f32 %v785, %v807
      %v812 = vmul.f32 %v787, %v808
      %v813 = vmul.f32 %v789, %v809
      %v814 = vpack.c.bf16 %v810, %v810
      %v815 = vpack.c.bf16 %v811, %v811
      %v816 = vpack.c.bf16 %v812, %v812
      %v817 = vpack.c.bf16 %v813, %v813
      %818 = vrot.lane.b32.xlu0 %v552, 64
      %v819 = vpop.permute.xlu0 %818
      %v821 = vsel %vm575, %v814, 0
      %vm823 = vcmask 1043456
      %v825 = vsel %vm823, %v819, 0
      %827 = vmatprep.subr.bf16.mxu0 0
      %828 = vmatpush1.bf16.msra.mxu0 0
      %829 = vmatprep.subr.bf16.mxu0 0
      %830 = vmatpush1.bf16.msra.mxu0 0
      %831 = vmatprep.subr.bf16.mxu0 0
      %832 = vmatpush1.bf16.msra.mxu0 0
      %833 = vmatprep.subr.bf16.mxu0 0
      %834 = vmatpush1.bf16.msra.mxu0 0
      %835 = vmatprep.subr.bf16.mxu0 0
      %836 = vmatpush1.bf16.msra.mxu0 0
      %837 = vmatprep.subr.bf16.mxu0 0
      %838 = vmatpush1.bf16.msra.mxu0 0
      %839 = vmatprep.subr.bf16.mxu0 0
      %840 = vmatpush1.bf16.msra.mxu0 0
      %841 = vmatprep.subr.bf16.mxu0 0
      %842 = vmatpush1.bf16.msra.mxu0 %v825
      %843 = vmatprep.subr.bf16.mxu0 0
      %844 = vmatpush2.bf16.msra.mxu0 0
      %845 = vmatprep.subr.bf16.mxu0 0
      %846 = vmatpush2.bf16.msra.mxu0 0
      %847 = vmatprep.subr.bf16.mxu0 0
      %848 = vmatpush2.bf16.msra.mxu0 0
      %849 = vmatprep.subr.bf16.mxu0 0
      %850 = vmatpush2.bf16.msra.mxu0 0
      %851 = vmatprep.subr.bf16.mxu0 0
      %852 = vmatpush2.bf16.msra.mxu0 0
      %853 = vmatprep.subr.bf16.mxu0 0
      %854 = vmatpush2.bf16.msra.mxu0 0
      %855 = vmatprep.subr.bf16.mxu0 0
      %856 = vmatpush2.bf16.msra.mxu0 0
      %857 = vmatprep.subr.bf16.mxu0 0
      %858 = vmatpush2.bf16.msra.mxu0 0
      %859 = vmatprep.mubr.bf16.mxu0 0
      %860 = vmatmul.mubr.bf16.gmra.mxu0 %v821
      %v861 = vpop.f32.mrf.mxu0
      %v862 = vadd.f32 0.0, %v861
      %v863 = vpop.f32.mrf.mxu0
      %v864 = vpop.f32.mrf.mxu0
      %v865 = vpop.f32.mrf.mxu0
      %866 = vdwg.mxu0
      %867 = vrot.lane.b32.xlu0 %v562, 64
      %v868 = vpop.permute.xlu0 %867
      %v870 = vsel %vm575, %v815, 0
      %v873 = vsel %vm823, %v868, 0
      %875 = vmatprep.subr.bf16.mxu0 0
      %876 = vmatpush1.bf16.msra.mxu0 0
      %877 = vmatprep.subr.bf16.mxu0 0
      %878 = vmatpush1.bf16.msra.mxu0 0
      %879 = vmatprep.subr.bf16.mxu0 0
      %880 = vmatpush1.bf16.msra.mxu0 0
      %881 = vmatprep.subr.bf16.mxu0 0
      %882 = vmatpush1.bf16.msra.mxu0 0
      %883 = vmatprep.subr.bf16.mxu0 0
      %884 = vmatpush1.bf16.msra.mxu0 0
      %885 = vmatprep.subr.bf16.mxu0 0
      %886 = vmatpush1.bf16.msra.mxu0 0
      %887 = vmatprep.subr.bf16.mxu0 0
      %888 = vmatpush1.bf16.msra.mxu0 0
      %889 = vmatprep.subr.bf16.mxu0 0
      %890 = vmatpush1.bf16.msra.mxu0 %v873
      %891 = vmatprep.subr.bf16.mxu0 0
      %892 = vmatpush2.bf16.msra.mxu0 0
      %893 = vmatprep.subr.bf16.mxu0 0
      %894 = vmatpush2.bf16.msra.mxu0 0
      %895 = vmatprep.subr.bf16.mxu0 0
      %896 = vmatpush2.bf16.msra.mxu0 0
      %897 = vmatprep.subr.bf16.mxu0 0
      %898 = vmatpush2.bf16.msra.mxu0 0
      %899 = vmatprep.subr.bf16.mxu0 0
      %900 = vmatpush2.bf16.msra.mxu0 0
      %901 = vmatprep.subr.bf16.mxu0 0
      %902 = vmatpush2.bf16.msra.mxu0 0
      %903 = vmatprep.subr.bf16.mxu0 0
      %904 = vmatpush2.bf16.msra.mxu0 0
      %905 = vmatprep.subr.bf16.mxu0 0
      %906 = vmatpush2.bf16.msra.mxu0 0
      %907 = vmatprep.mubr.bf16.mxu0 0
      %908 = vmatmul.mubr.bf16.gmra.mxu0 %v870
      %v909 = vpop.f32.mrf.mxu0
      %v910 = vadd.f32 0.0, %v909
      %v911 = vpop.f32.mrf.mxu0
      %v912 = vpop.f32.mrf.mxu0
      %v913 = vpop.f32.mrf.mxu0
      %914 = vdwg.mxu0
      %915 = vrot.lane.b32.xlu0 %v564, 64
      %v916 = vpop.permute.xlu0 %915
      %v918 = vsel %vm575, %v816, 0
      %v921 = vsel %vm823, %v916, 0
      %923 = vmatprep.subr.bf16.mxu0 0
      %924 = vmatpush1.bf16.msra.mxu0 0
      %925 = vmatprep.subr.bf16.mxu0 0
      %926 = vmatpush1.bf16.msra.mxu0 0
      %927 = vmatprep.subr.bf16.mxu0 0
      %928 = vmatpush1.bf16.msra.mxu0 0
      %929 = vmatprep.subr.bf16.mxu0 0
      %930 = vmatpush1.bf16.msra.mxu0 0
      %931 = vmatprep.subr.bf16.mxu0 0
      %932 = vmatpush1.bf16.msra.mxu0 0
      %933 = vmatprep.subr.bf16.mxu0 0
      %934 = vmatpush1.bf16.msra.mxu0 0
      %935 = vmatprep.subr.bf16.mxu0 0
      %936 = vmatpush1.bf16.msra.mxu0 0
      %937 = vmatprep.subr.bf16.mxu0 0
      %938 = vmatpush1.bf16.msra.mxu0 %v921
      %939 = vmatprep.subr.bf16.mxu0 0
      %940 = vmatpush2.bf16.msra.mxu0 0
      %941 = vmatprep.subr.bf16.mxu0 0
      %942 = vmatpush2.bf16.msra.mxu0 0
      %943 = vmatprep.subr.bf16.mxu0 0
      %944 = vmatpush2.bf16.msra.mxu0 0
      %945 = vmatprep.subr.bf16.mxu0 0
      %946 = vmatpush2.bf16.msra.mxu0 0
      %947 = vmatprep.subr.bf16.mxu0 0
      %948 = vmatpush2.bf16.msra.mxu0 0
      %949 = vmatprep.subr.bf16.mxu0 0
      %950 = vmatpush2.bf16.msra.mxu0 0
      %951 = vmatprep.subr.bf16.mxu0 0
      %952 = vmatpush2.bf16.msra.mxu0 0
      %953 = vmatprep.subr.bf16.mxu0 0
      %954 = vmatpush2.bf16.msra.mxu0 0
      %955 = vmatprep.mubr.bf16.mxu0 0
      %956 = vmatmul.mubr.bf16.gmra.mxu0 %v918
      %v957 = vpop.f32.mrf.mxu0
      %v958 = vadd.f32 0.0, %v957
      %v959 = vpop.f32.mrf.mxu0
      %v960 = vpop.f32.mrf.mxu0
      %v961 = vpop.f32.mrf.mxu0
      %962 = vdwg.mxu0
      %963 = vrot.lane.b32.xlu0 %v566, 64
      %v964 = vpop.permute.xlu0 %963
      %v966 = vsel %vm575, %v817, 0
      %v969 = vsel %vm823, %v964, 0
      %971 = vmatprep.subr.bf16.mxu0 0
      %972 = vmatpush1.bf16.msra.mxu0 0
      %973 = vmatprep.subr.bf16.mxu0 0
      %974 = vmatpush1.bf16.msra.mxu0 0
      %975 = vmatprep.subr.bf16.mxu0 0
      %976 = vmatpush1.bf16.msra.mxu0 0
      %977 = vmatprep.subr.bf16.mxu0 0
      %978 = vmatpush1.bf16.msra.mxu0 0
      %979 = vmatprep.subr.bf16.mxu0 0
      %980 = vmatpush1.bf16.msra.mxu0 0
      %981 = vmatprep.subr.bf16.mxu0 0
      %982 = vmatpush1.bf16.msra.mxu0 0
      %983 = vmatprep.subr.bf16.mxu0 0
      %984 = vmatpush1.bf16.msra.mxu0 0
      %985 = vmatprep.subr.bf16.mxu0 0
      %986 = vmatpush1.bf16.msra.mxu0 %v969
      %987 = vmatprep.subr.bf16.mxu0 0
      %988 = vmatpush2.bf16.msra.mxu0 0
      %989 = vmatprep.subr.bf16.mxu0 0
      %990 = vmatpush2.bf16.msra.mxu0 0
      %991 = vmatprep.subr.bf16.mxu0 0
      %992 = vmatpush2.bf16.msra.mxu0 0
      %993 = vmatprep.subr.bf16.mxu0 0
      %994 = vmatpush2.bf16.msra.mxu0 0
      %995 = vmatprep.subr.bf16.mxu0 0
      %996 = vmatpush2.bf16.msra.mxu0 0
      %997 = vmatprep.subr.bf16.mxu0 0
      %998 = vmatpush2.bf16.msra.mxu0 0
      %999 = vmatprep.subr.bf16.mxu0 0
      %1000 = vmatpush2.bf16.msra.mxu0 0
      %1001 = vmatprep.subr.bf16.mxu0 0
      %1002 = vmatpush2.bf16.msra.mxu0 0
      %1003 = vmatprep.mubr.bf16.mxu0 0
      %1004 = vmatmul.mubr.bf16.gmra.mxu0 %v966
      %v1005 = vpop.f32.mrf.mxu0
      %v1006 = vadd.f32 0.0, %v1005
      %v1007 = vpop.f32.mrf.mxu0
      %v1008 = vpop.f32.mrf.mxu0
      %v1009 = vpop.f32.mrf.mxu0
      %1010 = vdwg.mxu0
      %1012 = vrot.lane.b32.xlu0 %v910, 8
      %v1013 = vpop.permute.xlu0 %1012
      %1016 = vrot.lane.b32.xlu0 %v958, 16
      %v1017 = vpop.permute.xlu0 %1016
      %1020 = vrot.lane.b32.xlu0 %v1006, 24
      %v1021 = vpop.permute.xlu0 %1020
      %v1023 = vsel %vm575, %v862, %v1013
      %vm1024 = vcmask 130048
      %v1025 = vsel %vm1024, %v1023, %v1017
      %vm1026 = vcmask 195584
      %v1027 = vsel %vm1026, %v1025, %v1021
      %v1028 = vpack.c.bf16 %v1027, %v1027
      %v1029 = vld [vmem:[%s4] sm:$0xf]
      %v1030 = vld [vmem:[%s4 + $0x4] sm:$0xf]
      %v1031 = vld [vmem:[%s4 + $0x8] sm:$0xf]
      %v1032 = vld [vmem:[%s4 + $0xc] sm:$0xf]
      %v1033 = vld [vmem:[%s5] sm:$0x1]
      %v1035 = vlaneseq
      %v1036 = vshrl.u32 %v1035, 7
      %v1037 = vsub.s32 0, %v1036
      %v1038 = vrot.slane %v1033, %v1037
      %v1044 = vunpack.c.l.b16 %v1029
      %v1045 = vunpack.c.l.b16 %v1030
      %v1046 = vunpack.c.l.b16 %v1031
      %v1047 = vunpack.c.l.b16 %v1032
      %v1048 = vpack.c.b16 %v1045, %v1044
      %v1049 = vpack.c.b16 %v1047, %v1046
      %v1053 = vsel %vm506, %v1028, 0
      %1055 = vmatprep.subr.bf16.mxu0 0
      %1056 = vmatpush1.bf16.msra.mxu0 0
      %1057 = vmatprep.subr.bf16.mxu0 0
      %1058 = vmatpush1.bf16.msra.mxu0 0
      %1059 = vmatprep.subr.bf16.mxu0 0
      %1060 = vmatpush1.bf16.msra.mxu0 0
      %1061 = vmatprep.subr.bf16.mxu0 0
      %1062 = vmatpush1.bf16.msra.mxu0 0
      %1063 = vmatprep.subr.bf16.mxu0 0
      %1064 = vmatpush1.bf16.msra.mxu0 0
      %1065 = vmatprep.subr.bf16.mxu0 0
      %1066 = vmatpush1.bf16.msra.mxu0 0
      %1067 = vmatprep.subr.bf16.mxu0 0
      %1068 = vmatpush1.bf16.msra.mxu0 %v1049
      %1069 = vmatprep.subr.bf16.mxu0 0
      %1070 = vmatpush1.bf16.msra.mxu0 %v1048
      %1071 = vmatprep.subr.bf16.mxu0 0
      %1072 = vmatpush2.bf16.msra.mxu0 0
      %1073 = vmatprep.subr.bf16.mxu0 0
      %1074 = vmatpush2.bf16.msra.mxu0 0
      %1075 = vmatprep.subr.bf16.mxu0 0
      %1076 = vmatpush2.bf16.msra.mxu0 0
      %1077 = vmatprep.subr.bf16.mxu0 0
      %1078 = vmatpush2.bf16.msra.mxu0 0
      %1079 = vmatprep.subr.bf16.mxu0 0
      %1080 = vmatpush2.bf16.msra.mxu0 0
      %1081 = vmatprep.subr.bf16.mxu0 0
      %1082 = vmatpush2.bf16.msra.mxu0 0
      %1083 = vmatprep.subr.bf16.mxu0 0
      %1084 = vmatpush2.bf16.msra.mxu0 0
      %1085 = vmatprep.subr.bf16.mxu0 0
      %1086 = vmatpush2.bf16.msra.mxu0 0
      %1087 = vmatprep.mubr.bf16.mxu0 0
      %1088 = vmatmul.mubr.bf16.gmra.mxu0 %v1053
      %v1089 = vpop.f32.mrf.mxu0
      %v1090 = vadd.f32 %v1038, %v1089
      %v1091 = vpop.f32.mrf.mxu0
      %v1092 = vpop.f32.mrf.mxu0
      %v1093 = vpop.f32.mrf.mxu0
      %1094 = vdwg.mxu0
      %v1095 = vadd.f32 %v478, %v1090
      %v1096 = vld [vmem:[%s6] sm:$0x1]
      %v1097 = vld [vmem:[%s7] sm:$0x1]
      %v1098 = vsel %vm506, %v1095, 0.0
      %1099 = vadd.xlane.f32.xlu0 %v1098
      %v1100 = vpop.xlane.xlu0 %1099
      %v1101 = vrcp.pop 32.0
      %v1102 = vmul.f32 %v1100, %v1101
      %v1103 = vsub.f32 %v1095, %v1102
      %v1104 = vmul.f32 %v1103, %v1103
      %v1105 = vsel %vm506, %v1104, 0.0
      %1106 = vadd.xlane.f32.xlu0 %v1105
      %v1107 = vpop.xlane.xlu0 %1106
      %v1108 = vmul.f32 %v1107, %v1101
      %v1109 = vadd.f32 %v1108, 1e-05
      %v1110 = vrsqrt.pop %v1109
      %v1111 = vmul.f32 %v1103, %v1110
      %v1113 = vlaneseq
      %v1114 = vshrl.u32 %v1113, 7
      %v1115 = vsub.s32 0, %v1114
      %v1116 = vrot.slane %v1096, %v1115
      %v1118 = vmul.f32 %v1111, %v1116
      %v1120 = vlaneseq
      %v1121 = vshrl.u32 %v1120, 7
      %v1122 = vsub.s32 0, %v1121
      %v1123 = vrot.slane %v1097, %v1122
      %v1125 = vadd.f32 %v1118, %v1123
      %v1126 = vpack.c.bf16 %v1125, %v1125
      %v1127 = vld [vmem:[%s8] sm:$0xf]
      %v1128 = vld [vmem:[%s8 + $0x4] sm:$0xf]
      %v1129 = vld [vmem:[%s8 + $0x8] sm:$0xf]
      %v1130 = vld [vmem:[%s8 + $0xc] sm:$0xf]
      %v1131 = vld [vmem:[%s9] sm:$0x1]
      %v1133 = vlaneseq
      %v1134 = vshrl.u32 %v1133, 7
      %v1135 = vsub.s32 0, %v1134
      %v1136 = vrot.slane %v1131, %v1135
      %v1142 = vunpack.c.l.b16 %v1127
      %v1143 = vunpack.c.l.b16 %v1128
      %v1144 = vunpack.c.l.b16 %v1129
      %v1145 = vunpack.c.l.b16 %v1130
      %v1146 = vpack.c.b16 %v1143, %v1142
      %v1147 = vpack.c.b16 %v1145, %v1144
      %v1151 = vsel %vm506, %v1126, 0
      %1153 = vmatprep.subr.bf16.mxu0 0
      %1154 = vmatpush1.bf16.msra.mxu0 0
      %1155 = vmatprep.subr.bf16.mxu0 0
      %1156 = vmatpush1.bf16.msra.mxu0 0
      %1157 = vmatprep.subr.bf16.mxu0 0
      %1158 = vmatpush1.bf16.msra.mxu0 0
      %1159 = vmatprep.subr.bf16.mxu0 0
      %1160 = vmatpush1.bf16.msra.mxu0 0
      %1161 = vmatprep.subr.bf16.mxu0 0
      %1162 = vmatpush1.bf16.msra.mxu0 0
      %1163 = vmatprep.subr.bf16.mxu0 0
      %1164 = vmatpush1.bf16.msra.mxu0 0
      %1165 = vmatprep.subr.bf16.mxu0 0
      %1166 = vmatpush1.bf16.msra.mxu0 %v1147
      %1167 = vmatprep.subr.bf16.mxu0 0
      %1168 = vmatpush1.bf16.msra.mxu0 %v1146
      %1169 = vmatprep.subr.bf16.mxu0 0
      %1170 = vmatpush2.bf16.msra.mxu0 0
      %1171 = vmatprep.subr.bf16.mxu0 0
      %1172 = vmatpush2.bf16.msra.mxu0 0
      %1173 = vmatprep.subr.bf16.mxu0 0
      %1174 = vmatpush2.bf16.msra.mxu0 0
      %1175 = vmatprep.subr.bf16.mxu0 0
      %1176 = vmatpush2.bf16.msra.mxu0 0
      %1177 = vmatprep.subr.bf16.mxu0 0
      %1178 = vmatpush2.bf16.msra.mxu0 0
      %1179 = vmatprep.subr.bf16.mxu0 0
      %1180 = vmatpush2.bf16.msra.mxu0 0
      %1181 = vmatprep.subr.bf16.mxu0 0
      %1182 = vmatpush2.bf16.msra.mxu0 0
      %1183 = vmatprep.subr.bf16.mxu0 0
      %1184 = vmatpush2.bf16.msra.mxu0 0
      %1185 = vmatprep.mubr.bf16.mxu0 0
      %1186 = vmatmul.mubr.bf16.gmra.mxu0 %v1151
      %v1187 = vpop.f32.mrf.mxu0
      %v1188 = vadd.f32 %v1136, %v1187
      %v1189 = vpop.f32.mrf.mxu0
      %v1190 = vpop.f32.mrf.mxu0
      %v1191 = vpop.f32.mrf.mxu0
      %1192 = vdwg.mxu0
      %v1193 = vmax.f32 %v1188, 0.0
      %v1194 = vpack.c.bf16 %v1193, %v1193
      %v1195 = vld [vmem:[%s10] sm:$0xf]
      %v1196 = vld [vmem:[%s10 + $0x4] sm:$0xf]
      %v1197 = vld [vmem:[%s10 + $0x8] sm:$0xf]
      %v1198 = vld [vmem:[%s10 + $0xc] sm:$0xf]
      %v1199 = vld [vmem:[%s10 + $0x10] sm:$0xf]
      %v1200 = vld [vmem:[%s10 + $0x14] sm:$0xf]
      %v1201 = vld [vmem:[%s10 + $0x18] sm:$0xf]
      %v1202 = vld [vmem:[%s10 + $0x1c] sm:$0xf]
      %v1203 = vld [vmem:[%s10 + $0x20] sm:$0xf]
      %v1204 = vld [vmem:[%s10 + $0x24] sm:$0xf]
      %v1205 = vld [vmem:[%s10 + $0x28] sm:$0xf]
      %v1206 = vld [vmem:[%s10 + $0x2c] sm:$0xf]
      %v1207 = vld [vmem:[%s10 + $0x30] sm:$0xf]
      %v1208 = vld [vmem:[%s10 + $0x34] sm:$0xf]
      %v1209 = vld [vmem:[%s10 + $0x38] sm:$0xf]
      %v1210 = vld [vmem:[%s10 + $0x3c] sm:$0xf]
      %v1211 = vld [vmem:[%s11] sm:$0x1]
      %v1213 = vlaneseq
      %v1214 = vshrl.u32 %v1213, 7
      %v1215 = vsub.s32 0, %v1214
      %v1216 = vrot.slane %v1211, %v1215
      %v1234 = vunpack.c.l.b16 %v1195
      %v1235 = vunpack.c.l.b16 %v1196
      %v1236 = vunpack.c.l.b16 %v1197
      %v1237 = vunpack.c.l.b16 %v1198
      %v1238 = vunpack.c.l.b16 %v1199
      %v1239 = vunpack.c.l.b16 %v1200
      %v1240 = vunpack.c.l.b16 %v1201
      %v1241 = vunpack.c.l.b16 %v1202
      %v1242 = vunpack.c.l.b16 %v1203
      %v1243 = vunpack.c.l.b16 %v1204
      %v1244 = vunpack.c.l.b16 %v1205
      %v1245 = vunpack.c.l.b16 %v1206
      %v1246 = vunpack.c.l.b16 %v1207
      %v1247 = vunpack.c.l.b16 %v1208
      %v1248 = vunpack.c.l.b16 %v1209
      %v1249 = vunpack.c.l.b16 %v1210
      %v1250 = vpack.c.b16 %v1235, %v1234
      %v1251 = vpack.c.b16 %v1237, %v1236
      %v1252 = vpack.c.b16 %v1239, %v1238
      %v1253 = vpack.c.b16 %v1241, %v1240
      %v1254 = vpack.c.b16 %v1243, %v1242
      %v1255 = vpack.c.b16 %v1245, %v1244
      %v1256 = vpack.c.b16 %v1247, %v1246
      %v1257 = vpack.c.b16 %v1249, %v1248
      %1266 = vmatprep.subr.bf16.mxu0 0
      %1267 = vmatpush1.bf16.msra.mxu0 %v1257
      %1268 = vmatprep.subr.bf16.mxu0 0
      %1269 = vmatpush1.bf16.msra.mxu0 %v1256
      %1270 = vmatprep.subr.bf16.mxu0 0
      %1271 = vmatpush1.bf16.msra.mxu0 %v1255
      %1272 = vmatprep.subr.bf16.mxu0 0
      %1273 = vmatpush1.bf16.msra.mxu0 %v1254
      %1274 = vmatprep.subr.bf16.mxu0 0
      %1275 = vmatpush1.bf16.msra.mxu0 %v1253
      %1276 = vmatprep.subr.bf16.mxu0 0
      %1277 = vmatpush1.bf16.msra.mxu0 %v1252
      %1278 = vmatprep.subr.bf16.mxu0 0
      %1279 = vmatpush1.bf16.msra.mxu0 %v1251
      %1280 = vmatprep.subr.bf16.mxu0 0
      %1281 = vmatpush1.bf16.msra.mxu0 %v1250
      %1282 = vmatprep.subr.bf16.mxu0 0
      %1283 = vmatpush2.bf16.msra.mxu0 0
      %1284 = vmatprep.subr.bf16.mxu0 0
      %1285 = vmatpush2.bf16.msra.mxu0 0
      %1286 = vmatprep.subr.bf16.mxu0 0
      %1287 = vmatpush2.bf16.msra.mxu0 0
      %1288 = vmatprep.subr.bf16.mxu0 0
      %1289 = vmatpush2.bf16.msra.mxu0 0
      %1290 = vmatprep.subr.bf16.mxu0 0
      %1291 = vmatpush2.bf16.msra.mxu0 0
      %1292 = vmatprep.subr.bf16.mxu0 0
      %1293 = vmatpush2.bf16.msra.mxu0 0
      %1294 = vmatprep.subr.bf16.mxu0 0
      %1295 = vmatpush2.bf16.msra.mxu0 0
      %1296 = vmatprep.subr.bf16.mxu0 0
      %1297 = vmatpush2.bf16.msra.mxu0 0
      %1298 = vmatprep.mubr.bf16.mxu0 0
      %1299 = vmatmul.mubr.bf16.gmra.mxu0 %v1194
      %v1300 = vpop.f32.mrf.mxu0
      %v1301 = vadd.f32 %v1216, %v1300
      %v1302 = vpop.f32.mrf.mxu0
      %v1303 = vpop.f32.mrf.mxu0
      %v1304 = vpop.f32.mrf.mxu0
      %1305 = vdwg.mxu0
      %v1306 = vadd.f32 %v1125, %v1301
      %v1307 = vld [vmem:[%s12] sm:$0x1]
      %v1308 = vld [vmem:[%s13] sm:$0x1]
      %v1309 = vsel %vm506, %v1306, 0.0
      %1310 = vadd.xlane.f32.xlu0 %v1309
      %v1311 = vpop.xlane.xlu0 %1310
      %v1312 = vmul.f32 %v1311, %v1101
      %v1313 = vsub.f32 %v1306, %v1312
      %v1314 = vmul.f32 %v1313, %v1313
      %v1315 = vsel %vm506, %v1314, 0.0
      %1316 = vadd.xlane.f32.xlu0 %v1315
      %v1317 = vpop.xlane.xlu0 %1316
      %v1318 = vmul.f32 %v1317, %v1101
      %v1319 = vadd.f32 %v1318, 1e-05
      %v1320 = vrsqrt.pop %v1319
      %v1321 = vmul.f32 %v1313, %v1320
      %v1323 = vlaneseq
      %v1324 = vshrl.u32 %v1323, 7
      %v1325 = vsub.s32 0, %v1324
      %v1326 = vrot.slane %v1307, %v1325
      %v1328 = vmul.f32 %v1321, %v1326
      %v1330 = vlaneseq
      %v1331 = vshrl.u32 %v1330, 7
      %v1332 = vsub.s32 0, %v1331
      %v1333 = vrot.slane %v1308, %v1332
      %v1335 = vadd.f32 %v1328, %v1333
      %v1336 = vpack.c.bf16 %v1335, %v1335
      %s1337 = scalar_lea.vmem %s2, 16
      %v1338 = vld [vmem:[%s1337] sm:$0xf]
      %v1339 = vld [vmem:[%s1337 + $0x4] sm:$0xf]
      %v1340 = vld [vmem:[%s1337 + $0x8] sm:$0xf]
      %v1341 = vld [vmem:[%s1337 + $0xc] sm:$0xf]
      %s1342 = scalar_lea.vmem %s3, 1
      %v1343 = vld [vmem:[%s1342] sm:$0x1]
      %v1345 = vlaneseq
      %v1346 = vshrl.u32 %v1345, 7
      %v1347 = vsub.s32 0, %v1346
      %v1348 = vrot.slane %v1343, %v1347
      %v1354 = vunpack.c.l.b16 %v1338
      %v1355 = vunpack.c.l.b16 %v1339
      %v1356 = vunpack.c.l.b16 %v1340
      %v1357 = vunpack.c.l.b16 %v1341
      %v1358 = vpack.c.b16 %v1355, %v1354
      %v1359 = vpack.c.b16 %v1357, %v1356
      %v1363 = vsel %vm506, %v1336, 0
      %1365 = vmatprep.subr.bf16.mxu0 0
      %1366 = vmatpush1.bf16.msra.mxu0 0
      %1367 = vmatprep.subr.bf16.mxu0 0
      %1368 = vmatpush1.bf16.msra.mxu0 0
      %1369 = vmatprep.subr.bf16.mxu0 0
      %1370 = vmatpush1.bf16.msra.mxu0 0
      %1371 = vmatprep.subr.bf16.mxu0 0
      %1372 = vmatpush1.bf16.msra.mxu0 0
      %1373 = vmatprep.subr.bf16.mxu0 0
      %1374 = vmatpush1.bf16.msra.mxu0 0
      %1375 = vmatprep.subr.bf16.mxu0 0
      %1376 = vmatpush1.bf16.msra.mxu0 0
      %1377 = vmatprep.subr.bf16.mxu0 0
      %1378 = vmatpush1.bf16.msra.mxu0 %v1359
      %1379 = vmatprep.subr.bf16.mxu0 0
      %1380 = vmatpush1.bf16.msra.mxu0 %v1358
      %1381 = vmatprep.subr.bf16.mxu0 0
      %1382 = vmatpush2.bf16.msra.mxu0 0
      %1383 = vmatprep.subr.bf16.mxu0 0
      %1384 = vmatpush2.bf16.msra.mxu0 0
      %1385 = vmatprep.subr.bf16.mxu0 0
      %1386 = vmatpush2.bf16.msra.mxu0 0
      %1387 = vmatprep.subr.bf16.mxu0 0
      %1388 = vmatpush2.bf16.msra.mxu0 0
      %1389 = vmatprep.subr.bf16.mxu0 0
      %1390 = vmatpush2.bf16.msra.mxu0 0
      %1391 = vmatprep.subr.bf16.mxu0 0
      %1392 = vmatpush2.bf16.msra.mxu0 0
      %1393 = vmatprep.subr.bf16.mxu0 0
      %1394 = vmatpush2.bf16.msra.mxu0 0
      %1395 = vmatprep.subr.bf16.mxu0 0
      %1396 = vmatpush2.bf16.msra.mxu0 0
      %1397 = vmatprep.mubr.bf16.mxu0 0
      %1398 = vmatmul.mubr.bf16.gmra.mxu0 %v1363
      %v1399 = vpop.f32.mrf.mxu0
      %v1400 = vadd.f32 %v1348, %v1399
      %v1401 = vpop.f32.mrf.mxu0
      %v1402 = vpop.f32.mrf.mxu0
      %v1403 = vpop.f32.mrf.mxu0
      %1404 = vdwg.mxu0
      %v1405 = vmul.f32 %v1400, 0.35355338
      %v1406 = vpack.c.bf16 %v1405, %v1405
      %v1407 = vpack.c.bf16 %v1400, %v1400
      %1409 = vrot.lane.b32.xlu0 %v1406, 120
      %v1410 = vpop.permute.xlu0 %1409
      %1411 = vrot.lane.b32.xlu0 %v1406, 112
      %v1412 = vpop.permute.xlu0 %1411
      %1413 = vrot.lane.b32.xlu0 %v1406, 104
      %v1414 = vpop.permute.xlu0 %1413
      %1416 = vrot.lane.b32.xlu0 %v1407, 120
      %v1417 = vpop.permute.xlu0 %1416
      %1418 = vrot.lane.b32.xlu0 %v1407, 112
      %v1419 = vpop.permute.xlu0 %1418
      %1420 = vrot.lane.b32.xlu0 %v1407, 104
      %v1421 = vpop.permute.xlu0 %1420
      %1422 = vrot.lane.b32.xlu0 %v1407, 96
      %v1423 = vpop.permute.xlu0 %1422
      %v1425 = vsel %vm575, %v1406, 0
      %v1428 = vsel %vm575, %v1423, 0
      %1430 = vmatprep.subr.bf16.mxu0 0
      %1431 = vmatpush1.bf16.xpose.msra.mxu0 0
      %1432 = vmatprep.subr.bf16.mxu0 0
      %1433 = vmatpush1.bf16.xpose.msra.mxu0 0
      %1434 = vmatprep.subr.bf16.mxu0 0
      %1435 = vmatpush1.bf16.xpose.msra.mxu0 0
      %1436 = vmatprep.subr.bf16.mxu0 0
      %1437 = vmatpush1.bf16.xpose.msra.mxu0 0
      %1438 = vmatprep.subr.bf16.mxu0 0
      %1439 = vmatpush1.bf16.xpose.msra.mxu0 0
      %1440 = vmatprep.subr.bf16.mxu0 0
      %1441 = vmatpush1.bf16.xpose.msra.mxu0 0
      %1442 = vmatprep.subr.bf16.mxu0 0
      %1443 = vmatpush1.bf16.xpose.msra.mxu0 0
      %1444 = vmatprep.subr.bf16.mxu0 0
      %1445 = vmatpush1.bf16.xpose.msra.mxu0 %v1428
      %1446 = vmatprep.subr.bf16.mxu0 0
      %1447 = vmatpush2.bf16.xpose.msra.mxu0 0
      %1448 = vmatprep.subr.bf16.mxu0 0
      %1449 = vmatpush2.bf16.xpose.msra.mxu0 0
      %1450 = vmatprep.subr.bf16.mxu0 0
      %1451 = vmatpush2.bf16.xpose.msra.mxu0 0
      %1452 = vmatprep.subr.bf16.mxu0 0
      %1453 = vmatpush2.bf16.xpose.msra.mxu0 0
      %1454 = vmatprep.subr.bf16.mxu0 0
      %1455 = vmatpush2.bf16.xpose.msra.mxu0 0
      %1456 = vmatprep.subr.bf16.mxu0 0
      %1457 = vmatpush2.bf16.xpose.msra.mxu0 0
      %1458 = vmatprep.subr.bf16.mxu0 0
      %1459 = vmatpush2.bf16.xpose.msra.mxu0 0
      %1460 = vmatprep.subr.bf16.mxu0 0
      %1461 = vmatpush2.bf16.xpose.msra.mxu0 0
      %1462 = vmatprep.mubr.bf16.mxu0 0
      %1463 = vmatmul.mubr.bf16.gmra.mxu0 %v1425
      %v1464 = vpop.f32.mrf.mxu0
      %v1465 = vadd.f32 %v571, %v1464
      %v1466 = vpop.f32.mrf.mxu0
      %v1467 = vpop.f32.mrf.mxu0
      %v1468 = vpop.f32.mrf.mxu0
      %1469 = vdwg.mxu0
      %1470 = vrot.lane.b32.xlu0 %v1417, 96
      %v1471 = vpop.permute.xlu0 %1470
      %v1473 = vsel %vm575, %v1410, 0
      %v1476 = vsel %vm575, %v1471, 0
      %1478 = vmatprep.subr.bf16.mxu0 0
      %1479 = vmatpush1.bf16.xpose.msra.mxu0 0
      %1480 = vmatprep.subr.bf16.mxu0 0
      %1481 = vmatpush1.bf16.xpose.msra.mxu0 0
      %1482 = vmatprep.subr.bf16.mxu0 0
      %1483 = vmatpush1.bf16.xpose.msra.mxu0 0
      %1484 = vmatprep.subr.bf16.mxu0 0
      %1485 = vmatpush1.bf16.xpose.msra.mxu0 0
      %1486 = vmatprep.subr.bf16.mxu0 0
      %1487 = vmatpush1.bf16.xpose.msra.mxu0 0
      %1488 = vmatprep.subr.bf16.mxu0 0
      %1489 = vmatpush1.bf16.xpose.msra.mxu0 0
      %1490 = vmatprep.subr.bf16.mxu0 0
      %1491 = vmatpush1.bf16.xpose.msra.mxu0 0
      %1492 = vmatprep.subr.bf16.mxu0 0
      %1493 = vmatpush1.bf16.xpose.msra.mxu0 %v1476
      %1494 = vmatprep.subr.bf16.mxu0 0
      %1495 = vmatpush2.bf16.xpose.msra.mxu0 0
      %1496 = vmatprep.subr.bf16.mxu0 0
      %1497 = vmatpush2.bf16.xpose.msra.mxu0 0
      %1498 = vmatprep.subr.bf16.mxu0 0
      %1499 = vmatpush2.bf16.xpose.msra.mxu0 0
      %1500 = vmatprep.subr.bf16.mxu0 0
      %1501 = vmatpush2.bf16.xpose.msra.mxu0 0
      %1502 = vmatprep.subr.bf16.mxu0 0
      %1503 = vmatpush2.bf16.xpose.msra.mxu0 0
      %1504 = vmatprep.subr.bf16.mxu0 0
      %1505 = vmatpush2.bf16.xpose.msra.mxu0 0
      %1506 = vmatprep.subr.bf16.mxu0 0
      %1507 = vmatpush2.bf16.xpose.msra.mxu0 0
      %1508 = vmatprep.subr.bf16.mxu0 0
      %1509 = vmatpush2.bf16.xpose.msra.mxu0 0
      %1510 = vmatprep.mubr.bf16.mxu0 0
      %1511 = vmatmul.mubr.bf16.gmra.mxu0 %v1473
      %v1512 = vpop.f32.mrf.mxu0
      %v1513 = vadd.f32 %v571, %v1512
      %v1514 = vpop.f32.mrf.mxu0
      %v1515 = vpop.f32.mrf.mxu0
      %v1516 = vpop.f32.mrf.mxu0
      %1517 = vdwg.mxu0
      %1518 = vrot.lane.b32.xlu0 %v1419, 96
      %v1519 = vpop.permute.xlu0 %1518
      %v1521 = vsel %vm575, %v1412, 0
      %v1524 = vsel %vm575, %v1519, 0
      %1526 = vmatprep.subr.bf16.mxu0 0
      %1527 = vmatpush1.bf16.xpose.msra.mxu0 0
      %1528 = vmatprep.subr.bf16.mxu0 0
      %1529 = vmatpush1.bf16.xpose.msra.mxu0 0
      %1530 = vmatprep.subr.bf16.mxu0 0
      %1531 = vmatpush1.bf16.xpose.msra.mxu0 0
      %1532 = vmatprep.subr.bf16.mxu0 0
      %1533 = vmatpush1.bf16.xpose.msra.mxu0 0
      %1534 = vmatprep.subr.bf16.mxu0 0
      %1535 = vmatpush1.bf16.xpose.msra.mxu0 0
      %1536 = vmatprep.subr.bf16.mxu0 0
      %1537 = vmatpush1.bf16.xpose.msra.mxu0 0
      %1538 = vmatprep.subr.bf16.mxu0 0
      %1539 = vmatpush1.bf16.xpose.msra.mxu0 0
      %1540 = vmatprep.subr.bf16.mxu0 0
      %1541 = vmatpush1.bf16.xpose.msra.mxu0 %v1524
      %1542 = vmatprep.subr.bf16.mxu0 0
      %1543 = vmatpush2.bf16.xpose.msra.mxu0 0
      %1544 = vmatprep.subr.bf16.mxu0 0
      %1545 = vmatpush2.bf16.xpose.msra.mxu0 0
      %1546 = vmatprep.subr.bf16.mxu0 0
      %1547 = vmatpush2.bf16.xpose.msra.mxu0 0
      %1548 = vmatprep.subr.bf16.mxu0 0
      %1549 = vmatpush2.bf16.xpose.msra.mxu0 0
      %1550 = vmatprep.subr.bf16.mxu0 0
      %1551 = vmatpush2.bf16.xpose.msra.mxu0 0
      %1552 = vmatprep.subr.bf16.mxu0 0
      %1553 = vmatpush2.bf16.xpose.msra.mxu0 0
      %1554 = vmatprep.subr.bf16.mxu0 0
      %1555 = vmatpush2.bf16.xpose.msra.mxu0 0
      %1556 = vmatprep.subr.bf16.mxu0 0
      %1557 = vmatpush2.bf16.xpose.msra.mxu0 0
      %1558 = vmatprep.mubr.bf16.mxu0 0
      %1559 = vmatmul.mubr.bf16.gmra.mxu0 %v1521
      %v1560 = vpop.f32.mrf.mxu0
      %v1561 = vadd.f32 %v571, %v1560
      %v1562 = vpop.f32.mrf.mxu0
      %v1563 = vpop.f32.mrf.mxu0
      %v1564 = vpop.f32.mrf.mxu0
      %1565 = vdwg.mxu0
      %1566 = vrot.lane.b32.xlu0 %v1421, 96
      %v1567 = vpop.permute.xlu0 %1566
      %v1569 = vsel %vm575, %v1414, 0
      %v1572 = vsel %vm575, %v1567, 0
      %1574 = vmatprep.subr.bf16.mxu0 0
      %1575 = vmatpush1.bf16.xpose.msra.mxu0 0
      %1576 = vmatprep.subr.bf16.mxu0 0
      %1577 = vmatpush1.bf16.xpose.msra.mxu0 0
      %1578 = vmatprep.subr.bf16.mxu0 0
      %1579 = vmatpush1.bf16.xpose.msra.mxu0 0
      %1580 = vmatprep.subr.bf16.mxu0 0
      %1581 = vmatpush1.bf16.xpose.msra.mxu0 0
      %1582 = vmatprep.subr.bf16.mxu0 0
      %1583 = vmatpush1.bf16.xpose.msra.mxu0 0
      %1584 = vmatprep.subr.bf16.mxu0 0
      %1585 = vmatpush1.bf16.xpose.msra.mxu0 0
      %1586 = vmatprep.subr.bf16.mxu0 0
      %1587 = vmatpush1.bf16.xpose.msra.mxu0 0
      %1588 = vmatprep.subr.bf16.mxu0 0
      %1589 = vmatpush1.bf16.xpose.msra.mxu0 %v1572
      %1590 = vmatprep.subr.bf16.mxu0 0
      %1591 = vmatpush2.bf16.xpose.msra.mxu0 0
      %1592 = vmatprep.subr.bf16.mxu0 0
      %1593 = vmatpush2.bf16.xpose.msra.mxu0 0
      %1594 = vmatprep.subr.bf16.mxu0 0
      %1595 = vmatpush2.bf16.xpose.msra.mxu0 0
      %1596 = vmatprep.subr.bf16.mxu0 0
      %1597 = vmatpush2.bf16.xpose.msra.mxu0 0
      %1598 = vmatprep.subr.bf16.mxu0 0
      %1599 = vmatpush2.bf16.xpose.msra.mxu0 0
      %1600 = vmatprep.subr.bf16.mxu0 0
      %1601 = vmatpush2.bf16.xpose.msra.mxu0 0
      %1602 = vmatprep.subr.bf16.mxu0 0
      %1603 = vmatpush2.bf16.xpose.msra.mxu0 0
      %1604 = vmatprep.subr.bf16.mxu0 0
      %1605 = vmatpush2.bf16.xpose.msra.mxu0 0
      %1606 = vmatprep.mubr.bf16.mxu0 0
      %1607 = vmatmul.mubr.bf16.gmra.mxu0 %v1569
      %v1608 = vpop.f32.mrf.mxu0
      %v1609 = vadd.f32 %v571, %v1608
      %v1610 = vpop.f32.mrf.mxu0
      %v1611 = vpop.f32.mrf.mxu0
      %v1612 = vpop.f32.mrf.mxu0
      %1613 = vdwg.mxu0
      %v1614 = vsel %vm575, %v1465, -inf
      %1615 = vmax.xlane.f32.xlu0 %v1614
      %v1616 = vpop.xlane.xlu0 %1615
      %v1617 = vsel %vm575, %v1513, -inf
      %1618 = vmax.xlane.f32.xlu0 %v1617
      %v1619 = vpop.xlane.xlu0 %1618
      %v1620 = vsel %vm575, %v1561, -inf
      %1621 = vmax.xlane.f32.xlu0 %v1620
      %v1622 = vpop.xlane.xlu0 %1621
      %v1623 = vsel %vm575, %v1609, -inf
      %1624 = vmax.xlane.f32.xlu0 %v1623
      %v1625 = vpop.xlane.xlu0 %1624
      %v1626 = vsub.f32 %v1465, %v1616
      %v1627 = vsub.f32 %v1513, %v1619
      %v1628 = vsub.f32 %v1561, %v1622
      %v1629 = vsub.f32 %v1609, %v1625
      %v1630 = vmul.f32 %v1626, 1.442695
      %v1631 = vpow.pop %v1630
      %v1632 = vmul.f32 %v1627, 1.442695
      %v1633 = vpow.pop %v1632
      %v1634 = vmul.f32 %v1628, 1.442695
      %v1635 = vpow.pop %v1634
      %v1636 = vmul.f32 %v1629, 1.442695
      %v1637 = vpow.pop %v1636
      %v1638 = vsel %vm575, %v1631, 0.0
      %1639 = vadd.xlane.f32.xlu0 %v1638
      %v1640 = vpop.xlane.xlu0 %1639
      %v1641 = vsel %vm575, %v1633, 0.0
      %1642 = vadd.xlane.f32.xlu0 %v1641
      %v1643 = vpop.xlane.xlu0 %1642
      %v1644 = vsel %vm575, %v1635, 0.0
      %1645 = vadd.xlane.f32.xlu0 %v1644
      %v1646 = vpop.xlane.xlu0 %1645
      %v1647 = vsel %vm575, %v1637, 0.0
      %1648 = vadd.xlane.f32.xlu0 %v1647
      %v1649 = vpop.xlane.xlu0 %1648
      %v1650 = vmax.f32 %v1640, 1e-09
      %v1651 = vmax.f32 %v1643, 1e-09
      %v1652 = vmax.f32 %v1646, 1e-09
      %v1653 = vmax.f32 %v1649, 1e-09
      %v1654 = vrcp.pop %v1650
      %v1655 = vrcp.pop %v1651
      %v1656 = vrcp.pop %v1652
      %v1657 = vrcp.pop %v1653
      %v1658 = vmul.f32 %v1631, %v1654
      %v1659 = vmul.f32 %v1633, %v1655
      %v1660 = vmul.f32 %v1635, %v1656
      %v1661 = vmul.f32 %v1637, %v1657
      %v1662 = vpack.c.bf16 %v1658, %v1658
      %v1663 = vpack.c.bf16 %v1659, %v1659
      %v1664 = vpack.c.bf16 %v1660, %v1660
      %v1665 = vpack.c.bf16 %v1661, %v1661
      %1666 = vrot.lane.b32.xlu0 %v1407, 64
      %v1667 = vpop.permute.xlu0 %1666
      %v1669 = vsel %vm575, %v1662, 0
      %v1672 = vsel %vm823, %v1667, 0
      %1674 = vmatprep.subr.bf16.mxu0 0
      %1675 = vmatpush1.bf16.msra.mxu0 0
      %1676 = vmatprep.subr.bf16.mxu0 0
      %1677 = vmatpush1.bf16.msra.mxu0 0
      %1678 = vmatprep.subr.bf16.mxu0 0
      %1679 = vmatpush1.bf16.msra.mxu0 0
      %1680 = vmatprep.subr.bf16.mxu0 0
      %1681 = vmatpush1.bf16.msra.mxu0 0
      %1682 = vmatprep.subr.bf16.mxu0 0
      %1683 = vmatpush1.bf16.msra.mxu0 0
      %1684 = vmatprep.subr.bf16.mxu0 0
      %1685 = vmatpush1.bf16.msra.mxu0 0
      %1686 = vmatprep.subr.bf16.mxu0 0
      %1687 = vmatpush1.bf16.msra.mxu0 0
      %1688 = vmatprep.subr.bf16.mxu0 0
      %1689 = vmatpush1.bf16.msra.mxu0 %v1672
      %1690 = vmatprep.subr.bf16.mxu0 0
      %1691 = vmatpush2.bf16.msra.mxu0 0
      %1692 = vmatprep.subr.bf16.mxu0 0
      %1693 = vmatpush2.bf16.msra.mxu0 0
      %1694 = vmatprep.subr.bf16.mxu0 0
      %1695 = vmatpush2.bf16.msra.mxu0 0
      %1696 = vmatprep.subr.bf16.mxu0 0
      %1697 = vmatpush2.bf16.msra.mxu0 0
      %1698 = vmatprep.subr.bf16.mxu0 0
      %1699 = vmatpush2.bf16.msra.mxu0 0
      %1700 = vmatprep.subr.bf16.mxu0 0
      %1701 = vmatpush2.bf16.msra.mxu0 0
      %1702 = vmatprep.subr.bf16.mxu0 0
      %1703 = vmatpush2.bf16.msra.mxu0 0
      %1704 = vmatprep.subr.bf16.mxu0 0
      %1705 = vmatpush2.bf16.msra.mxu0 0
      %1706 = vmatprep.mubr.bf16.mxu0 0
      %1707 = vmatmul.mubr.bf16.gmra.mxu0 %v1669
      %v1708 = vpop.f32.mrf.mxu0
      %v1709 = vadd.f32 0.0, %v1708
      %v1710 = vpop.f32.mrf.mxu0
      %v1711 = vpop.f32.mrf.mxu0
      %v1712 = vpop.f32.mrf.mxu0
      %1713 = vdwg.mxu0
      %1714 = vrot.lane.b32.xlu0 %v1417, 64
      %v1715 = vpop.permute.xlu0 %1714
      %v1717 = vsel %vm575, %v1663, 0
      %v1720 = vsel %vm823, %v1715, 0
      %1722 = vmatprep.subr.bf16.mxu0 0
      %1723 = vmatpush1.bf16.msra.mxu0 0
      %1724 = vmatprep.subr.bf16.mxu0 0
      %1725 = vmatpush1.bf16.msra.mxu0 0
      %1726 = vmatprep.subr.bf16.mxu0 0
      %1727 = vmatpush1.bf16.msra.mxu0 0
      %1728 = vmatprep.subr.bf16.mxu0 0
      %1729 = vmatpush1.bf16.msra.mxu0 0
      %1730 = vmatprep.subr.bf16.mxu0 0
      %1731 = vmatpush1.bf16.msra.mxu0 0
      %1732 = vmatprep.subr.bf16.mxu0 0
      %1733 = vmatpush1.bf16.msra.mxu0 0
      %1734 = vmatprep.subr.bf16.mxu0 0
      %1735 = vmatpush1.bf16.msra.mxu0 0
      %1736 = vmatprep.subr.bf16.mxu0 0
      %1737 = vmatpush1.bf16.msra.mxu0 %v1720
      %1738 = vmatprep.subr.bf16.mxu0 0
      %1739 = vmatpush2.bf16.msra.mxu0 0
      %1740 = vmatprep.subr.bf16.mxu0 0
      %1741 = vmatpush2.bf16.msra.mxu0 0
      %1742 = vmatprep.subr.bf16.mxu0 0
      %1743 = vmatpush2.bf16.msra.mxu0 0
      %1744 = vmatprep.subr.bf16.mxu0 0
      %1745 = vmatpush2.bf16.msra.mxu0 0
      %1746 = vmatprep.subr.bf16.mxu0 0
      %1747 = vmatpush2.bf16.msra.mxu0 0
      %1748 = vmatprep.subr.bf16.mxu0 0
      %1749 = vmatpush2.bf16.msra.mxu0 0
      %1750 = vmatprep.subr.bf16.mxu0 0
      %1751 = vmatpush2.bf16.msra.mxu0 0
      %1752 = vmatprep.subr.bf16.mxu0 0
      %1753 = vmatpush2.bf16.msra.mxu0 0
      %1754 = vmatprep.mubr.bf16.mxu0 0
      %1755 = vmatmul.mubr.bf16.gmra.mxu0 %v1717
      %v1756 = vpop.f32.mrf.mxu0
      %v1757 = vadd.f32 0.0, %v1756
      %v1758 = vpop.f32.mrf.mxu0
      %v1759 = vpop.f32.mrf.mxu0
      %v1760 = vpop.f32.mrf.mxu0
      %1761 = vdwg.mxu0
      %1762 = vrot.lane.b32.xlu0 %v1419, 64
      %v1763 = vpop.permute.xlu0 %1762
      %v1765 = vsel %vm575, %v1664, 0
      %v1768 = vsel %vm823, %v1763, 0
      %1770 = vmatprep.subr.bf16.mxu0 0
      %1771 = vmatpush1.bf16.msra.mxu0 0
      %1772 = vmatprep.subr.bf16.mxu0 0
      %1773 = vmatpush1.bf16.msra.mxu0 0
      %1774 = vmatprep.subr.bf16.mxu0 0
      %1775 = vmatpush1.bf16.msra.mxu0 0
      %1776 = vmatprep.subr.bf16.mxu0 0
      %1777 = vmatpush1.bf16.msra.mxu0 0
      %1778 = vmatprep.subr.bf16.mxu0 0
      %1779 = vmatpush1.bf16.msra.mxu0 0
      %1780 = vmatprep.subr.bf16.mxu0 0
      %1781 = vmatpush1.bf16.msra.mxu0 0
      %1782 = vmatprep.subr.bf16.mxu0 0
      %1783 = vmatpush1.bf16.msra.mxu0 0
      %1784 = vmatprep.subr.bf16.mxu0 0
      %1785 = vmatpush1.bf16.msra.mxu0 %v1768
      %1786 = vmatprep.subr.bf16.mxu0 0
      %1787 = vmatpush2.bf16.msra.mxu0 0
      %1788 = vmatprep.subr.bf16.mxu0 0
      %1789 = vmatpush2.bf16.msra.mxu0 0
      %1790 = vmatprep.subr.bf16.mxu0 0
      %1791 = vmatpush2.bf16.msra.mxu0 0
      %1792 = vmatprep.subr.bf16.mxu0 0
      %1793 = vmatpush2.bf16.msra.mxu0 0
      %1794 = vmatprep.subr.bf16.mxu0 0
      %1795 = vmatpush2.bf16.msra.mxu0 0
      %1796 = vmatprep.subr.bf16.mxu0 0
      %1797 = vmatpush2.bf16.msra.mxu0 0
      %1798 = vmatprep.subr.bf16.mxu0 0
      %1799 = vmatpush2.bf16.msra.mxu0 0
      %1800 = vmatprep.subr.bf16.mxu0 0
      %1801 = vmatpush2.bf16.msra.mxu0 0
      %1802 = vmatprep.mubr.bf16.mxu0 0
      %1803 = vmatmul.mubr.bf16.gmra.mxu0 %v1765
      %v1804 = vpop.f32.mrf.mxu0
      %v1805 = vadd.f32 0.0, %v1804
      %v1806 = vpop.f32.mrf.mxu0
      %v1807 = vpop.f32.mrf.mxu0
      %v1808 = vpop.f32.mrf.mxu0
      %1809 = vdwg.mxu0
      %1810 = vrot.lane.b32.xlu0 %v1421, 64
      %v1811 = vpop.permute.xlu0 %1810
      %v1813 = vsel %vm575, %v1665, 0
      %v1816 = vsel %vm823, %v1811, 0
      %1818 = vmatprep.subr.bf16.mxu0 0
      %1819 = vmatpush1.bf16.msra.mxu0 0
      %1820 = vmatprep.subr.bf16.mxu0 0
      %1821 = vmatpush1.bf16.msra.mxu0 0
      %1822 = vmatprep.subr.bf16.mxu0 0
      %1823 = vmatpush1.bf16.msra.mxu0 0
      %1824 = vmatprep.subr.bf16.mxu0 0
      %1825 = vmatpush1.bf16.msra.mxu0 0
      %1826 = vmatprep.subr.bf16.mxu0 0
      %1827 = vmatpush1.bf16.msra.mxu0 0
      %1828 = vmatprep.subr.bf16.mxu0 0
      %1829 = vmatpush1.bf16.msra.mxu0 0
      %1830 = vmatprep.subr.bf16.mxu0 0
      %1831 = vmatpush1.bf16.msra.mxu0 0
      %1832 = vmatprep.subr.bf16.mxu0 0
      %1833 = vmatpush1.bf16.msra.mxu0 %v1816
      %1834 = vmatprep.subr.bf16.mxu0 0
      %1835 = vmatpush2.bf16.msra.mxu0 0
      %1836 = vmatprep.subr.bf16.mxu0 0
      %1837 = vmatpush2.bf16.msra.mxu0 0
      %1838 = vmatprep.subr.bf16.mxu0 0
      %1839 = vmatpush2.bf16.msra.mxu0 0
      %1840 = vmatprep.subr.bf16.mxu0 0
      %1841 = vmatpush2.bf16.msra.mxu0 0
      %1842 = vmatprep.subr.bf16.mxu0 0
      %1843 = vmatpush2.bf16.msra.mxu0 0
      %1844 = vmatprep.subr.bf16.mxu0 0
      %1845 = vmatpush2.bf16.msra.mxu0 0
      %1846 = vmatprep.subr.bf16.mxu0 0
      %1847 = vmatpush2.bf16.msra.mxu0 0
      %1848 = vmatprep.subr.bf16.mxu0 0
      %1849 = vmatpush2.bf16.msra.mxu0 0
      %1850 = vmatprep.mubr.bf16.mxu0 0
      %1851 = vmatmul.mubr.bf16.gmra.mxu0 %v1813
      %v1852 = vpop.f32.mrf.mxu0
      %v1853 = vadd.f32 0.0, %v1852
      %v1854 = vpop.f32.mrf.mxu0
      %v1855 = vpop.f32.mrf.mxu0
      %v1856 = vpop.f32.mrf.mxu0
      %1857 = vdwg.mxu0
      %1859 = vrot.lane.b32.xlu0 %v1757, 8
      %v1860 = vpop.permute.xlu0 %1859
      %1863 = vrot.lane.b32.xlu0 %v1805, 16
      %v1864 = vpop.permute.xlu0 %1863
      %1867 = vrot.lane.b32.xlu0 %v1853, 24
      %v1868 = vpop.permute.xlu0 %1867
      %v1870 = vsel %vm575, %v1709, %v1860
      %v1871 = vsel %vm1024, %v1870, %v1864
      %v1872 = vsel %vm1026, %v1871, %v1868
      %v1873 = vpack.c.bf16 %v1872, %v1872
      %s1874 = scalar_lea.vmem %s4, 16
      %v1875 = vld [vmem:[%s1874] sm:$0xf]
      %v1876 = vld [vmem:[%s1874 + $0x4] sm:$0xf]
      %v1877 = vld [vmem:[%s1874 + $0x8] sm:$0xf]
      %v1878 = vld [vmem:[%s1874 + $0xc] sm:$0xf]
      %s1879 = scalar_lea.vmem %s5, 1
      %v1880 = vld [vmem:[%s1879] sm:$0x1]
      %v1882 = vlaneseq
      %v1883 = vshrl.u32 %v1882, 7
      %v1884 = vsub.s32 0, %v1883
      %v1885 = vrot.slane %v1880, %v1884
      %v1891 = vunpack.c.l.b16 %v1875
      %v1892 = vunpack.c.l.b16 %v1876
      %v1893 = vunpack.c.l.b16 %v1877
      %v1894 = vunpack.c.l.b16 %v1878
      %v1895 = vpack.c.b16 %v1892, %v1891
      %v1896 = vpack.c.b16 %v1894, %v1893
      %v1900 = vsel %vm506, %v1873, 0
      %1902 = vmatprep.subr.bf16.mxu0 0
      %1903 = vmatpush1.bf16.msra.mxu0 0
      %1904 = vmatprep.subr.bf16.mxu0 0
      %1905 = vmatpush1.bf16.msra.mxu0 0
      %1906 = vmatprep.subr.bf16.mxu0 0
      %1907 = vmatpush1.bf16.msra.mxu0 0
      %1908 = vmatprep.subr.bf16.mxu0 0
      %1909 = vmatpush1.bf16.msra.mxu0 0
      %1910 = vmatprep.subr.bf16.mxu0 0
      %1911 = vmatpush1.bf16.msra.mxu0 0
      %1912 = vmatprep.subr.bf16.mxu0 0
      %1913 = vmatpush1.bf16.msra.mxu0 0
      %1914 = vmatprep.subr.bf16.mxu0 0
      %1915 = vmatpush1.bf16.msra.mxu0 %v1896
      %1916 = vmatprep.subr.bf16.mxu0 0
      %1917 = vmatpush1.bf16.msra.mxu0 %v1895
      %1918 = vmatprep.subr.bf16.mxu0 0
      %1919 = vmatpush2.bf16.msra.mxu0 0
      %1920 = vmatprep.subr.bf16.mxu0 0
      %1921 = vmatpush2.bf16.msra.mxu0 0
      %1922 = vmatprep.subr.bf16.mxu0 0
      %1923 = vmatpush2.bf16.msra.mxu0 0
      %1924 = vmatprep.subr.bf16.mxu0 0
      %1925 = vmatpush2.bf16.msra.mxu0 0
      %1926 = vmatprep.subr.bf16.mxu0 0
      %1927 = vmatpush2.bf16.msra.mxu0 0
      %1928 = vmatprep.subr.bf16.mxu0 0
      %1929 = vmatpush2.bf16.msra.mxu0 0
      %1930 = vmatprep.subr.bf16.mxu0 0
      %1931 = vmatpush2.bf16.msra.mxu0 0
      %1932 = vmatprep.subr.bf16.mxu0 0
      %1933 = vmatpush2.bf16.msra.mxu0 0
      %1934 = vmatprep.mubr.bf16.mxu0 0
      %1935 = vmatmul.mubr.bf16.gmra.mxu0 %v1900
      %v1936 = vpop.f32.mrf.mxu0
      %v1937 = vadd.f32 %v1885, %v1936
      %v1938 = vpop.f32.mrf.mxu0
      %v1939 = vpop.f32.mrf.mxu0
      %v1940 = vpop.f32.mrf.mxu0
      %1941 = vdwg.mxu0
      %v1942 = vadd.f32 %v1335, %v1937
      %s1943 = scalar_lea.vmem %s6, 1
      %v1944 = vld [vmem:[%s1943] sm:$0x1]
      %s1945 = scalar_lea.vmem %s7, 1
      %v1946 = vld [vmem:[%s1945] sm:$0x1]
      %v1947 = vsel %vm506, %v1942, 0.0
      %1948 = vadd.xlane.f32.xlu0 %v1947
      %v1949 = vpop.xlane.xlu0 %1948
      %v1950 = vmul.f32 %v1949, %v1101
      %v1951 = vsub.f32 %v1942, %v1950
      %v1952 = vmul.f32 %v1951, %v1951
      %v1953 = vsel %vm506, %v1952, 0.0
      %1954 = vadd.xlane.f32.xlu0 %v1953
      %v1955 = vpop.xlane.xlu0 %1954
      %v1956 = vmul.f32 %v1955, %v1101
      %v1957 = vadd.f32 %v1956, 1e-05
      %v1958 = vrsqrt.pop %v1957
      %v1959 = vmul.f32 %v1951, %v1958
      %v1961 = vlaneseq
      %v1962 = vshrl.u32 %v1961, 7
      %v1963 = vsub.s32 0, %v1962
      %v1964 = vrot.slane %v1944, %v1963
      %v1966 = vmul.f32 %v1959, %v1964
      %v1968 = vlaneseq
      %v1969 = vshrl.u32 %v1968, 7
      %v1970 = vsub.s32 0, %v1969
      %v1971 = vrot.slane %v1946, %v1970
      %v1973 = vadd.f32 %v1966, %v1971
      %v1974 = vpack.c.bf16 %v1973, %v1973
      %s1975 = scalar_lea.vmem %s8, 16
      %v1976 = vld [vmem:[%s1975] sm:$0xf]
      %v1977 = vld [vmem:[%s1975 + $0x4] sm:$0xf]
      %v1978 = vld [vmem:[%s1975 + $0x8] sm:$0xf]
      %v1979 = vld [vmem:[%s1975 + $0xc] sm:$0xf]
      %s1980 = scalar_lea.vmem %s9, 1
      %v1981 = vld [vmem:[%s1980] sm:$0x1]
      %v1983 = vlaneseq
      %v1984 = vshrl.u32 %v1983, 7
      %v1985 = vsub.s32 0, %v1984
      %v1986 = vrot.slane %v1981, %v1985
      %v1992 = vunpack.c.l.b16 %v1976
      %v1993 = vunpack.c.l.b16 %v1977
      %v1994 = vunpack.c.l.b16 %v1978
      %v1995 = vunpack.c.l.b16 %v1979
      %v1996 = vpack.c.b16 %v1993, %v1992
      %v1997 = vpack.c.b16 %v1995, %v1994
      %v2001 = vsel %vm506, %v1974, 0
      %2003 = vmatprep.subr.bf16.mxu0 0
      %2004 = vmatpush1.bf16.msra.mxu0 0
      %2005 = vmatprep.subr.bf16.mxu0 0
      %2006 = vmatpush1.bf16.msra.mxu0 0
      %2007 = vmatprep.subr.bf16.mxu0 0
      %2008 = vmatpush1.bf16.msra.mxu0 0
      %2009 = vmatprep.subr.bf16.mxu0 0
      %2010 = vmatpush1.bf16.msra.mxu0 0
      %2011 = vmatprep.subr.bf16.mxu0 0
      %2012 = vmatpush1.bf16.msra.mxu0 0
      %2013 = vmatprep.subr.bf16.mxu0 0
      %2014 = vmatpush1.bf16.msra.mxu0 0
      %2015 = vmatprep.subr.bf16.mxu0 0
      %2016 = vmatpush1.bf16.msra.mxu0 %v1997
      %2017 = vmatprep.subr.bf16.mxu0 0
      %2018 = vmatpush1.bf16.msra.mxu0 %v1996
      %2019 = vmatprep.subr.bf16.mxu0 0
      %2020 = vmatpush2.bf16.msra.mxu0 0
      %2021 = vmatprep.subr.bf16.mxu0 0
      %2022 = vmatpush2.bf16.msra.mxu0 0
      %2023 = vmatprep.subr.bf16.mxu0 0
      %2024 = vmatpush2.bf16.msra.mxu0 0
      %2025 = vmatprep.subr.bf16.mxu0 0
      %2026 = vmatpush2.bf16.msra.mxu0 0
      %2027 = vmatprep.subr.bf16.mxu0 0
      %2028 = vmatpush2.bf16.msra.mxu0 0
      %2029 = vmatprep.subr.bf16.mxu0 0
      %2030 = vmatpush2.bf16.msra.mxu0 0
      %2031 = vmatprep.subr.bf16.mxu0 0
      %2032 = vmatpush2.bf16.msra.mxu0 0
      %2033 = vmatprep.subr.bf16.mxu0 0
      %2034 = vmatpush2.bf16.msra.mxu0 0
      %2035 = vmatprep.mubr.bf16.mxu0 0
      %2036 = vmatmul.mubr.bf16.gmra.mxu0 %v2001
      %v2037 = vpop.f32.mrf.mxu0
      %v2038 = vadd.f32 %v1986, %v2037
      %v2039 = vpop.f32.mrf.mxu0
      %v2040 = vpop.f32.mrf.mxu0
      %v2041 = vpop.f32.mrf.mxu0
      %2042 = vdwg.mxu0
      %v2043 = vmax.f32 %v2038, 0.0
      %v2044 = vpack.c.bf16 %v2043, %v2043
      %s2045 = scalar_lea.vmem %s10, 64
      %v2046 = vld [vmem:[%s2045] sm:$0xf]
      %v2047 = vld [vmem:[%s2045 + $0x4] sm:$0xf]
      %v2048 = vld [vmem:[%s2045 + $0x8] sm:$0xf]
      %v2049 = vld [vmem:[%s2045 + $0xc] sm:$0xf]
      %v2050 = vld [vmem:[%s2045 + $0x10] sm:$0xf]
      %v2051 = vld [vmem:[%s2045 + $0x14] sm:$0xf]
      %v2052 = vld [vmem:[%s2045 + $0x18] sm:$0xf]
      %v2053 = vld [vmem:[%s2045 + $0x1c] sm:$0xf]
      %v2054 = vld [vmem:[%s2045 + $0x20] sm:$0xf]
      %v2055 = vld [vmem:[%s2045 + $0x24] sm:$0xf]
      %v2056 = vld [vmem:[%s2045 + $0x28] sm:$0xf]
      %v2057 = vld [vmem:[%s2045 + $0x2c] sm:$0xf]
      %v2058 = vld [vmem:[%s2045 + $0x30] sm:$0xf]
      %v2059 = vld [vmem:[%s2045 + $0x34] sm:$0xf]
      %v2060 = vld [vmem:[%s2045 + $0x38] sm:$0xf]
      %v2061 = vld [vmem:[%s2045 + $0x3c] sm:$0xf]
      %s2062 = scalar_lea.vmem %s11, 1
      %v2063 = vld [vmem:[%s2062] sm:$0x1]
      %v2065 = vlaneseq
      %v2066 = vshrl.u32 %v2065, 7
      %v2067 = vsub.s32 0, %v2066
      %v2068 = vrot.slane %v2063, %v2067
      %v2086 = vunpack.c.l.b16 %v2046
      %v2087 = vunpack.c.l.b16 %v2047
      %v2088 = vunpack.c.l.b16 %v2048
      %v2089 = vunpack.c.l.b16 %v2049
      %v2090 = vunpack.c.l.b16 %v2050
      %v2091 = vunpack.c.l.b16 %v2051
      %v2092 = vunpack.c.l.b16 %v2052
      %v2093 = vunpack.c.l.b16 %v2053
      %v2094 = vunpack.c.l.b16 %v2054
      %v2095 = vunpack.c.l.b16 %v2055
      %v2096 = vunpack.c.l.b16 %v2056
      %v2097 = vunpack.c.l.b16 %v2057
      %v2098 = vunpack.c.l.b16 %v2058
      %v2099 = vunpack.c.l.b16 %v2059
      %v2100 = vunpack.c.l.b16 %v2060
      %v2101 = vunpack.c.l.b16 %v2061
      %v2102 = vpack.c.b16 %v2087, %v2086
      %v2103 = vpack.c.b16 %v2089, %v2088
      %v2104 = vpack.c.b16 %v2091, %v2090
      %v2105 = vpack.c.b16 %v2093, %v2092
      %v2106 = vpack.c.b16 %v2095, %v2094
      %v2107 = vpack.c.b16 %v2097, %v2096
      %v2108 = vpack.c.b16 %v2099, %v2098
      %v2109 = vpack.c.b16 %v2101, %v2100
      %2118 = vmatprep.subr.bf16.mxu0 0
      %2119 = vmatpush1.bf16.msra.mxu0 %v2109
      %2120 = vmatprep.subr.bf16.mxu0 0
      %2121 = vmatpush1.bf16.msra.mxu0 %v2108
      %2122 = vmatprep.subr.bf16.mxu0 0
      %2123 = vmatpush1.bf16.msra.mxu0 %v2107
      %2124 = vmatprep.subr.bf16.mxu0 0
      %2125 = vmatpush1.bf16.msra.mxu0 %v2106
      %2126 = vmatprep.subr.bf16.mxu0 0
      %2127 = vmatpush1.bf16.msra.mxu0 %v2105
      %2128 = vmatprep.subr.bf16.mxu0 0
      %2129 = vmatpush1.bf16.msra.mxu0 %v2104
      %2130 = vmatprep.subr.bf16.mxu0 0
      %2131 = vmatpush1.bf16.msra.mxu0 %v2103
      %2132 = vmatprep.subr.bf16.mxu0 0
      %2133 = vmatpush1.bf16.msra.mxu0 %v2102
      %2134 = vmatprep.subr.bf16.mxu0 0
      %2135 = vmatpush2.bf16.msra.mxu0 0
      %2136 = vmatprep.subr.bf16.mxu0 0
      %2137 = vmatpush2.bf16.msra.mxu0 0
      %2138 = vmatprep.subr.bf16.mxu0 0
      %2139 = vmatpush2.bf16.msra.mxu0 0
      %2140 = vmatprep.subr.bf16.mxu0 0
      %2141 = vmatpush2.bf16.msra.mxu0 0
      %2142 = vmatprep.subr.bf16.mxu0 0
      %2143 = vmatpush2.bf16.msra.mxu0 0
      %2144 = vmatprep.subr.bf16.mxu0 0
      %2145 = vmatpush2.bf16.msra.mxu0 0
      %2146 = vmatprep.subr.bf16.mxu0 0
      %2147 = vmatpush2.bf16.msra.mxu0 0
      %2148 = vmatprep.subr.bf16.mxu0 0
      %2149 = vmatpush2.bf16.msra.mxu0 0
      %2150 = vmatprep.mubr.bf16.mxu0 0
      %2151 = vmatmul.mubr.bf16.gmra.mxu0 %v2044
      %v2152 = vpop.f32.mrf.mxu0
      %v2153 = vadd.f32 %v2068, %v2152
      %v2154 = vpop.f32.mrf.mxu0
      %v2155 = vpop.f32.mrf.mxu0
      %v2156 = vpop.f32.mrf.mxu0
      %2157 = vdwg.mxu0
      %v2158 = vadd.f32 %v1973, %v2153
      %s2159 = scalar_lea.vmem %s12, 1
      %v2160 = vld [vmem:[%s2159] sm:$0x1]
      %s2161 = scalar_lea.vmem %s13, 1
      %v2162 = vld [vmem:[%s2161] sm:$0x1]
      %v2163 = vsel %vm506, %v2158, 0.0
      %2164 = vadd.xlane.f32.xlu0 %v2163
      %v2165 = vpop.xlane.xlu0 %2164
      %v2166 = vmul.f32 %v2165, %v1101
      %v2167 = vsub.f32 %v2158, %v2166
      %v2168 = vmul.f32 %v2167, %v2167
      %v2169 = vsel %vm506, %v2168, 0.0
      %2170 = vadd.xlane.f32.xlu0 %v2169
      %v2171 = vpop.xlane.xlu0 %2170
      %v2172 = vmul.f32 %v2171, %v1101
      %v2173 = vadd.f32 %v2172, 1e-05
      %v2174 = vrsqrt.pop %v2173
      %v2175 = vmul.f32 %v2167, %v2174
      %v2177 = vlaneseq
      %v2178 = vshrl.u32 %v2177, 7
      %v2179 = vsub.s32 0, %v2178
      %v2180 = vrot.slane %v2160, %v2179
      %v2182 = vmul.f32 %v2175, %v2180
      %v2184 = vlaneseq
      %v2185 = vshrl.u32 %v2184, 7
      %v2186 = vsub.s32 0, %v2185
      %v2187 = vrot.slane %v2162, %v2186
      %v2189 = vadd.f32 %v2182, %v2187
      %v2190 = vpack.c.bf16 %v2189, %v2189
      %s2191 = scalar_lea.vmem %s2, 32
      %v2192 = vld [vmem:[%s2191] sm:$0xf]
      %v2193 = vld [vmem:[%s2191 + $0x4] sm:$0xf]
      %v2194 = vld [vmem:[%s2191 + $0x8] sm:$0xf]
      %v2195 = vld [vmem:[%s2191 + $0xc] sm:$0xf]
      %s2196 = scalar_lea.vmem %s3, 2
      %v2197 = vld [vmem:[%s2196] sm:$0x1]
      %v2199 = vlaneseq
      %v2200 = vshrl.u32 %v2199, 7
      %v2201 = vsub.s32 0, %v2200
      %v2202 = vrot.slane %v2197, %v2201
      %v2208 = vunpack.c.l.b16 %v2192
      %v2209 = vunpack.c.l.b16 %v2193
      %v2210 = vunpack.c.l.b16 %v2194
      %v2211 = vunpack.c.l.b16 %v2195
      %v2212 = vpack.c.b16 %v2209, %v2208
      %v2213 = vpack.c.b16 %v2211, %v2210
      %v2217 = vsel %vm506, %v2190, 0
      %2219 = vmatprep.subr.bf16.mxu0 0
      %2220 = vmatpush1.bf16.msra.mxu0 0
      %2221 = vmatprep.subr.bf16.mxu0 0
      %2222 = vmatpush1.bf16.msra.mxu0 0
      %2223 = vmatprep.subr.bf16.mxu0 0
      %2224 = vmatpush1.bf16.msra.mxu0 0
      %2225 = vmatprep.subr.bf16.mxu0 0
      %2226 = vmatpush1.bf16.msra.mxu0 0
      %2227 = vmatprep.subr.bf16.mxu0 0
      %2228 = vmatpush1.bf16.msra.mxu0 0
      %2229 = vmatprep.subr.bf16.mxu0 0
      %2230 = vmatpush1.bf16.msra.mxu0 0
      %2231 = vmatprep.subr.bf16.mxu0 0
      %2232 = vmatpush1.bf16.msra.mxu0 %v2213
      %2233 = vmatprep.subr.bf16.mxu0 0
      %2234 = vmatpush1.bf16.msra.mxu0 %v2212
      %2235 = vmatprep.subr.bf16.mxu0 0
      %2236 = vmatpush2.bf16.msra.mxu0 0
      %2237 = vmatprep.subr.bf16.mxu0 0
      %2238 = vmatpush2.bf16.msra.mxu0 0
      %2239 = vmatprep.subr.bf16.mxu0 0
      %2240 = vmatpush2.bf16.msra.mxu0 0
      %2241 = vmatprep.subr.bf16.mxu0 0
      %2242 = vmatpush2.bf16.msra.mxu0 0
      %2243 = vmatprep.subr.bf16.mxu0 0
      %2244 = vmatpush2.bf16.msra.mxu0 0
      %2245 = vmatprep.subr.bf16.mxu0 0
      %2246 = vmatpush2.bf16.msra.mxu0 0
      %2247 = vmatprep.subr.bf16.mxu0 0
      %2248 = vmatpush2.bf16.msra.mxu0 0
      %2249 = vmatprep.subr.bf16.mxu0 0
      %2250 = vmatpush2.bf16.msra.mxu0 0
      %2251 = vmatprep.mubr.bf16.mxu0 0
      %2252 = vmatmul.mubr.bf16.gmra.mxu0 %v2217
      %v2253 = vpop.f32.mrf.mxu0
      %v2254 = vadd.f32 %v2202, %v2253
      %v2255 = vpop.f32.mrf.mxu0
      %v2256 = vpop.f32.mrf.mxu0
      %v2257 = vpop.f32.mrf.mxu0
      %2258 = vdwg.mxu0
      %v2259 = vmul.f32 %v2254, 0.35355338
      %v2260 = vpack.c.bf16 %v2259, %v2259
      %v2261 = vpack.c.bf16 %v2254, %v2254
      %2263 = vrot.lane.b32.xlu0 %v2260, 120
      %v2264 = vpop.permute.xlu0 %2263
      %2265 = vrot.lane.b32.xlu0 %v2260, 112
      %v2266 = vpop.permute.xlu0 %2265
      %2267 = vrot.lane.b32.xlu0 %v2260, 104
      %v2268 = vpop.permute.xlu0 %2267
      %2270 = vrot.lane.b32.xlu0 %v2261, 120
      %v2271 = vpop.permute.xlu0 %2270
      %2272 = vrot.lane.b32.xlu0 %v2261, 112
      %v2273 = vpop.permute.xlu0 %2272
      %2274 = vrot.lane.b32.xlu0 %v2261, 104
      %v2275 = vpop.permute.xlu0 %2274
      %2276 = vrot.lane.b32.xlu0 %v2261, 96
      %v2277 = vpop.permute.xlu0 %2276
      %v2279 = vsel %vm575, %v2260, 0
      %v2282 = vsel %vm575, %v2277, 0
      %2284 = vmatprep.subr.bf16.mxu0 0
      %2285 = vmatpush1.bf16.xpose.msra.mxu0 0
      %2286 = vmatprep.subr.bf16.mxu0 0
      %2287 = vmatpush1.bf16.xpose.msra.mxu0 0
      %2288 = vmatprep.subr.bf16.mxu0 0
      %2289 = vmatpush1.bf16.xpose.msra.mxu0 0
      %2290 = vmatprep.subr.bf16.mxu0 0
      %2291 = vmatpush1.bf16.xpose.msra.mxu0 0
      %2292 = vmatprep.subr.bf16.mxu0 0
      %2293 = vmatpush1.bf16.xpose.msra.mxu0 0
      %2294 = vmatprep.subr.bf16.mxu0 0
      %2295 = vmatpush1.bf16.xpose.msra.mxu0 0
      %2296 = vmatprep.subr.bf16.mxu0 0
      %2297 = vmatpush1.bf16.xpose.msra.mxu0 0
      %2298 = vmatprep.subr.bf16.mxu0 0
      %2299 = vmatpush1.bf16.xpose.msra.mxu0 %v2282
      %2300 = vmatprep.subr.bf16.mxu0 0
      %2301 = vmatpush2.bf16.xpose.msra.mxu0 0
      %2302 = vmatprep.subr.bf16.mxu0 0
      %2303 = vmatpush2.bf16.xpose.msra.mxu0 0
      %2304 = vmatprep.subr.bf16.mxu0 0
      %2305 = vmatpush2.bf16.xpose.msra.mxu0 0
      %2306 = vmatprep.subr.bf16.mxu0 0
      %2307 = vmatpush2.bf16.xpose.msra.mxu0 0
      %2308 = vmatprep.subr.bf16.mxu0 0
      %2309 = vmatpush2.bf16.xpose.msra.mxu0 0
      %2310 = vmatprep.subr.bf16.mxu0 0
      %2311 = vmatpush2.bf16.xpose.msra.mxu0 0
      %2312 = vmatprep.subr.bf16.mxu0 0
      %2313 = vmatpush2.bf16.xpose.msra.mxu0 0
      %2314 = vmatprep.subr.bf16.mxu0 0
      %2315 = vmatpush2.bf16.xpose.msra.mxu0 0
      %2316 = vmatprep.mubr.bf16.mxu0 0
      %2317 = vmatmul.mubr.bf16.gmra.mxu0 %v2279
      %v2318 = vpop.f32.mrf.mxu0
      %v2319 = vadd.f32 %v571, %v2318
      %v2320 = vpop.f32.mrf.mxu0
      %v2321 = vpop.f32.mrf.mxu0
      %v2322 = vpop.f32.mrf.mxu0
      %2323 = vdwg.mxu0
      %2324 = vrot.lane.b32.xlu0 %v2271, 96
      %v2325 = vpop.permute.xlu0 %2324
      %v2327 = vsel %vm575, %v2264, 0
      %v2330 = vsel %vm575, %v2325, 0
      %2332 = vmatprep.subr.bf16.mxu0 0
      %2333 = vmatpush1.bf16.xpose.msra.mxu0 0
      %2334 = vmatprep.subr.bf16.mxu0 0
      %2335 = vmatpush1.bf16.xpose.msra.mxu0 0
      %2336 = vmatprep.subr.bf16.mxu0 0
      %2337 = vmatpush1.bf16.xpose.msra.mxu0 0
      %2338 = vmatprep.subr.bf16.mxu0 0
      %2339 = vmatpush1.bf16.xpose.msra.mxu0 0
      %2340 = vmatprep.subr.bf16.mxu0 0
      %2341 = vmatpush1.bf16.xpose.msra.mxu0 0
      %2342 = vmatprep.subr.bf16.mxu0 0
      %2343 = vmatpush1.bf16.xpose.msra.mxu0 0
      %2344 = vmatprep.subr.bf16.mxu0 0
      %2345 = vmatpush1.bf16.xpose.msra.mxu0 0
      %2346 = vmatprep.subr.bf16.mxu0 0
      %2347 = vmatpush1.bf16.xpose.msra.mxu0 %v2330
      %2348 = vmatprep.subr.bf16.mxu0 0
      %2349 = vmatpush2.bf16.xpose.msra.mxu0 0
      %2350 = vmatprep.subr.bf16.mxu0 0
      %2351 = vmatpush2.bf16.xpose.msra.mxu0 0
      %2352 = vmatprep.subr.bf16.mxu0 0
      %2353 = vmatpush2.bf16.xpose.msra.mxu0 0
      %2354 = vmatprep.subr.bf16.mxu0 0
      %2355 = vmatpush2.bf16.xpose.msra.mxu0 0
      %2356 = vmatprep.subr.bf16.mxu0 0
      %2357 = vmatpush2.bf16.xpose.msra.mxu0 0
      %2358 = vmatprep.subr.bf16.mxu0 0
      %2359 = vmatpush2.bf16.xpose.msra.mxu0 0
      %2360 = vmatprep.subr.bf16.mxu0 0
      %2361 = vmatpush2.bf16.xpose.msra.mxu0 0
      %2362 = vmatprep.subr.bf16.mxu0 0
      %2363 = vmatpush2.bf16.xpose.msra.mxu0 0
      %2364 = vmatprep.mubr.bf16.mxu0 0
      %2365 = vmatmul.mubr.bf16.gmra.mxu0 %v2327
      %v2366 = vpop.f32.mrf.mxu0
      %v2367 = vadd.f32 %v571, %v2366
      %v2368 = vpop.f32.mrf.mxu0
      %v2369 = vpop.f32.mrf.mxu0
      %v2370 = vpop.f32.mrf.mxu0
      %2371 = vdwg.mxu0
      %2372 = vrot.lane.b32.xlu0 %v2273, 96
      %v2373 = vpop.permute.xlu0 %2372
      %v2375 = vsel %vm575, %v2266, 0
      %v2378 = vsel %vm575, %v2373, 0
      %2380 = vmatprep.subr.bf16.mxu0 0
      %2381 = vmatpush1.bf16.xpose.msra.mxu0 0
      %2382 = vmatprep.subr.bf16.mxu0 0
      %2383 = vmatpush1.bf16.xpose.msra.mxu0 0
      %2384 = vmatprep.subr.bf16.mxu0 0
      %2385 = vmatpush1.bf16.xpose.msra.mxu0 0
      %2386 = vmatprep.subr.bf16.mxu0 0
      %2387 = vmatpush1.bf16.xpose.msra.mxu0 0
      %2388 = vmatprep.subr.bf16.mxu0 0
      %2389 = vmatpush1.bf16.xpose.msra.mxu0 0
      %2390 = vmatprep.subr.bf16.mxu0 0
      %2391 = vmatpush1.bf16.xpose.msra.mxu0 0
      %2392 = vmatprep.subr.bf16.mxu0 0
      %2393 = vmatpush1.bf16.xpose.msra.mxu0 0
      %2394 = vmatprep.subr.bf16.mxu0 0
      %2395 = vmatpush1.bf16.xpose.msra.mxu0 %v2378
      %2396 = vmatprep.subr.bf16.mxu0 0
      %2397 = vmatpush2.bf16.xpose.msra.mxu0 0
      %2398 = vmatprep.subr.bf16.mxu0 0
      %2399 = vmatpush2.bf16.xpose.msra.mxu0 0
      %2400 = vmatprep.subr.bf16.mxu0 0
      %2401 = vmatpush2.bf16.xpose.msra.mxu0 0
      %2402 = vmatprep.subr.bf16.mxu0 0
      %2403 = vmatpush2.bf16.xpose.msra.mxu0 0
      %2404 = vmatprep.subr.bf16.mxu0 0
      %2405 = vmatpush2.bf16.xpose.msra.mxu0 0
      %2406 = vmatprep.subr.bf16.mxu0 0
      %2407 = vmatpush2.bf16.xpose.msra.mxu0 0
      %2408 = vmatprep.subr.bf16.mxu0 0
      %2409 = vmatpush2.bf16.xpose.msra.mxu0 0
      %2410 = vmatprep.subr.bf16.mxu0 0
      %2411 = vmatpush2.bf16.xpose.msra.mxu0 0
      %2412 = vmatprep.mubr.bf16.mxu0 0
      %2413 = vmatmul.mubr.bf16.gmra.mxu0 %v2375
      %v2414 = vpop.f32.mrf.mxu0
      %v2415 = vadd.f32 %v571, %v2414
      %v2416 = vpop.f32.mrf.mxu0
      %v2417 = vpop.f32.mrf.mxu0
      %v2418 = vpop.f32.mrf.mxu0
      %2419 = vdwg.mxu0
      %2420 = vrot.lane.b32.xlu0 %v2275, 96
      %v2421 = vpop.permute.xlu0 %2420
      %v2423 = vsel %vm575, %v2268, 0
      %v2426 = vsel %vm575, %v2421, 0
      %2428 = vmatprep.subr.bf16.mxu0 0
      %2429 = vmatpush1.bf16.xpose.msra.mxu0 0
      %2430 = vmatprep.subr.bf16.mxu0 0
      %2431 = vmatpush1.bf16.xpose.msra.mxu0 0
      %2432 = vmatprep.subr.bf16.mxu0 0
      %2433 = vmatpush1.bf16.xpose.msra.mxu0 0
      %2434 = vmatprep.subr.bf16.mxu0 0
      %2435 = vmatpush1.bf16.xpose.msra.mxu0 0
      %2436 = vmatprep.subr.bf16.mxu0 0
      %2437 = vmatpush1.bf16.xpose.msra.mxu0 0
      %2438 = vmatprep.subr.bf16.mxu0 0
      %2439 = vmatpush1.bf16.xpose.msra.mxu0 0
      %2440 = vmatprep.subr.bf16.mxu0 0
      %2441 = vmatpush1.bf16.xpose.msra.mxu0 0
      %2442 = vmatprep.subr.bf16.mxu0 0
      %2443 = vmatpush1.bf16.xpose.msra.mxu0 %v2426
      %2444 = vmatprep.subr.bf16.mxu0 0
      %2445 = vmatpush2.bf16.xpose.msra.mxu0 0
      %2446 = vmatprep.subr.bf16.mxu0 0
      %2447 = vmatpush2.bf16.xpose.msra.mxu0 0
      %2448 = vmatprep.subr.bf16.mxu0 0
      %2449 = vmatpush2.bf16.xpose.msra.mxu0 0
      %2450 = vmatprep.subr.bf16.mxu0 0
      %2451 = vmatpush2.bf16.xpose.msra.mxu0 0
      %2452 = vmatprep.subr.bf16.mxu0 0
      %2453 = vmatpush2.bf16.xpose.msra.mxu0 0
      %2454 = vmatprep.subr.bf16.mxu0 0
      %2455 = vmatpush2.bf16.xpose.msra.mxu0 0
      %2456 = vmatprep.subr.bf16.mxu0 0
      %2457 = vmatpush2.bf16.xpose.msra.mxu0 0
      %2458 = vmatprep.subr.bf16.mxu0 0
      %2459 = vmatpush2.bf16.xpose.msra.mxu0 0
      %2460 = vmatprep.mubr.bf16.mxu0 0
      %2461 = vmatmul.mubr.bf16.gmra.mxu0 %v2423
      %v2462 = vpop.f32.mrf.mxu0
      %v2463 = vadd.f32 %v571, %v2462
      %v2464 = vpop.f32.mrf.mxu0
      %v2465 = vpop.f32.mrf.mxu0
      %v2466 = vpop.f32.mrf.mxu0
      %2467 = vdwg.mxu0
      %v2468 = vsel %vm575, %v2319, -inf
      %2469 = vmax.xlane.f32.xlu0 %v2468
      %v2470 = vpop.xlane.xlu0 %2469
      %v2471 = vsel %vm575, %v2367, -inf
      %2472 = vmax.xlane.f32.xlu0 %v2471
      %v2473 = vpop.xlane.xlu0 %2472
      %v2474 = vsel %vm575, %v2415, -inf
      %2475 = vmax.xlane.f32.xlu0 %v2474
      %v2476 = vpop.xlane.xlu0 %2475
      %v2477 = vsel %vm575, %v2463, -inf
      %2478 = vmax.xlane.f32.xlu0 %v2477
      %v2479 = vpop.xlane.xlu0 %2478
      %v2480 = vsub.f32 %v2319, %v2470
      %v2481 = vsub.f32 %v2367, %v2473
      %v2482 = vsub.f32 %v2415, %v2476
      %v2483 = vsub.f32 %v2463, %v2479
      %v2484 = vmul.f32 %v2480, 1.442695
      %v2485 = vpow.pop %v2484
      %v2486 = vmul.f32 %v2481, 1.442695
      %v2487 = vpow.pop %v2486
      %v2488 = vmul.f32 %v2482, 1.442695
      %v2489 = vpow.pop %v2488
      %v2490 = vmul.f32 %v2483, 1.442695
      %v2491 = vpow.pop %v2490
      %v2492 = vsel %vm575, %v2485, 0.0
      %2493 = vadd.xlane.f32.xlu0 %v2492
      %v2494 = vpop.xlane.xlu0 %2493
      %v2495 = vsel %vm575, %v2487, 0.0
      %2496 = vadd.xlane.f32.xlu0 %v2495
      %v2497 = vpop.xlane.xlu0 %2496
      %v2498 = vsel %vm575, %v2489, 0.0
      %2499 = vadd.xlane.f32.xlu0 %v2498
      %v2500 = vpop.xlane.xlu0 %2499
      %v2501 = vsel %vm575, %v2491, 0.0
      %2502 = vadd.xlane.f32.xlu0 %v2501
      %v2503 = vpop.xlane.xlu0 %2502
      %v2504 = vmax.f32 %v2494, 1e-09
      %v2505 = vmax.f32 %v2497, 1e-09
      %v2506 = vmax.f32 %v2500, 1e-09
      %v2507 = vmax.f32 %v2503, 1e-09
      %v2508 = vrcp.pop %v2504
      %v2509 = vrcp.pop %v2505
      %v2510 = vrcp.pop %v2506
      %v2511 = vrcp.pop %v2507
      %v2512 = vmul.f32 %v2485, %v2508
      %v2513 = vmul.f32 %v2487, %v2509
      %v2514 = vmul.f32 %v2489, %v2510
      %v2515 = vmul.f32 %v2491, %v2511
      %v2516 = vpack.c.bf16 %v2512, %v2512
      %v2517 = vpack.c.bf16 %v2513, %v2513
      %v2518 = vpack.c.bf16 %v2514, %v2514
      %v2519 = vpack.c.bf16 %v2515, %v2515
      %2520 = vrot.lane.b32.xlu0 %v2261, 64
      %v2521 = vpop.permute.xlu0 %2520
      %v2523 = vsel %vm575, %v2516, 0
      %v2526 = vsel %vm823, %v2521, 0
      %2528 = vmatprep.subr.bf16.mxu0 0
      %2529 = vmatpush1.bf16.msra.mxu0 0
      %2530 = vmatprep.subr.bf16.mxu0 0
      %2531 = vmatpush1.bf16.msra.mxu0 0
      %2532 = vmatprep.subr.bf16.mxu0 0
      %2533 = vmatpush1.bf16.msra.mxu0 0
      %2534 = vmatprep.subr.bf16.mxu0 0
      %2535 = vmatpush1.bf16.msra.mxu0 0
      %2536 = vmatprep.subr.bf16.mxu0 0
      %2537 = vmatpush1.bf16.msra.mxu0 0
      %2538 = vmatprep.subr.bf16.mxu0 0
      %2539 = vmatpush1.bf16.msra.mxu0 0
      %2540 = vmatprep.subr.bf16.mxu0 0
      %2541 = vmatpush1.bf16.msra.mxu0 0
      %2542 = vmatprep.subr.bf16.mxu0 0
      %2543 = vmatpush1.bf16.msra.mxu0 %v2526
      %2544 = vmatprep.subr.bf16.mxu0 0
      %2545 = vmatpush2.bf16.msra.mxu0 0
      %2546 = vmatprep.subr.bf16.mxu0 0
      %2547 = vmatpush2.bf16.msra.mxu0 0
      %2548 = vmatprep.subr.bf16.mxu0 0
      %2549 = vmatpush2.bf16.msra.mxu0 0
      %2550 = vmatprep.subr.bf16.mxu0 0
      %2551 = vmatpush2.bf16.msra.mxu0 0
      %2552 = vmatprep.subr.bf16.mxu0 0
      %2553 = vmatpush2.bf16.msra.mxu0 0
      %2554 = vmatprep.subr.bf16.mxu0 0
      %2555 = vmatpush2.bf16.msra.mxu0 0
      %2556 = vmatprep.subr.bf16.mxu0 0
      %2557 = vmatpush2.bf16.msra.mxu0 0
      %2558 = vmatprep.subr.bf16.mxu0 0
      %2559 = vmatpush2.bf16.msra.mxu0 0
      %2560 = vmatprep.mubr.bf16.mxu0 0
      %2561 = vmatmul.mubr.bf16.gmra.mxu0 %v2523
      %v2562 = vpop.f32.mrf.mxu0
      %v2563 = vadd.f32 0.0, %v2562
      %v2564 = vpop.f32.mrf.mxu0
      %v2565 = vpop.f32.mrf.mxu0
      %v2566 = vpop.f32.mrf.mxu0
      %2567 = vdwg.mxu0
      %2568 = vrot.lane.b32.xlu0 %v2271, 64
      %v2569 = vpop.permute.xlu0 %2568
      %v2571 = vsel %vm575, %v2517, 0
      %v2574 = vsel %vm823, %v2569, 0
      %2576 = vmatprep.subr.bf16.mxu0 0
      %2577 = vmatpush1.bf16.msra.mxu0 0
      %2578 = vmatprep.subr.bf16.mxu0 0
      %2579 = vmatpush1.bf16.msra.mxu0 0
      %2580 = vmatprep.subr.bf16.mxu0 0
      %2581 = vmatpush1.bf16.msra.mxu0 0
      %2582 = vmatprep.subr.bf16.mxu0 0
      %2583 = vmatpush1.bf16.msra.mxu0 0
      %2584 = vmatprep.subr.bf16.mxu0 0
      %2585 = vmatpush1.bf16.msra.mxu0 0
      %2586 = vmatprep.subr.bf16.mxu0 0
      %2587 = vmatpush1.bf16.msra.mxu0 0
      %2588 = vmatprep.subr.bf16.mxu0 0
      %2589 = vmatpush1.bf16.msra.mxu0 0
      %2590 = vmatprep.subr.bf16.mxu0 0
      %2591 = vmatpush1.bf16.msra.mxu0 %v2574
      %2592 = vmatprep.subr.bf16.mxu0 0
      %2593 = vmatpush2.bf16.msra.mxu0 0
      %2594 = vmatprep.subr.bf16.mxu0 0
      %2595 = vmatpush2.bf16.msra.mxu0 0
      %2596 = vmatprep.subr.bf16.mxu0 0
      %2597 = vmatpush2.bf16.msra.mxu0 0
      %2598 = vmatprep.subr.bf16.mxu0 0
      %2599 = vmatpush2.bf16.msra.mxu0 0
      %2600 = vmatprep.subr.bf16.mxu0 0
      %2601 = vmatpush2.bf16.msra.mxu0 0
      %2602 = vmatprep.subr.bf16.mxu0 0
      %2603 = vmatpush2.bf16.msra.mxu0 0
      %2604 = vmatprep.subr.bf16.mxu0 0
      %2605 = vmatpush2.bf16.msra.mxu0 0
      %2606 = vmatprep.subr.bf16.mxu0 0
      %2607 = vmatpush2.bf16.msra.mxu0 0
      %2608 = vmatprep.mubr.bf16.mxu0 0
      %2609 = vmatmul.mubr.bf16.gmra.mxu0 %v2571
      %v2610 = vpop.f32.mrf.mxu0
      %v2611 = vadd.f32 0.0, %v2610
      %v2612 = vpop.f32.mrf.mxu0
      %v2613 = vpop.f32.mrf.mxu0
      %v2614 = vpop.f32.mrf.mxu0
      %2615 = vdwg.mxu0
      %2616 = vrot.lane.b32.xlu0 %v2273, 64
      %v2617 = vpop.permute.xlu0 %2616
      %v2619 = vsel %vm575, %v2518, 0
      %v2622 = vsel %vm823, %v2617, 0
      %2624 = vmatprep.subr.bf16.mxu0 0
      %2625 = vmatpush1.bf16.msra.mxu0 0
      %2626 = vmatprep.subr.bf16.mxu0 0
      %2627 = vmatpush1.bf16.msra.mxu0 0
      %2628 = vmatprep.subr.bf16.mxu0 0
      %2629 = vmatpush1.bf16.msra.mxu0 0
      %2630 = vmatprep.subr.bf16.mxu0 0
      %2631 = vmatpush1.bf16.msra.mxu0 0
      %2632 = vmatprep.subr.bf16.mxu0 0
      %2633 = vmatpush1.bf16.msra.mxu0 0
      %2634 = vmatprep.subr.bf16.mxu0 0
      %2635 = vmatpush1.bf16.msra.mxu0 0
      %2636 = vmatprep.subr.bf16.mxu0 0
      %2637 = vmatpush1.bf16.msra.mxu0 0
      %2638 = vmatprep.subr.bf16.mxu0 0
      %2639 = vmatpush1.bf16.msra.mxu0 %v2622
      %2640 = vmatprep.subr.bf16.mxu0 0
      %2641 = vmatpush2.bf16.msra.mxu0 0
      %2642 = vmatprep.subr.bf16.mxu0 0
      %2643 = vmatpush2.bf16.msra.mxu0 0
      %2644 = vmatprep.subr.bf16.mxu0 0
      %2645 = vmatpush2.bf16.msra.mxu0 0
      %2646 = vmatprep.subr.bf16.mxu0 0
      %2647 = vmatpush2.bf16.msra.mxu0 0
      %2648 = vmatprep.subr.bf16.mxu0 0
      %2649 = vmatpush2.bf16.msra.mxu0 0
      %2650 = vmatprep.subr.bf16.mxu0 0
      %2651 = vmatpush2.bf16.msra.mxu0 0
      %2652 = vmatprep.subr.bf16.mxu0 0
      %2653 = vmatpush2.bf16.msra.mxu0 0
      %2654 = vmatprep.subr.bf16.mxu0 0
      %2655 = vmatpush2.bf16.msra.mxu0 0
      %2656 = vmatprep.mubr.bf16.mxu0 0
      %2657 = vmatmul.mubr.bf16.gmra.mxu0 %v2619
      %v2658 = vpop.f32.mrf.mxu0
      %v2659 = vadd.f32 0.0, %v2658
      %v2660 = vpop.f32.mrf.mxu0
      %v2661 = vpop.f32.mrf.mxu0
      %v2662 = vpop.f32.mrf.mxu0
      %2663 = vdwg.mxu0
      %2664 = vrot.lane.b32.xlu0 %v2275, 64
      %v2665 = vpop.permute.xlu0 %2664
      %v2667 = vsel %vm575, %v2519, 0
      %v2670 = vsel %vm823, %v2665, 0
      %2672 = vmatprep.subr.bf16.mxu0 0
      %2673 = vmatpush1.bf16.msra.mxu0 0
      %2674 = vmatprep.subr.bf16.mxu0 0
      %2675 = vmatpush1.bf16.msra.mxu0 0
      %2676 = vmatprep.subr.bf16.mxu0 0
      %2677 = vmatpush1.bf16.msra.mxu0 0
      %2678 = vmatprep.subr.bf16.mxu0 0
      %2679 = vmatpush1.bf16.msra.mxu0 0
      %2680 = vmatprep.subr.bf16.mxu0 0
      %2681 = vmatpush1.bf16.msra.mxu0 0
      %2682 = vmatprep.subr.bf16.mxu0 0
      %2683 = vmatpush1.bf16.msra.mxu0 0
      %2684 = vmatprep.subr.bf16.mxu0 0
      %2685 = vmatpush1.bf16.msra.mxu0 0
      %2686 = vmatprep.subr.bf16.mxu0 0
      %2687 = vmatpush1.bf16.msra.mxu0 %v2670
      %2688 = vmatprep.subr.bf16.mxu0 0
      %2689 = vmatpush2.bf16.msra.mxu0 0
      %2690 = vmatprep.subr.bf16.mxu0 0
      %2691 = vmatpush2.bf16.msra.mxu0 0
      %2692 = vmatprep.subr.bf16.mxu0 0
      %2693 = vmatpush2.bf16.msra.mxu0 0
      %2694 = vmatprep.subr.bf16.mxu0 0
      %2695 = vmatpush2.bf16.msra.mxu0 0
      %2696 = vmatprep.subr.bf16.mxu0 0
      %2697 = vmatpush2.bf16.msra.mxu0 0
      %2698 = vmatprep.subr.bf16.mxu0 0
      %2699 = vmatpush2.bf16.msra.mxu0 0
      %2700 = vmatprep.subr.bf16.mxu0 0
      %2701 = vmatpush2.bf16.msra.mxu0 0
      %2702 = vmatprep.subr.bf16.mxu0 0
      %2703 = vmatpush2.bf16.msra.mxu0 0
      %2704 = vmatprep.mubr.bf16.mxu0 0
      %2705 = vmatmul.mubr.bf16.gmra.mxu0 %v2667
      %v2706 = vpop.f32.mrf.mxu0
      %v2707 = vadd.f32 0.0, %v2706
      %v2708 = vpop.f32.mrf.mxu0
      %v2709 = vpop.f32.mrf.mxu0
      %v2710 = vpop.f32.mrf.mxu0
      %2711 = vdwg.mxu0
      %2713 = vrot.lane.b32.xlu0 %v2611, 8
      %v2714 = vpop.permute.xlu0 %2713
      %2717 = vrot.lane.b32.xlu0 %v2659, 16
      %v2718 = vpop.permute.xlu0 %2717
      %2721 = vrot.lane.b32.xlu0 %v2707, 24
      %v2722 = vpop.permute.xlu0 %2721
      %v2724 = vsel %vm575, %v2563, %v2714
      %v2725 = vsel %vm1024, %v2724, %v2718
      %v2726 = vsel %vm1026, %v2725, %v2722
      %v2727 = vpack.c.bf16 %v2726, %v2726
      %s2728 = scalar_lea.vmem %s4, 32
      %v2729 = vld [vmem:[%s2728] sm:$0xf]
      %v2730 = vld [vmem:[%s2728 + $0x4] sm:$0xf]
      %v2731 = vld [vmem:[%s2728 + $0x8] sm:$0xf]
      %v2732 = vld [vmem:[%s2728 + $0xc] sm:$0xf]
      %s2733 = scalar_lea.vmem %s5, 2
      %v2734 = vld [vmem:[%s2733] sm:$0x1]
      %v2736 = vlaneseq
      %v2737 = vshrl.u32 %v2736, 7
      %v2738 = vsub.s32 0, %v2737
      %v2739 = vrot.slane %v2734, %v2738
      %v2745 = vunpack.c.l.b16 %v2729
      %v2746 = vunpack.c.l.b16 %v2730
      %v2747 = vunpack.c.l.b16 %v2731
      %v2748 = vunpack.c.l.b16 %v2732
      %v2749 = vpack.c.b16 %v2746, %v2745
      %v2750 = vpack.c.b16 %v2748, %v2747
      %v2754 = vsel %vm506, %v2727, 0
      %2756 = vmatprep.subr.bf16.mxu0 0
      %2757 = vmatpush1.bf16.msra.mxu0 0
      %2758 = vmatprep.subr.bf16.mxu0 0
      %2759 = vmatpush1.bf16.msra.mxu0 0
      %2760 = vmatprep.subr.bf16.mxu0 0
      %2761 = vmatpush1.bf16.msra.mxu0 0
      %2762 = vmatprep.subr.bf16.mxu0 0
      %2763 = vmatpush1.bf16.msra.mxu0 0
      %2764 = vmatprep.subr.bf16.mxu0 0
      %2765 = vmatpush1.bf16.msra.mxu0 0
      %2766 = vmatprep.subr.bf16.mxu0 0
      %2767 = vmatpush1.bf16.msra.mxu0 0
      %2768 = vmatprep.subr.bf16.mxu0 0
      %2769 = vmatpush1.bf16.msra.mxu0 %v2750
      %2770 = vmatprep.subr.bf16.mxu0 0
      %2771 = vmatpush1.bf16.msra.mxu0 %v2749
      %2772 = vmatprep.subr.bf16.mxu0 0
      %2773 = vmatpush2.bf16.msra.mxu0 0
      %2774 = vmatprep.subr.bf16.mxu0 0
      %2775 = vmatpush2.bf16.msra.mxu0 0
      %2776 = vmatprep.subr.bf16.mxu0 0
      %2777 = vmatpush2.bf16.msra.mxu0 0
      %2778 = vmatprep.subr.bf16.mxu0 0
      %2779 = vmatpush2.bf16.msra.mxu0 0
      %2780 = vmatprep.subr.bf16.mxu0 0
      %2781 = vmatpush2.bf16.msra.mxu0 0
      %2782 = vmatprep.subr.bf16.mxu0 0
      %2783 = vmatpush2.bf16.msra.mxu0 0
      %2784 = vmatprep.subr.bf16.mxu0 0
      %2785 = vmatpush2.bf16.msra.mxu0 0
      %2786 = vmatprep.subr.bf16.mxu0 0
      %2787 = vmatpush2.bf16.msra.mxu0 0
      %2788 = vmatprep.mubr.bf16.mxu0 0
      %2789 = vmatmul.mubr.bf16.gmra.mxu0 %v2754
      %v2790 = vpop.f32.mrf.mxu0
      %v2791 = vadd.f32 %v2739, %v2790
      %v2792 = vpop.f32.mrf.mxu0
      %v2793 = vpop.f32.mrf.mxu0
      %v2794 = vpop.f32.mrf.mxu0
      %2795 = vdwg.mxu0
      %v2796 = vadd.f32 %v2189, %v2791
      %s2797 = scalar_lea.vmem %s6, 2
      %v2798 = vld [vmem:[%s2797] sm:$0x1]
      %s2799 = scalar_lea.vmem %s7, 2
      %v2800 = vld [vmem:[%s2799] sm:$0x1]
      %v2801 = vsel %vm506, %v2796, 0.0
      %2802 = vadd.xlane.f32.xlu0 %v2801
      %v2803 = vpop.xlane.xlu0 %2802
      %v2804 = vmul.f32 %v2803, %v1101
      %v2805 = vsub.f32 %v2796, %v2804
      %v2806 = vmul.f32 %v2805, %v2805
      %v2807 = vsel %vm506, %v2806, 0.0
      %2808 = vadd.xlane.f32.xlu0 %v2807
      %v2809 = vpop.xlane.xlu0 %2808
      %v2810 = vmul.f32 %v2809, %v1101
      %v2811 = vadd.f32 %v2810, 1e-05
      %v2812 = vrsqrt.pop %v2811
      %v2813 = vmul.f32 %v2805, %v2812
      %v2815 = vlaneseq
      %v2816 = vshrl.u32 %v2815, 7
      %v2817 = vsub.s32 0, %v2816
      %v2818 = vrot.slane %v2798, %v2817
      %v2820 = vmul.f32 %v2813, %v2818
      %v2822 = vlaneseq
      %v2823 = vshrl.u32 %v2822, 7
      %v2824 = vsub.s32 0, %v2823
      %v2825 = vrot.slane %v2800, %v2824
      %v2827 = vadd.f32 %v2820, %v2825
      %v2828 = vpack.c.bf16 %v2827, %v2827
      %s2829 = scalar_lea.vmem %s8, 32
      %v2830 = vld [vmem:[%s2829] sm:$0xf]
      %v2831 = vld [vmem:[%s2829 + $0x4] sm:$0xf]
      %v2832 = vld [vmem:[%s2829 + $0x8] sm:$0xf]
      %v2833 = vld [vmem:[%s2829 + $0xc] sm:$0xf]
      %s2834 = scalar_lea.vmem %s9, 2
      %v2835 = vld [vmem:[%s2834] sm:$0x1]
      %v2837 = vlaneseq
      %v2838 = vshrl.u32 %v2837, 7
      %v2839 = vsub.s32 0, %v2838
      %v2840 = vrot.slane %v2835, %v2839
      %v2846 = vunpack.c.l.b16 %v2830
      %v2847 = vunpack.c.l.b16 %v2831
      %v2848 = vunpack.c.l.b16 %v2832
      %v2849 = vunpack.c.l.b16 %v2833
      %v2850 = vpack.c.b16 %v2847, %v2846
      %v2851 = vpack.c.b16 %v2849, %v2848
      %v2855 = vsel %vm506, %v2828, 0
      %2857 = vmatprep.subr.bf16.mxu0 0
      %2858 = vmatpush1.bf16.msra.mxu0 0
      %2859 = vmatprep.subr.bf16.mxu0 0
      %2860 = vmatpush1.bf16.msra.mxu0 0
      %2861 = vmatprep.subr.bf16.mxu0 0
      %2862 = vmatpush1.bf16.msra.mxu0 0
      %2863 = vmatprep.subr.bf16.mxu0 0
      %2864 = vmatpush1.bf16.msra.mxu0 0
      %2865 = vmatprep.subr.bf16.mxu0 0
      %2866 = vmatpush1.bf16.msra.mxu0 0
      %2867 = vmatprep.subr.bf16.mxu0 0
      %2868 = vmatpush1.bf16.msra.mxu0 0
      %2869 = vmatprep.subr.bf16.mxu0 0
      %2870 = vmatpush1.bf16.msra.mxu0 %v2851
      %2871 = vmatprep.subr.bf16.mxu0 0
      %2872 = vmatpush1.bf16.msra.mxu0 %v2850
      %2873 = vmatprep.subr.bf16.mxu0 0
      %2874 = vmatpush2.bf16.msra.mxu0 0
      %2875 = vmatprep.subr.bf16.mxu0 0
      %2876 = vmatpush2.bf16.msra.mxu0 0
      %2877 = vmatprep.subr.bf16.mxu0 0
      %2878 = vmatpush2.bf16.msra.mxu0 0
      %2879 = vmatprep.subr.bf16.mxu0 0
      %2880 = vmatpush2.bf16.msra.mxu0 0
      %2881 = vmatprep.subr.bf16.mxu0 0
      %2882 = vmatpush2.bf16.msra.mxu0 0
      %2883 = vmatprep.subr.bf16.mxu0 0
      %2884 = vmatpush2.bf16.msra.mxu0 0
      %2885 = vmatprep.subr.bf16.mxu0 0
      %2886 = vmatpush2.bf16.msra.mxu0 0
      %2887 = vmatprep.subr.bf16.mxu0 0
      %2888 = vmatpush2.bf16.msra.mxu0 0
      %2889 = vmatprep.mubr.bf16.mxu0 0
      %2890 = vmatmul.mubr.bf16.gmra.mxu0 %v2855
      %v2891 = vpop.f32.mrf.mxu0
      %v2892 = vadd.f32 %v2840, %v2891
      %v2893 = vpop.f32.mrf.mxu0
      %v2894 = vpop.f32.mrf.mxu0
      %v2895 = vpop.f32.mrf.mxu0
      %2896 = vdwg.mxu0
      %v2897 = vmax.f32 %v2892, 0.0
      %v2898 = vpack.c.bf16 %v2897, %v2897
      %s2899 = scalar_lea.vmem %s10, 128
      %v2900 = vld [vmem:[%s2899] sm:$0xf]
      %v2901 = vld [vmem:[%s2899 + $0x4] sm:$0xf]
      %v2902 = vld [vmem:[%s2899 + $0x8] sm:$0xf]
      %v2903 = vld [vmem:[%s2899 + $0xc] sm:$0xf]
      %v2904 = vld [vmem:[%s2899 + $0x10] sm:$0xf]
      %v2905 = vld [vmem:[%s2899 + $0x14] sm:$0xf]
      %v2906 = vld [vmem:[%s2899 + $0x18] sm:$0xf]
      %v2907 = vld [vmem:[%s2899 + $0x1c] sm:$0xf]
      %v2908 = vld [vmem:[%s2899 + $0x20] sm:$0xf]
      %v2909 = vld [vmem:[%s2899 + $0x24] sm:$0xf]
      %v2910 = vld [vmem:[%s2899 + $0x28] sm:$0xf]
      %v2911 = vld [vmem:[%s2899 + $0x2c] sm:$0xf]
      %v2912 = vld [vmem:[%s2899 + $0x30] sm:$0xf]
      %v2913 = vld [vmem:[%s2899 + $0x34] sm:$0xf]
      %v2914 = vld [vmem:[%s2899 + $0x38] sm:$0xf]
      %v2915 = vld [vmem:[%s2899 + $0x3c] sm:$0xf]
      %s2916 = scalar_lea.vmem %s11, 2
      %v2917 = vld [vmem:[%s2916] sm:$0x1]
      %v2919 = vlaneseq
      %v2920 = vshrl.u32 %v2919, 7
      %v2921 = vsub.s32 0, %v2920
      %v2922 = vrot.slane %v2917, %v2921
      %v2940 = vunpack.c.l.b16 %v2900
      %v2941 = vunpack.c.l.b16 %v2901
      %v2942 = vunpack.c.l.b16 %v2902
      %v2943 = vunpack.c.l.b16 %v2903
      %v2944 = vunpack.c.l.b16 %v2904
      %v2945 = vunpack.c.l.b16 %v2905
      %v2946 = vunpack.c.l.b16 %v2906
      %v2947 = vunpack.c.l.b16 %v2907
      %v2948 = vunpack.c.l.b16 %v2908
      %v2949 = vunpack.c.l.b16 %v2909
      %v2950 = vunpack.c.l.b16 %v2910
      %v2951 = vunpack.c.l.b16 %v2911
      %v2952 = vunpack.c.l.b16 %v2912
      %v2953 = vunpack.c.l.b16 %v2913
      %v2954 = vunpack.c.l.b16 %v2914
      %v2955 = vunpack.c.l.b16 %v2915
      %v2956 = vpack.c.b16 %v2941, %v2940
      %v2957 = vpack.c.b16 %v2943, %v2942
      %v2958 = vpack.c.b16 %v2945, %v2944
      %v2959 = vpack.c.b16 %v2947, %v2946
      %v2960 = vpack.c.b16 %v2949, %v2948
      %v2961 = vpack.c.b16 %v2951, %v2950
      %v2962 = vpack.c.b16 %v2953, %v2952
      %v2963 = vpack.c.b16 %v2955, %v2954
      %2972 = vmatprep.subr.bf16.mxu0 0
      %2973 = vmatpush1.bf16.msra.mxu0 %v2963
      %2974 = vmatprep.subr.bf16.mxu0 0
      %2975 = vmatpush1.bf16.msra.mxu0 %v2962
      %2976 = vmatprep.subr.bf16.mxu0 0
      %2977 = vmatpush1.bf16.msra.mxu0 %v2961
      %2978 = vmatprep.subr.bf16.mxu0 0
      %2979 = vmatpush1.bf16.msra.mxu0 %v2960
      %2980 = vmatprep.subr.bf16.mxu0 0
      %2981 = vmatpush1.bf16.msra.mxu0 %v2959
      %2982 = vmatprep.subr.bf16.mxu0 0
      %2983 = vmatpush1.bf16.msra.mxu0 %v2958
      %2984 = vmatprep.subr.bf16.mxu0 0
      %2985 = vmatpush1.bf16.msra.mxu0 %v2957
      %2986 = vmatprep.subr.bf16.mxu0 0
      %2987 = vmatpush1.bf16.msra.mxu0 %v2956
      %2988 = vmatprep.subr.bf16.mxu0 0
      %2989 = vmatpush2.bf16.msra.mxu0 0
      %2990 = vmatprep.subr.bf16.mxu0 0
      %2991 = vmatpush2.bf16.msra.mxu0 0
      %2992 = vmatprep.subr.bf16.mxu0 0
      %2993 = vmatpush2.bf16.msra.mxu0 0
      %2994 = vmatprep.subr.bf16.mxu0 0
      %2995 = vmatpush2.bf16.msra.mxu0 0
      %2996 = vmatprep.subr.bf16.mxu0 0
      %2997 = vmatpush2.bf16.msra.mxu0 0
      %2998 = vmatprep.subr.bf16.mxu0 0
      %2999 = vmatpush2.bf16.msra.mxu0 0
      %3000 = vmatprep.subr.bf16.mxu0 0
      %3001 = vmatpush2.bf16.msra.mxu0 0
      %3002 = vmatprep.subr.bf16.mxu0 0
      %3003 = vmatpush2.bf16.msra.mxu0 0
      %3004 = vmatprep.mubr.bf16.mxu0 0
      %3005 = vmatmul.mubr.bf16.gmra.mxu0 %v2898
      %v3006 = vpop.f32.mrf.mxu0
      %v3007 = vadd.f32 %v2922, %v3006
      %v3008 = vpop.f32.mrf.mxu0
      %v3009 = vpop.f32.mrf.mxu0
      %v3010 = vpop.f32.mrf.mxu0
      %3011 = vdwg.mxu0
      %v3012 = vadd.f32 %v2827, %v3007
      %s3013 = scalar_lea.vmem %s12, 2
      %v3014 = vld [vmem:[%s3013] sm:$0x1]
      %s3015 = scalar_lea.vmem %s13, 2
      %v3016 = vld [vmem:[%s3015] sm:$0x1]
      %v3017 = vsel %vm506, %v3012, 0.0
      %3018 = vadd.xlane.f32.xlu0 %v3017
      %v3019 = vpop.xlane.xlu0 %3018
      %v3020 = vmul.f32 %v3019, %v1101
      %v3021 = vsub.f32 %v3012, %v3020
      %v3022 = vmul.f32 %v3021, %v3021
      %v3023 = vsel %vm506, %v3022, 0.0
      %3024 = vadd.xlane.f32.xlu0 %v3023
      %v3025 = vpop.xlane.xlu0 %3024
      %v3026 = vmul.f32 %v3025, %v1101
      %v3027 = vadd.f32 %v3026, 1e-05
      %v3028 = vrsqrt.pop %v3027
      %v3029 = vmul.f32 %v3021, %v3028
      %v3031 = vlaneseq
      %v3032 = vshrl.u32 %v3031, 7
      %v3033 = vsub.s32 0, %v3032
      %v3034 = vrot.slane %v3014, %v3033
      %v3036 = vmul.f32 %v3029, %v3034
      %v3038 = vlaneseq
      %v3039 = vshrl.u32 %v3038, 7
      %v3040 = vsub.s32 0, %v3039
      %v3041 = vrot.slane %v3016, %v3040
      %v3043 = vadd.f32 %v3036, %v3041
      %v3044 = vpack.c.bf16 %v3043, %v3043
      %s3045 = scalar_lea.vmem %s2, 48
      %v3046 = vld [vmem:[%s3045] sm:$0xf]
      %v3047 = vld [vmem:[%s3045 + $0x4] sm:$0xf]
      %v3048 = vld [vmem:[%s3045 + $0x8] sm:$0xf]
      %v3049 = vld [vmem:[%s3045 + $0xc] sm:$0xf]
      %s3050 = scalar_lea.vmem %s3, 3
      %v3051 = vld [vmem:[%s3050] sm:$0x1]
      %v3053 = vlaneseq
      %v3054 = vshrl.u32 %v3053, 7
      %v3055 = vsub.s32 0, %v3054
      %v3056 = vrot.slane %v3051, %v3055
      %v3062 = vunpack.c.l.b16 %v3046
      %v3063 = vunpack.c.l.b16 %v3047
      %v3064 = vunpack.c.l.b16 %v3048
      %v3065 = vunpack.c.l.b16 %v3049
      %v3066 = vpack.c.b16 %v3063, %v3062
      %v3067 = vpack.c.b16 %v3065, %v3064
      %v3071 = vsel %vm506, %v3044, 0
      %3073 = vmatprep.subr.bf16.mxu0 0
      %3074 = vmatpush1.bf16.msra.mxu0 0
      %3075 = vmatprep.subr.bf16.mxu0 0
      %3076 = vmatpush1.bf16.msra.mxu0 0
      %3077 = vmatprep.subr.bf16.mxu0 0
      %3078 = vmatpush1.bf16.msra.mxu0 0
      %3079 = vmatprep.subr.bf16.mxu0 0
      %3080 = vmatpush1.bf16.msra.mxu0 0
      %3081 = vmatprep.subr.bf16.mxu0 0
      %3082 = vmatpush1.bf16.msra.mxu0 0
      %3083 = vmatprep.subr.bf16.mxu0 0
      %3084 = vmatpush1.bf16.msra.mxu0 0
      %3085 = vmatprep.subr.bf16.mxu0 0
      %3086 = vmatpush1.bf16.msra.mxu0 %v3067
      %3087 = vmatprep.subr.bf16.mxu0 0
      %3088 = vmatpush1.bf16.msra.mxu0 %v3066
      %3089 = vmatprep.subr.bf16.mxu0 0
      %3090 = vmatpush2.bf16.msra.mxu0 0
      %3091 = vmatprep.subr.bf16.mxu0 0
      %3092 = vmatpush2.bf16.msra.mxu0 0
      %3093 = vmatprep.subr.bf16.mxu0 0
      %3094 = vmatpush2.bf16.msra.mxu0 0
      %3095 = vmatprep.subr.bf16.mxu0 0
      %3096 = vmatpush2.bf16.msra.mxu0 0
      %3097 = vmatprep.subr.bf16.mxu0 0
      %3098 = vmatpush2.bf16.msra.mxu0 0
      %3099 = vmatprep.subr.bf16.mxu0 0
      %3100 = vmatpush2.bf16.msra.mxu0 0
      %3101 = vmatprep.subr.bf16.mxu0 0
      %3102 = vmatpush2.bf16.msra.mxu0 0
      %3103 = vmatprep.subr.bf16.mxu0 0
      %3104 = vmatpush2.bf16.msra.mxu0 0
      %3105 = vmatprep.mubr.bf16.mxu0 0
      %3106 = vmatmul.mubr.bf16.gmra.mxu0 %v3071
      %v3107 = vpop.f32.mrf.mxu0
      %v3108 = vadd.f32 %v3056, %v3107
      %v3109 = vpop.f32.mrf.mxu0
      %v3110 = vpop.f32.mrf.mxu0
      %v3111 = vpop.f32.mrf.mxu0
      %3112 = vdwg.mxu0
      %v3113 = vmul.f32 %v3108, 0.35355338
      %v3114 = vpack.c.bf16 %v3113, %v3113
      %v3115 = vpack.c.bf16 %v3108, %v3108
      %3117 = vrot.lane.b32.xlu0 %v3114, 120
      %v3118 = vpop.permute.xlu0 %3117
      %3119 = vrot.lane.b32.xlu0 %v3114, 112
      %v3120 = vpop.permute.xlu0 %3119
      %3121 = vrot.lane.b32.xlu0 %v3114, 104
      %v3122 = vpop.permute.xlu0 %3121
      %3124 = vrot.lane.b32.xlu0 %v3115, 120
      %v3125 = vpop.permute.xlu0 %3124
      %3126 = vrot.lane.b32.xlu0 %v3115, 112
      %v3127 = vpop.permute.xlu0 %3126
      %3128 = vrot.lane.b32.xlu0 %v3115, 104
      %v3129 = vpop.permute.xlu0 %3128
      %3130 = vrot.lane.b32.xlu0 %v3115, 96
      %v3131 = vpop.permute.xlu0 %3130
      %v3133 = vsel %vm575, %v3114, 0
      %v3136 = vsel %vm575, %v3131, 0
      %3138 = vmatprep.subr.bf16.mxu0 0
      %3139 = vmatpush1.bf16.xpose.msra.mxu0 0
      %3140 = vmatprep.subr.bf16.mxu0 0
      %3141 = vmatpush1.bf16.xpose.msra.mxu0 0
      %3142 = vmatprep.subr.bf16.mxu0 0
      %3143 = vmatpush1.bf16.xpose.msra.mxu0 0
      %3144 = vmatprep.subr.bf16.mxu0 0
      %3145 = vmatpush1.bf16.xpose.msra.mxu0 0
      %3146 = vmatprep.subr.bf16.mxu0 0
      %3147 = vmatpush1.bf16.xpose.msra.mxu0 0
      %3148 = vmatprep.subr.bf16.mxu0 0
      %3149 = vmatpush1.bf16.xpose.msra.mxu0 0
      %3150 = vmatprep.subr.bf16.mxu0 0
      %3151 = vmatpush1.bf16.xpose.msra.mxu0 0
      %3152 = vmatprep.subr.bf16.mxu0 0
      %3153 = vmatpush1.bf16.xpose.msra.mxu0 %v3136
      %3154 = vmatprep.subr.bf16.mxu0 0
      %3155 = vmatpush2.bf16.xpose.msra.mxu0 0
      %3156 = vmatprep.subr.bf16.mxu0 0
      %3157 = vmatpush2.bf16.xpose.msra.mxu0 0
      %3158 = vmatprep.subr.bf16.mxu0 0
      %3159 = vmatpush2.bf16.xpose.msra.mxu0 0
      %3160 = vmatprep.subr.bf16.mxu0 0
      %3161 = vmatpush2.bf16.xpose.msra.mxu0 0
      %3162 = vmatprep.subr.bf16.mxu0 0
      %3163 = vmatpush2.bf16.xpose.msra.mxu0 0
      %3164 = vmatprep.subr.bf16.mxu0 0
      %3165 = vmatpush2.bf16.xpose.msra.mxu0 0
      %3166 = vmatprep.subr.bf16.mxu0 0
      %3167 = vmatpush2.bf16.xpose.msra.mxu0 0
      %3168 = vmatprep.subr.bf16.mxu0 0
      %3169 = vmatpush2.bf16.xpose.msra.mxu0 0
      %3170 = vmatprep.mubr.bf16.mxu0 0
      %3171 = vmatmul.mubr.bf16.gmra.mxu0 %v3133
      %v3172 = vpop.f32.mrf.mxu0
      %v3173 = vadd.f32 %v571, %v3172
      %v3174 = vpop.f32.mrf.mxu0
      %v3175 = vpop.f32.mrf.mxu0
      %v3176 = vpop.f32.mrf.mxu0
      %3177 = vdwg.mxu0
      %3178 = vrot.lane.b32.xlu0 %v3125, 96
      %v3179 = vpop.permute.xlu0 %3178
      %v3181 = vsel %vm575, %v3118, 0
      %v3184 = vsel %vm575, %v3179, 0
      %3186 = vmatprep.subr.bf16.mxu0 0
      %3187 = vmatpush1.bf16.xpose.msra.mxu0 0
      %3188 = vmatprep.subr.bf16.mxu0 0
      %3189 = vmatpush1.bf16.xpose.msra.mxu0 0
      %3190 = vmatprep.subr.bf16.mxu0 0
      %3191 = vmatpush1.bf16.xpose.msra.mxu0 0
      %3192 = vmatprep.subr.bf16.mxu0 0
      %3193 = vmatpush1.bf16.xpose.msra.mxu0 0
      %3194 = vmatprep.subr.bf16.mxu0 0
      %3195 = vmatpush1.bf16.xpose.msra.mxu0 0
      %3196 = vmatprep.subr.bf16.mxu0 0
      %3197 = vmatpush1.bf16.xpose.msra.mxu0 0
      %3198 = vmatprep.subr.bf16.mxu0 0
      %3199 = vmatpush1.bf16.xpose.msra.mxu0 0
      %3200 = vmatprep.subr.bf16.mxu0 0
      %3201 = vmatpush1.bf16.xpose.msra.mxu0 %v3184
      %3202 = vmatprep.subr.bf16.mxu0 0
      %3203 = vmatpush2.bf16.xpose.msra.mxu0 0
      %3204 = vmatprep.subr.bf16.mxu0 0
      %3205 = vmatpush2.bf16.xpose.msra.mxu0 0
      %3206 = vmatprep.subr.bf16.mxu0 0
      %3207 = vmatpush2.bf16.xpose.msra.mxu0 0
      %3208 = vmatprep.subr.bf16.mxu0 0
      %3209 = vmatpush2.bf16.xpose.msra.mxu0 0
      %3210 = vmatprep.subr.bf16.mxu0 0
      %3211 = vmatpush2.bf16.xpose.msra.mxu0 0
      %3212 = vmatprep.subr.bf16.mxu0 0
      %3213 = vmatpush2.bf16.xpose.msra.mxu0 0
      %3214 = vmatprep.subr.bf16.mxu0 0
      %3215 = vmatpush2.bf16.xpose.msra.mxu0 0
      %3216 = vmatprep.subr.bf16.mxu0 0
      %3217 = vmatpush2.bf16.xpose.msra.mxu0 0
      %3218 = vmatprep.mubr.bf16.mxu0 0
      %3219 = vmatmul.mubr.bf16.gmra.mxu0 %v3181
      %v3220 = vpop.f32.mrf.mxu0
      %v3221 = vadd.f32 %v571, %v3220
      %v3222 = vpop.f32.mrf.mxu0
      %v3223 = vpop.f32.mrf.mxu0
      %v3224 = vpop.f32.mrf.mxu0
      %3225 = vdwg.mxu0
      %3226 = vrot.lane.b32.xlu0 %v3127, 96
      %v3227 = vpop.permute.xlu0 %3226
      %v3229 = vsel %vm575, %v3120, 0
      %v3232 = vsel %vm575, %v3227, 0
      %3234 = vmatprep.subr.bf16.mxu0 0
      %3235 = vmatpush1.bf16.xpose.msra.mxu0 0
      %3236 = vmatprep.subr.bf16.mxu0 0
      %3237 = vmatpush1.bf16.xpose.msra.mxu0 0
      %3238 = vmatprep.subr.bf16.mxu0 0
      %3239 = vmatpush1.bf16.xpose.msra.mxu0 0
      %3240 = vmatprep.subr.bf16.mxu0 0
      %3241 = vmatpush1.bf16.xpose.msra.mxu0 0
      %3242 = vmatprep.subr.bf16.mxu0 0
      %3243 = vmatpush1.bf16.xpose.msra.mxu0 0
      %3244 = vmatprep.subr.bf16.mxu0 0
      %3245 = vmatpush1.bf16.xpose.msra.mxu0 0
      %3246 = vmatprep.subr.bf16.mxu0 0
      %3247 = vmatpush1.bf16.xpose.msra.mxu0 0
      %3248 = vmatprep.subr.bf16.mxu0 0
      %3249 = vmatpush1.bf16.xpose.msra.mxu0 %v3232
      %3250 = vmatprep.subr.bf16.mxu0 0
      %3251 = vmatpush2.bf16.xpose.msra.mxu0 0
      %3252 = vmatprep.subr.bf16.mxu0 0
      %3253 = vmatpush2.bf16.xpose.msra.mxu0 0
      %3254 = vmatprep.subr.bf16.mxu0 0
      %3255 = vmatpush2.bf16.xpose.msra.mxu0 0
      %3256 = vmatprep.subr.bf16.mxu0 0
      %3257 = vmatpush2.bf16.xpose.msra.mxu0 0
      %3258 = vmatprep.subr.bf16.mxu0 0
      %3259 = vmatpush2.bf16.xpose.msra.mxu0 0
      %3260 = vmatprep.subr.bf16.mxu0 0
      %3261 = vmatpush2.bf16.xpose.msra.mxu0 0
      %3262 = vmatprep.subr.bf16.mxu0 0
      %3263 = vmatpush2.bf16.xpose.msra.mxu0 0
      %3264 = vmatprep.subr.bf16.mxu0 0
      %3265 = vmatpush2.bf16.xpose.msra.mxu0 0
      %3266 = vmatprep.mubr.bf16.mxu0 0
      %3267 = vmatmul.mubr.bf16.gmra.mxu0 %v3229
      %v3268 = vpop.f32.mrf.mxu0
      %v3269 = vadd.f32 %v571, %v3268
      %v3270 = vpop.f32.mrf.mxu0
      %v3271 = vpop.f32.mrf.mxu0
      %v3272 = vpop.f32.mrf.mxu0
      %3273 = vdwg.mxu0
      %3274 = vrot.lane.b32.xlu0 %v3129, 96
      %v3275 = vpop.permute.xlu0 %3274
      %v3277 = vsel %vm575, %v3122, 0
      %v3280 = vsel %vm575, %v3275, 0
      %3282 = vmatprep.subr.bf16.mxu0 0
      %3283 = vmatpush1.bf16.xpose.msra.mxu0 0
      %3284 = vmatprep.subr.bf16.mxu0 0
      %3285 = vmatpush1.bf16.xpose.msra.mxu0 0
      %3286 = vmatprep.subr.bf16.mxu0 0
      %3287 = vmatpush1.bf16.xpose.msra.mxu0 0
      %3288 = vmatprep.subr.bf16.mxu0 0
      %3289 = vmatpush1.bf16.xpose.msra.mxu0 0
      %3290 = vmatprep.subr.bf16.mxu0 0
      %3291 = vmatpush1.bf16.xpose.msra.mxu0 0
      %3292 = vmatprep.subr.bf16.mxu0 0
      %3293 = vmatpush1.bf16.xpose.msra.mxu0 0
      %3294 = vmatprep.subr.bf16.mxu0 0
      %3295 = vmatpush1.bf16.xpose.msra.mxu0 0
      %3296 = vmatprep.subr.bf16.mxu0 0
      %3297 = vmatpush1.bf16.xpose.msra.mxu0 %v3280
      %3298 = vmatprep.subr.bf16.mxu0 0
      %3299 = vmatpush2.bf16.xpose.msra.mxu0 0
      %3300 = vmatprep.subr.bf16.mxu0 0
      %3301 = vmatpush2.bf16.xpose.msra.mxu0 0
      %3302 = vmatprep.subr.bf16.mxu0 0
      %3303 = vmatpush2.bf16.xpose.msra.mxu0 0
      %3304 = vmatprep.subr.bf16.mxu0 0
      %3305 = vmatpush2.bf16.xpose.msra.mxu0 0
      %3306 = vmatprep.subr.bf16.mxu0 0
      %3307 = vmatpush2.bf16.xpose.msra.mxu0 0
      %3308 = vmatprep.subr.bf16.mxu0 0
      %3309 = vmatpush2.bf16.xpose.msra.mxu0 0
      %3310 = vmatprep.subr.bf16.mxu0 0
      %3311 = vmatpush2.bf16.xpose.msra.mxu0 0
      %3312 = vmatprep.subr.bf16.mxu0 0
      %3313 = vmatpush2.bf16.xpose.msra.mxu0 0
      %3314 = vmatprep.mubr.bf16.mxu0 0
      %3315 = vmatmul.mubr.bf16.gmra.mxu0 %v3277
      %v3316 = vpop.f32.mrf.mxu0
      %v3317 = vadd.f32 %v571, %v3316
      %v3318 = vpop.f32.mrf.mxu0
      %v3319 = vpop.f32.mrf.mxu0
      %v3320 = vpop.f32.mrf.mxu0
      %3321 = vdwg.mxu0
      %v3322 = vsel %vm575, %v3173, -inf
      %3323 = vmax.xlane.f32.xlu0 %v3322
      %v3324 = vpop.xlane.xlu0 %3323
      %v3325 = vsel %vm575, %v3221, -inf
      %3326 = vmax.xlane.f32.xlu0 %v3325
      %v3327 = vpop.xlane.xlu0 %3326
      %v3328 = vsel %vm575, %v3269, -inf
      %3329 = vmax.xlane.f32.xlu0 %v3328
      %v3330 = vpop.xlane.xlu0 %3329
      %v3331 = vsel %vm575, %v3317, -inf
      %3332 = vmax.xlane.f32.xlu0 %v3331
      %v3333 = vpop.xlane.xlu0 %3332
      %v3334 = vsub.f32 %v3173, %v3324
      %v3335 = vsub.f32 %v3221, %v3327
      %v3336 = vsub.f32 %v3269, %v3330
      %v3337 = vsub.f32 %v3317, %v3333
      %v3338 = vmul.f32 %v3334, 1.442695
      %v3339 = vpow.pop %v3338
      %v3340 = vmul.f32 %v3335, 1.442695
      %v3341 = vpow.pop %v3340
      %v3342 = vmul.f32 %v3336, 1.442695
      %v3343 = vpow.pop %v3342
      %v3344 = vmul.f32 %v3337, 1.442695
      %v3345 = vpow.pop %v3344
      %v3346 = vsel %vm575, %v3339, 0.0
      %3347 = vadd.xlane.f32.xlu0 %v3346
      %v3348 = vpop.xlane.xlu0 %3347
      %v3349 = vsel %vm575, %v3341, 0.0
      %3350 = vadd.xlane.f32.xlu0 %v3349
      %v3351 = vpop.xlane.xlu0 %3350
      %v3352 = vsel %vm575, %v3343, 0.0
      %3353 = vadd.xlane.f32.xlu0 %v3352
      %v3354 = vpop.xlane.xlu0 %3353
      %v3355 = vsel %vm575, %v3345, 0.0
      %3356 = vadd.xlane.f32.xlu0 %v3355
      %v3357 = vpop.xlane.xlu0 %3356
      %v3358 = vmax.f32 %v3348, 1e-09
      %v3359 = vmax.f32 %v3351, 1e-09
      %v3360 = vmax.f32 %v3354, 1e-09
      %v3361 = vmax.f32 %v3357, 1e-09
      %v3362 = vrcp.pop %v3358
      %v3363 = vrcp.pop %v3359
      %v3364 = vrcp.pop %v3360
      %v3365 = vrcp.pop %v3361
      %v3366 = vmul.f32 %v3339, %v3362
      %v3367 = vmul.f32 %v3341, %v3363
      %v3368 = vmul.f32 %v3343, %v3364
      %v3369 = vmul.f32 %v3345, %v3365
      %v3370 = vpack.c.bf16 %v3366, %v3366
      %v3371 = vpack.c.bf16 %v3367, %v3367
      %v3372 = vpack.c.bf16 %v3368, %v3368
      %v3373 = vpack.c.bf16 %v3369, %v3369
      %3374 = vrot.lane.b32.xlu0 %v3115, 64
      %v3375 = vpop.permute.xlu0 %3374
      %v3377 = vsel %vm575, %v3370, 0
      %v3380 = vsel %vm823, %v3375, 0
      %3382 = vmatprep.subr.bf16.mxu0 0
      %3383 = vmatpush1.bf16.msra.mxu0 0
      %3384 = vmatprep.subr.bf16.mxu0 0
      %3385 = vmatpush1.bf16.msra.mxu0 0
      %3386 = vmatprep.subr.bf16.mxu0 0
      %3387 = vmatpush1.bf16.msra.mxu0 0
      %3388 = vmatprep.subr.bf16.mxu0 0
      %3389 = vmatpush1.bf16.msra.mxu0 0
      %3390 = vmatprep.subr.bf16.mxu0 0
      %3391 = vmatpush1.bf16.msra.mxu0 0
      %3392 = vmatprep.subr.bf16.mxu0 0
      %3393 = vmatpush1.bf16.msra.mxu0 0
      %3394 = vmatprep.subr.bf16.mxu0 0
      %3395 = vmatpush1.bf16.msra.mxu0 0
      %3396 = vmatprep.subr.bf16.mxu0 0
      %3397 = vmatpush1.bf16.msra.mxu0 %v3380
      %3398 = vmatprep.subr.bf16.mxu0 0
      %3399 = vmatpush2.bf16.msra.mxu0 0
      %3400 = vmatprep.subr.bf16.mxu0 0
      %3401 = vmatpush2.bf16.msra.mxu0 0
      %3402 = vmatprep.subr.bf16.mxu0 0
      %3403 = vmatpush2.bf16.msra.mxu0 0
      %3404 = vmatprep.subr.bf16.mxu0 0
      %3405 = vmatpush2.bf16.msra.mxu0 0
      %3406 = vmatprep.subr.bf16.mxu0 0
      %3407 = vmatpush2.bf16.msra.mxu0 0
      %3408 = vmatprep.subr.bf16.mxu0 0
      %3409 = vmatpush2.bf16.msra.mxu0 0
      %3410 = vmatprep.subr.bf16.mxu0 0
      %3411 = vmatpush2.bf16.msra.mxu0 0
      %3412 = vmatprep.subr.bf16.mxu0 0
      %3413 = vmatpush2.bf16.msra.mxu0 0
      %3414 = vmatprep.mubr.bf16.mxu0 0
      %3415 = vmatmul.mubr.bf16.gmra.mxu0 %v3377
      %v3416 = vpop.f32.mrf.mxu0
      %v3417 = vadd.f32 0.0, %v3416
      %v3418 = vpop.f32.mrf.mxu0
      %v3419 = vpop.f32.mrf.mxu0
      %v3420 = vpop.f32.mrf.mxu0
      %3421 = vdwg.mxu0
      %3422 = vrot.lane.b32.xlu0 %v3125, 64
      %v3423 = vpop.permute.xlu0 %3422
      %v3425 = vsel %vm575, %v3371, 0
      %v3428 = vsel %vm823, %v3423, 0
      %3430 = vmatprep.subr.bf16.mxu0 0
      %3431 = vmatpush1.bf16.msra.mxu0 0
      %3432 = vmatprep.subr.bf16.mxu0 0
      %3433 = vmatpush1.bf16.msra.mxu0 0
      %3434 = vmatprep.subr.bf16.mxu0 0
      %3435 = vmatpush1.bf16.msra.mxu0 0
      %3436 = vmatprep.subr.bf16.mxu0 0
      %3437 = vmatpush1.bf16.msra.mxu0 0
      %3438 = vmatprep.subr.bf16.mxu0 0
      %3439 = vmatpush1.bf16.msra.mxu0 0
      %3440 = vmatprep.subr.bf16.mxu0 0
      %3441 = vmatpush1.bf16.msra.mxu0 0
      %3442 = vmatprep.subr.bf16.mxu0 0
      %3443 = vmatpush1.bf16.msra.mxu0 0
      %3444 = vmatprep.subr.bf16.mxu0 0
      %3445 = vmatpush1.bf16.msra.mxu0 %v3428
      %3446 = vmatprep.subr.bf16.mxu0 0
      %3447 = vmatpush2.bf16.msra.mxu0 0
      %3448 = vmatprep.subr.bf16.mxu0 0
      %3449 = vmatpush2.bf16.msra.mxu0 0
      %3450 = vmatprep.subr.bf16.mxu0 0
      %3451 = vmatpush2.bf16.msra.mxu0 0
      %3452 = vmatprep.subr.bf16.mxu0 0
      %3453 = vmatpush2.bf16.msra.mxu0 0
      %3454 = vmatprep.subr.bf16.mxu0 0
      %3455 = vmatpush2.bf16.msra.mxu0 0
      %3456 = vmatprep.subr.bf16.mxu0 0
      %3457 = vmatpush2.bf16.msra.mxu0 0
      %3458 = vmatprep.subr.bf16.mxu0 0
      %3459 = vmatpush2.bf16.msra.mxu0 0
      %3460 = vmatprep.subr.bf16.mxu0 0
      %3461 = vmatpush2.bf16.msra.mxu0 0
      %3462 = vmatprep.mubr.bf16.mxu0 0
      %3463 = vmatmul.mubr.bf16.gmra.mxu0 %v3425
      %v3464 = vpop.f32.mrf.mxu0
      %v3465 = vadd.f32 0.0, %v3464
      %v3466 = vpop.f32.mrf.mxu0
      %v3467 = vpop.f32.mrf.mxu0
      %v3468 = vpop.f32.mrf.mxu0
      %3469 = vdwg.mxu0
      %3470 = vrot.lane.b32.xlu0 %v3127, 64
      %v3471 = vpop.permute.xlu0 %3470
      %v3473 = vsel %vm575, %v3372, 0
      %v3476 = vsel %vm823, %v3471, 0
      %3478 = vmatprep.subr.bf16.mxu0 0
      %3479 = vmatpush1.bf16.msra.mxu0 0
      %3480 = vmatprep.subr.bf16.mxu0 0
      %3481 = vmatpush1.bf16.msra.mxu0 0
      %3482 = vmatprep.subr.bf16.mxu0 0
      %3483 = vmatpush1.bf16.msra.mxu0 0
      %3484 = vmatprep.subr.bf16.mxu0 0
      %3485 = vmatpush1.bf16.msra.mxu0 0
      %3486 = vmatprep.subr.bf16.mxu0 0
      %3487 = vmatpush1.bf16.msra.mxu0 0
      %3488 = vmatprep.subr.bf16.mxu0 0
      %3489 = vmatpush1.bf16.msra.mxu0 0
      %3490 = vmatprep.subr.bf16.mxu0 0
      %3491 = vmatpush1.bf16.msra.mxu0 0
      %3492 = vmatprep.subr.bf16.mxu0 0
      %3493 = vmatpush1.bf16.msra.mxu0 %v3476
      %3494 = vmatprep.subr.bf16.mxu0 0
      %3495 = vmatpush2.bf16.msra.mxu0 0
      %3496 = vmatprep.subr.bf16.mxu0 0
      %3497 = vmatpush2.bf16.msra.mxu0 0
      %3498 = vmatprep.subr.bf16.mxu0 0
      %3499 = vmatpush2.bf16.msra.mxu0 0
      %3500 = vmatprep.subr.bf16.mxu0 0
      %3501 = vmatpush2.bf16.msra.mxu0 0
      %3502 = vmatprep.subr.bf16.mxu0 0
      %3503 = vmatpush2.bf16.msra.mxu0 0
      %3504 = vmatprep.subr.bf16.mxu0 0
      %3505 = vmatpush2.bf16.msra.mxu0 0
      %3506 = vmatprep.subr.bf16.mxu0 0
      %3507 = vmatpush2.bf16.msra.mxu0 0
      %3508 = vmatprep.subr.bf16.mxu0 0
      %3509 = vmatpush2.bf16.msra.mxu0 0
      %3510 = vmatprep.mubr.bf16.mxu0 0
      %3511 = vmatmul.mubr.bf16.gmra.mxu0 %v3473
      %v3512 = vpop.f32.mrf.mxu0
      %v3513 = vadd.f32 0.0, %v3512
      %v3514 = vpop.f32.mrf.mxu0
      %v3515 = vpop.f32.mrf.mxu0
      %v3516 = vpop.f32.mrf.mxu0
      %3517 = vdwg.mxu0
      %3518 = vrot.lane.b32.xlu0 %v3129, 64
      %v3519 = vpop.permute.xlu0 %3518
      %v3521 = vsel %vm575, %v3373, 0
      %v3524 = vsel %vm823, %v3519, 0
      %3526 = vmatprep.subr.bf16.mxu0 0
      %3527 = vmatpush1.bf16.msra.mxu0 0
      %3528 = vmatprep.subr.bf16.mxu0 0
      %3529 = vmatpush1.bf16.msra.mxu0 0
      %3530 = vmatprep.subr.bf16.mxu0 0
      %3531 = vmatpush1.bf16.msra.mxu0 0
      %3532 = vmatprep.subr.bf16.mxu0 0
      %3533 = vmatpush1.bf16.msra.mxu0 0
      %3534 = vmatprep.subr.bf16.mxu0 0
      %3535 = vmatpush1.bf16.msra.mxu0 0
      %3536 = vmatprep.subr.bf16.mxu0 0
      %3537 = vmatpush1.bf16.msra.mxu0 0
      %3538 = vmatprep.subr.bf16.mxu0 0
      %3539 = vmatpush1.bf16.msra.mxu0 0
      %3540 = vmatprep.subr.bf16.mxu0 0
      %3541 = vmatpush1.bf16.msra.mxu0 %v3524
      %3542 = vmatprep.subr.bf16.mxu0 0
      %3543 = vmatpush2.bf16.msra.mxu0 0
      %3544 = vmatprep.subr.bf16.mxu0 0
      %3545 = vmatpush2.bf16.msra.mxu0 0
      %3546 = vmatprep.subr.bf16.mxu0 0
      %3547 = vmatpush2.bf16.msra.mxu0 0
      %3548 = vmatprep.subr.bf16.mxu0 0
      %3549 = vmatpush2.bf16.msra.mxu0 0
      %3550 = vmatprep.subr.bf16.mxu0 0
      %3551 = vmatpush2.bf16.msra.mxu0 0
      %3552 = vmatprep.subr.bf16.mxu0 0
      %3553 = vmatpush2.bf16.msra.mxu0 0
      %3554 = vmatprep.subr.bf16.mxu0 0
      %3555 = vmatpush2.bf16.msra.mxu0 0
      %3556 = vmatprep.subr.bf16.mxu0 0
      %3557 = vmatpush2.bf16.msra.mxu0 0
      %3558 = vmatprep.mubr.bf16.mxu0 0
      %3559 = vmatmul.mubr.bf16.gmra.mxu0 %v3521
      %v3560 = vpop.f32.mrf.mxu0
      %v3561 = vadd.f32 0.0, %v3560
      %v3562 = vpop.f32.mrf.mxu0
      %v3563 = vpop.f32.mrf.mxu0
      %v3564 = vpop.f32.mrf.mxu0
      %3565 = vdwg.mxu0
      %3567 = vrot.lane.b32.xlu0 %v3465, 8
      %v3568 = vpop.permute.xlu0 %3567
      %3571 = vrot.lane.b32.xlu0 %v3513, 16
      %v3572 = vpop.permute.xlu0 %3571
      %3575 = vrot.lane.b32.xlu0 %v3561, 24
      %v3576 = vpop.permute.xlu0 %3575
      %v3578 = vsel %vm575, %v3417, %v3568
      %v3579 = vsel %vm1024, %v3578, %v3572
      %v3580 = vsel %vm1026, %v3579, %v3576
      %v3581 = vpack.c.bf16 %v3580, %v3580
      %s3582 = scalar_lea.vmem %s4, 48
      %v3583 = vld [vmem:[%s3582] sm:$0xf]
      %v3584 = vld [vmem:[%s3582 + $0x4] sm:$0xf]
      %v3585 = vld [vmem:[%s3582 + $0x8] sm:$0xf]
      %v3586 = vld [vmem:[%s3582 + $0xc] sm:$0xf]
      %s3587 = scalar_lea.vmem %s5, 3
      %v3588 = vld [vmem:[%s3587] sm:$0x1]
      %v3590 = vlaneseq
      %v3591 = vshrl.u32 %v3590, 7
      %v3592 = vsub.s32 0, %v3591
      %v3593 = vrot.slane %v3588, %v3592
      %v3599 = vunpack.c.l.b16 %v3583
      %v3600 = vunpack.c.l.b16 %v3584
      %v3601 = vunpack.c.l.b16 %v3585
      %v3602 = vunpack.c.l.b16 %v3586
      %v3603 = vpack.c.b16 %v3600, %v3599
      %v3604 = vpack.c.b16 %v3602, %v3601
      %v3608 = vsel %vm506, %v3581, 0
      %3610 = vmatprep.subr.bf16.mxu0 0
      %3611 = vmatpush1.bf16.msra.mxu0 0
      %3612 = vmatprep.subr.bf16.mxu0 0
      %3613 = vmatpush1.bf16.msra.mxu0 0
      %3614 = vmatprep.subr.bf16.mxu0 0
      %3615 = vmatpush1.bf16.msra.mxu0 0
      %3616 = vmatprep.subr.bf16.mxu0 0
      %3617 = vmatpush1.bf16.msra.mxu0 0
      %3618 = vmatprep.subr.bf16.mxu0 0
      %3619 = vmatpush1.bf16.msra.mxu0 0
      %3620 = vmatprep.subr.bf16.mxu0 0
      %3621 = vmatpush1.bf16.msra.mxu0 0
      %3622 = vmatprep.subr.bf16.mxu0 0
      %3623 = vmatpush1.bf16.msra.mxu0 %v3604
      %3624 = vmatprep.subr.bf16.mxu0 0
      %3625 = vmatpush1.bf16.msra.mxu0 %v3603
      %3626 = vmatprep.subr.bf16.mxu0 0
      %3627 = vmatpush2.bf16.msra.mxu0 0
      %3628 = vmatprep.subr.bf16.mxu0 0
      %3629 = vmatpush2.bf16.msra.mxu0 0
      %3630 = vmatprep.subr.bf16.mxu0 0
      %3631 = vmatpush2.bf16.msra.mxu0 0
      %3632 = vmatprep.subr.bf16.mxu0 0
      %3633 = vmatpush2.bf16.msra.mxu0 0
      %3634 = vmatprep.subr.bf16.mxu0 0
      %3635 = vmatpush2.bf16.msra.mxu0 0
      %3636 = vmatprep.subr.bf16.mxu0 0
      %3637 = vmatpush2.bf16.msra.mxu0 0
      %3638 = vmatprep.subr.bf16.mxu0 0
      %3639 = vmatpush2.bf16.msra.mxu0 0
      %3640 = vmatprep.subr.bf16.mxu0 0
      %3641 = vmatpush2.bf16.msra.mxu0 0
      %3642 = vmatprep.mubr.bf16.mxu0 0
      %3643 = vmatmul.mubr.bf16.gmra.mxu0 %v3608
      %v3644 = vpop.f32.mrf.mxu0
      %v3645 = vadd.f32 %v3593, %v3644
      %v3646 = vpop.f32.mrf.mxu0
      %v3647 = vpop.f32.mrf.mxu0
      %v3648 = vpop.f32.mrf.mxu0
      %3649 = vdwg.mxu0
      %v3650 = vadd.f32 %v3043, %v3645
      %s3651 = scalar_lea.vmem %s6, 3
      %v3652 = vld [vmem:[%s3651] sm:$0x1]
      %s3653 = scalar_lea.vmem %s7, 3
      %v3654 = vld [vmem:[%s3653] sm:$0x1]
      %v3655 = vsel %vm506, %v3650, 0.0
      %3656 = vadd.xlane.f32.xlu0 %v3655
      %v3657 = vpop.xlane.xlu0 %3656
      %v3658 = vmul.f32 %v3657, %v1101
      %v3659 = vsub.f32 %v3650, %v3658
      %v3660 = vmul.f32 %v3659, %v3659
      %v3661 = vsel %vm506, %v3660, 0.0
      %3662 = vadd.xlane.f32.xlu0 %v3661
      %v3663 = vpop.xlane.xlu0 %3662
      %v3664 = vmul.f32 %v3663, %v1101
      %v3665 = vadd.f32 %v3664, 1e-05
      %v3666 = vrsqrt.pop %v3665
      %v3667 = vmul.f32 %v3659, %v3666
      %v3669 = vlaneseq
      %v3670 = vshrl.u32 %v3669, 7
      %v3671 = vsub.s32 0, %v3670
      %v3672 = vrot.slane %v3652, %v3671
      %v3674 = vmul.f32 %v3667, %v3672
      %v3676 = vlaneseq
      %v3677 = vshrl.u32 %v3676, 7
      %v3678 = vsub.s32 0, %v3677
      %v3679 = vrot.slane %v3654, %v3678
      %v3681 = vadd.f32 %v3674, %v3679
      %v3682 = vpack.c.bf16 %v3681, %v3681
      %s3683 = scalar_lea.vmem %s8, 48
      %v3684 = vld [vmem:[%s3683] sm:$0xf]
      %v3685 = vld [vmem:[%s3683 + $0x4] sm:$0xf]
      %v3686 = vld [vmem:[%s3683 + $0x8] sm:$0xf]
      %v3687 = vld [vmem:[%s3683 + $0xc] sm:$0xf]
      %s3688 = scalar_lea.vmem %s9, 3
      %v3689 = vld [vmem:[%s3688] sm:$0x1]
      %v3691 = vlaneseq
      %v3692 = vshrl.u32 %v3691, 7
      %v3693 = vsub.s32 0, %v3692
      %v3694 = vrot.slane %v3689, %v3693
      %v3700 = vunpack.c.l.b16 %v3684
      %v3701 = vunpack.c.l.b16 %v3685
      %v3702 = vunpack.c.l.b16 %v3686
      %v3703 = vunpack.c.l.b16 %v3687
      %v3704 = vpack.c.b16 %v3701, %v3700
      %v3705 = vpack.c.b16 %v3703, %v3702
      %v3709 = vsel %vm506, %v3682, 0
      %3711 = vmatprep.subr.bf16.mxu0 0
      %3712 = vmatpush1.bf16.msra.mxu0 0
      %3713 = vmatprep.subr.bf16.mxu0 0
      %3714 = vmatpush1.bf16.msra.mxu0 0
      %3715 = vmatprep.subr.bf16.mxu0 0
      %3716 = vmatpush1.bf16.msra.mxu0 0
      %3717 = vmatprep.subr.bf16.mxu0 0
      %3718 = vmatpush1.bf16.msra.mxu0 0
      %3719 = vmatprep.subr.bf16.mxu0 0
      %3720 = vmatpush1.bf16.msra.mxu0 0
      %3721 = vmatprep.subr.bf16.mxu0 0
      %3722 = vmatpush1.bf16.msra.mxu0 0
      %3723 = vmatprep.subr.bf16.mxu0 0
      %3724 = vmatpush1.bf16.msra.mxu0 %v3705
      %3725 = vmatprep.subr.bf16.mxu0 0
      %3726 = vmatpush1.bf16.msra.mxu0 %v3704
      %3727 = vmatprep.subr.bf16.mxu0 0
      %3728 = vmatpush2.bf16.msra.mxu0 0
      %3729 = vmatprep.subr.bf16.mxu0 0
      %3730 = vmatpush2.bf16.msra.mxu0 0
      %3731 = vmatprep.subr.bf16.mxu0 0
      %3732 = vmatpush2.bf16.msra.mxu0 0
      %3733 = vmatprep.subr.bf16.mxu0 0
      %3734 = vmatpush2.bf16.msra.mxu0 0
      %3735 = vmatprep.subr.bf16.mxu0 0
      %3736 = vmatpush2.bf16.msra.mxu0 0
      %3737 = vmatprep.subr.bf16.mxu0 0
      %3738 = vmatpush2.bf16.msra.mxu0 0
      %3739 = vmatprep.subr.bf16.mxu0 0
      %3740 = vmatpush2.bf16.msra.mxu0 0
      %3741 = vmatprep.subr.bf16.mxu0 0
      %3742 = vmatpush2.bf16.msra.mxu0 0
      %3743 = vmatprep.mubr.bf16.mxu0 0
      %3744 = vmatmul.mubr.bf16.gmra.mxu0 %v3709
      %v3745 = vpop.f32.mrf.mxu0
      %v3746 = vadd.f32 %v3694, %v3745
      %v3747 = vpop.f32.mrf.mxu0
      %v3748 = vpop.f32.mrf.mxu0
      %v3749 = vpop.f32.mrf.mxu0
      %3750 = vdwg.mxu0
      %v3751 = vmax.f32 %v3746, 0.0
      %v3752 = vpack.c.bf16 %v3751, %v3751
      %s3753 = scalar_lea.vmem %s10, 192
      %v3754 = vld [vmem:[%s3753] sm:$0xf]
      %v3755 = vld [vmem:[%s3753 + $0x4] sm:$0xf]
      %v3756 = vld [vmem:[%s3753 + $0x8] sm:$0xf]
      %v3757 = vld [vmem:[%s3753 + $0xc] sm:$0xf]
      %v3758 = vld [vmem:[%s3753 + $0x10] sm:$0xf]
      %v3759 = vld [vmem:[%s3753 + $0x14] sm:$0xf]
      %v3760 = vld [vmem:[%s3753 + $0x18] sm:$0xf]
      %v3761 = vld [vmem:[%s3753 + $0x1c] sm:$0xf]
      %v3762 = vld [vmem:[%s3753 + $0x20] sm:$0xf]
      %v3763 = vld [vmem:[%s3753 + $0x24] sm:$0xf]
      %v3764 = vld [vmem:[%s3753 + $0x28] sm:$0xf]
      %v3765 = vld [vmem:[%s3753 + $0x2c] sm:$0xf]
      %v3766 = vld [vmem:[%s3753 + $0x30] sm:$0xf]
      %v3767 = vld [vmem:[%s3753 + $0x34] sm:$0xf]
      %v3768 = vld [vmem:[%s3753 + $0x38] sm:$0xf]
      %v3769 = vld [vmem:[%s3753 + $0x3c] sm:$0xf]
      %s3770 = scalar_lea.vmem %s11, 3
      %v3771 = vld [vmem:[%s3770] sm:$0x1]
      %v3773 = vlaneseq
      %v3774 = vshrl.u32 %v3773, 7
      %v3775 = vsub.s32 0, %v3774
      %v3776 = vrot.slane %v3771, %v3775
      %v3794 = vunpack.c.l.b16 %v3754
      %v3795 = vunpack.c.l.b16 %v3755
      %v3796 = vunpack.c.l.b16 %v3756
      %v3797 = vunpack.c.l.b16 %v3757
      %v3798 = vunpack.c.l.b16 %v3758
      %v3799 = vunpack.c.l.b16 %v3759
      %v3800 = vunpack.c.l.b16 %v3760
      %v3801 = vunpack.c.l.b16 %v3761
      %v3802 = vunpack.c.l.b16 %v3762
      %v3803 = vunpack.c.l.b16 %v3763
      %v3804 = vunpack.c.l.b16 %v3764
      %v3805 = vunpack.c.l.b16 %v3765
      %v3806 = vunpack.c.l.b16 %v3766
      %v3807 = vunpack.c.l.b16 %v3767
      %v3808 = vunpack.c.l.b16 %v3768
      %v3809 = vunpack.c.l.b16 %v3769
      %v3810 = vpack.c.b16 %v3795, %v3794
      %v3811 = vpack.c.b16 %v3797, %v3796
      %v3812 = vpack.c.b16 %v3799, %v3798
      %v3813 = vpack.c.b16 %v3801, %v3800
      %v3814 = vpack.c.b16 %v3803, %v3802
      %v3815 = vpack.c.b16 %v3805, %v3804
      %v3816 = vpack.c.b16 %v3807, %v3806
      %v3817 = vpack.c.b16 %v3809, %v3808
      %3826 = vmatprep.subr.bf16.mxu0 0
      %3827 = vmatpush1.bf16.msra.mxu0 %v3817
      %3828 = vmatprep.subr.bf16.mxu0 0
      %3829 = vmatpush1.bf16.msra.mxu0 %v3816
      %3830 = vmatprep.subr.bf16.mxu0 0
      %3831 = vmatpush1.bf16.msra.mxu0 %v3815
      %3832 = vmatprep.subr.bf16.mxu0 0
      %3833 = vmatpush1.bf16.msra.mxu0 %v3814
      %3834 = vmatprep.subr.bf16.mxu0 0
      %3835 = vmatpush1.bf16.msra.mxu0 %v3813
      %3836 = vmatprep.subr.bf16.mxu0 0
      %3837 = vmatpush1.bf16.msra.mxu0 %v3812
      %3838 = vmatprep.subr.bf16.mxu0 0
      %3839 = vmatpush1.bf16.msra.mxu0 %v3811
      %3840 = vmatprep.subr.bf16.mxu0 0
      %3841 = vmatpush1.bf16.msra.mxu0 %v3810
      %3842 = vmatprep.subr.bf16.mxu0 0
      %3843 = vmatpush2.bf16.msra.mxu0 0
      %3844 = vmatprep.subr.bf16.mxu0 0
      %3845 = vmatpush2.bf16.msra.mxu0 0
      %3846 = vmatprep.subr.bf16.mxu0 0
      %3847 = vmatpush2.bf16.msra.mxu0 0
      %3848 = vmatprep.subr.bf16.mxu0 0
      %3849 = vmatpush2.bf16.msra.mxu0 0
      %3850 = vmatprep.subr.bf16.mxu0 0
      %3851 = vmatpush2.bf16.msra.mxu0 0
      %3852 = vmatprep.subr.bf16.mxu0 0
      %3853 = vmatpush2.bf16.msra.mxu0 0
      %3854 = vmatprep.subr.bf16.mxu0 0
      %3855 = vmatpush2.bf16.msra.mxu0 0
      %3856 = vmatprep.subr.bf16.mxu0 0
      %3857 = vmatpush2.bf16.msra.mxu0 0
      %3858 = vmatprep.mubr.bf16.mxu0 0
      %3859 = vmatmul.mubr.bf16.gmra.mxu0 %v3752
      %v3860 = vpop.f32.mrf.mxu0
      %v3861 = vadd.f32 %v3776, %v3860
      %v3862 = vpop.f32.mrf.mxu0
      %v3863 = vpop.f32.mrf.mxu0
      %v3864 = vpop.f32.mrf.mxu0
      %3865 = vdwg.mxu0
      %v3866 = vadd.f32 %v3681, %v3861
      %s3867 = scalar_lea.vmem %s12, 3
      %v3868 = vld [vmem:[%s3867] sm:$0x1]
      %s3869 = scalar_lea.vmem %s13, 3
      %v3870 = vld [vmem:[%s3869] sm:$0x1]
      %v3871 = vsel %vm506, %v3866, 0.0
      %3872 = vadd.xlane.f32.xlu0 %v3871
      %v3873 = vpop.xlane.xlu0 %3872
      %v3874 = vmul.f32 %v3873, %v1101
      %v3875 = vsub.f32 %v3866, %v3874
      %v3876 = vmul.f32 %v3875, %v3875
      %v3877 = vsel %vm506, %v3876, 0.0
      %3878 = vadd.xlane.f32.xlu0 %v3877
      %v3879 = vpop.xlane.xlu0 %3878
      %v3880 = vmul.f32 %v3879, %v1101
      %v3881 = vadd.f32 %v3880, 1e-05
      %v3882 = vrsqrt.pop %v3881
      %v3883 = vmul.f32 %v3875, %v3882
      %v3885 = vlaneseq
      %v3886 = vshrl.u32 %v3885, 7
      %v3887 = vsub.s32 0, %v3886
      %v3888 = vrot.slane %v3868, %v3887
      %v3890 = vmul.f32 %v3883, %v3888
      %v3892 = vlaneseq
      %v3893 = vshrl.u32 %v3892, 7
      %v3894 = vsub.s32 0, %v3893
      %v3895 = vrot.slane %v3870, %v3894
      %v3897 = vadd.f32 %v3890, %v3895
      %3898 = vst.msk [vmem:[%s476] sm:$0xff] %vm506, %v3897
      %p3899 = scmp.lt.s32.totalorder %s25, 1
      %s3900 = scalar_select %p3899, %s25, 1
      %s3901 = smul.addr %s3900, 8
      %s3902 = scalar_lea.vmem %s14, %s3901
      // Predicated region
      $region77: #{encoder_forward.1} parent=75 // pred_check
        %p3903 = pneg %p347
      $region78: #{encoder_forward.1} parent=75 // pred_check_branch
        %3905 = sbr.rel (%p3903) target = $region80
      $region79: #{encoder_forward.1} parent=75 // pred_region
        _
      $region80: #{encoder_forward.1} parent=75 // pred_fallthru
        _
    $region76: #{encoder_forward.1} parent=5 // pred_fallthru
      _
    %p3906 = scmp.le.s32.totalorder 2, %s20
    // Predicated region
    $region81: #{encoder_forward.1} parent=5 // pred_check
      %p3907 = pneg %p3906
    $region82: #{encoder_forward.1} parent=5 // pred_check_branch
      %3909 = sbr.rel (%p3907) target = $region84
    $region83: #{encoder_forward.1} parent=5 // pred_region
      %s3910 = ssub.s32 %s20, 2
      // Predicated region
      $region85: #{encoder_forward.1} parent=83 // pred_check
        %p3911 = pneg %p353
      $region86: #{encoder_forward.1} parent=83 // pred_check_branch
        %3913 = sbr.rel (%p3911) target = $region88
      $region87: #{encoder_forward.1} parent=83 // pred_region
        %p3914 = scmp.lt.s32.totalorder %s26, 1
        %s3915 = scalar_select %p3914, %s26, 1
        %s3916 = smul.addr %s3915, 8
        %s3917 = scalar_lea.vmem %s14, %s3916
      $region88: #{encoder_forward.1} parent=83 // pred_fallthru
        _
    $region84: #{encoder_forward.1} parent=5 // pred_fallthru
      _
  $region6: #{encoder_forward.1} parent=0 // loop_footer
    %s24 = sadd.s32 1, %s20
  $region7: #{encoder_forward.1} parent=0 // loop_footer_branch
    %19 = sbr.rel target = $region3
  $region8: #{encoder_forward.1} parent=0 // loop_exit
    _

</llo_original>
